<compile_context>
chip_gen: v6e
topology: v6e:2x2x1
jax: 0.10.0
libtpu: 0.0.40
codegen_flags: <defaults>
</compile_context>

<pallas_src>
import jax
import jax.numpy as jnp
from jax.experimental import pallas as pl
from jax.experimental.pallas import tpu as pltpu


def _gz_atten_kernel(q_ref, k_ref, vw_ref, wq_ref, wk_ref, b_ref,
                     out_ref, aw_ref):
    Bt, V1, Dout = vw_ref.shape
    rows = q_ref.shape[0]            # rows = Bt * L
    L = rows // Bt

    # Q path: one wide (rows, Dq) @ (Dq, V1+out) dot plus the fused bias.
    # Lane slice [:, :V1] is the Q contribution to the softmax logits,
    # [:, V1:] is the Q-term of the output (already includes b2).
    fused = (jnp.dot(q_ref[...], wq_ref[...],
                     preferred_element_type=jnp.float32) + b_ref[...])

    # K path only feeds the logits.
    logits = fused[:, :V1] + jnp.dot(k_ref[...], wk_ref[...],
                                     preferred_element_type=jnp.float32)

    # Softmax over the last dim (lane reductions -> XLU, exp/rcp -> EUP).
    m = jnp.max(logits, axis=-1, keepdims=True)
    e = jnp.exp(logits - m)
    aw = e * pl.reciprocal(jnp.sum(e, axis=-1, keepdims=True), approx=True)
    aw_ref[...] = aw.astype(aw_ref.dtype)

    # Fused bmm: aw @ (V @ W2v.T) == (aw @ V) @ W2v.T.  Inherently per-batch
    # (M = L rows per batch) -- the only remaining per-batch MXU work.
    av = jnp.einsum("blv,bvo->blo", aw.reshape(Bt, L, V1), vw_ref[...],
                    preferred_element_type=jnp.float32)      # (Bt, L, out)

    out_ref[...] = (fused[:, V1:]
                    + av.reshape(rows, Dout)).astype(out_ref.dtype)


def prepare_gz_atten_params(params, query_size):
    """One-time parameter preprocessing (hoisted out of the per-call path).

    params: 'W1' (V1, Dq+Dk), 'b1' (V1,), 'W2' (out, Dq+V2), 'b2' (out,)
    Returns fused kernel weights:
      wq  (Dq, V1+out) = [W1_q.T | W2_q.T]
      wk  (Dk, V1)     = W1_k.T
      w2v (V2, out)    = W2_v.T            (consumed by the per-call Vw matmul)
      b   (1, V1+out)  = [b1 | b2]
    """
    W1, b1, W2, b2 = params["W1"], params["b1"], params["W2"], params["b2"]
    Dq = query_size
    wq = jnp.concatenate(
        [jnp.transpose(W1[:, :Dq]), jnp.transpose(W2[:, :Dq])], axis=1)
    wk = jnp.transpose(W1[:, Dq:])
    w2v = jnp.transpose(W2[:, Dq:])
    b = jnp.concatenate([b1, b2]).reshape(1, -1)
    return {"wq": wq, "wk": wk, "w2v": w2v, "b": b}


def gz_my_atten(Q, K, V, prepared, *, batch_tile=None):
    """Pallas implementation of GzMyAtten.forward.

    Q: (B, L, Dq), K: (B, L, Dk), V: (B, V1, V2); `prepared` comes from
    prepare_gz_atten_params.  Returns (result (B, L, out), atten_weight
    (B, L, V1)).
    """
    B, L, Dq = Q.shape
    _, _, Dk = K.shape
    V1 = prepared["wk"].shape[1]
    out_size = prepared["w2v"].shape[1]

    # Single grid step by default (overhead-bound problem; v5e/v6e have one
    # TensorCore).  For an explicit 2-way v7x core split, pass batch_tile=B//2
    # (and consider pltpu.CORE_PARALLEL / pl.core_map) and benchmark.
    Bt = B if batch_tile is None else batch_tile
    assert B % Bt == 0, (B, Bt)
    assert Bt == B or (Bt * L) % 8 == 0, "tiled block rows must be 8-aligned"
    n_steps = B // Bt

    # Fold the V-term of the second Linear into the bmm operand: one XLA
    # batched matmul per call instead of an extra MXU dot per grid step.
    Vw = jnp.einsum("bvd,do->bvo", V, prepared["w2v"])        # (B, V1, out)

    q2d = Q.reshape(B * L, Dq)        # metadata-only reshapes
    k2d = K.reshape(B * L, Dk)

    result2d, aw2d = pl.pallas_call(
        _gz_atten_kernel,
        out_shape=(
            jax.ShapeDtypeStruct((B * L, out_size), Q.dtype),
            jax.ShapeDtypeStruct((B * L, V1), Q.dtype),
        ),
        grid_spec=pltpu.PrefetchScalarGridSpec(
            num_scalar_prefetch=0,
            grid=(n_steps,),
            in_specs=[
                pl.BlockSpec((Bt * L, Dq), lambda b: (b, 0)),          # Q rows
                pl.BlockSpec((Bt * L, Dk), lambda b: (b, 0)),          # K rows
                pl.BlockSpec((Bt, V1, out_size), lambda b: (b, 0, 0)),  # Vw
                pl.BlockSpec((Dq, V1 + out_size), lambda b: (0, 0)),   # wq
                pl.BlockSpec((Dk, V1), lambda b: (0, 0)),              # wk
                pl.BlockSpec((1, V1 + out_size), lambda b: (0, 0)),    # bias
            ],
            out_specs=[
                pl.BlockSpec((Bt * L, out_size), lambda b: (b, 0)),
                pl.BlockSpec((Bt * L, V1), lambda b: (b, 0)),
            ],
        ),
        compiler_params=pltpu.CompilerParams(
            dimension_semantics=(
                ("arbitrary",) if n_steps == 1 else ("parallel",))),
    )(q2d, k2d, Vw, prepared["wq"], prepared["wk"], prepared["b"])

    return result2d.reshape(B, L, out_size), aw2d.reshape(B, L, V1)


def _reference(Q, K, V, params):
    # Pure-JAX reference mirroring the PyTorch forward exactly.
    W1, b1, W2, b2 = params["W1"], params["b1"], params["W2"], params["b2"]
    logits = jnp.concatenate([Q, K], axis=-1) @ W1.T + b1
    aw = jax.nn.softmax(logits, axis=-1)
    atten1 = jnp.einsum("blv,bvd->bld", aw, V)
    res = jnp.concatenate([Q, atten1], axis=-1) @ W2.T + b2
    return res, aw


if __name__ == "__main__":
    # Module hyper-parameters (small, consistent with the forward pass).
    query_size, key_size = 32, 32
    value_size1, value_size2 = 32, 32
    output_size = 32
    B, L = 32, 8      # single grid step -> M = B*L = 256 rows (fills MXU)

    key = jax.random.PRNGKey(0)
    kq, kk, kv, kw1, kb1, kw2, kb2 = jax.random.split(key, 7)

    Q = jax.random.normal(kq, (B, L, query_size), dtype=jnp.float32)
    K = jax.random.normal(kk, (B, L, key_size), dtype=jnp.float32)
    V = jax.random.normal(kv, (B, value_size1, value_size2), dtype=jnp.float32)

    # Deterministic parameter init (nn.Linear-style uniform bounds).
    in1 = query_size + key_size
    in2 = query_size + value_size2
    params = {
        "W1": jax.random.uniform(kw1, (value_size1, in1), jnp.float32,
                                 -1.0 / (in1 ** 0.5), 1.0 / (in1 ** 0.5)),
        "b1": jax.random.uniform(kb1, (value_size1,), jnp.float32,
                                 -1.0 / (in1 ** 0.5), 1.0 / (in1 ** 0.5)),
        "W2": jax.random.uniform(kw2, (output_size, in2), jnp.float32,
                                 -1.0 / (in2 ** 0.5), 1.0 / (in2 ** 0.5)),
        "b2": jax.random.uniform(kb2, (output_size,), jnp.float32,
                                 -1.0 / (in2 ** 0.5), 1.0 / (in2 ** 0.5)),
    }

    # One-time weight fusion (hoisted out of the hot path).
    prepared = prepare_gz_atten_params(params, query_size)

    @jax.jit
    def fwd(q, k, v):
        return gz_my_atten(q, k, v, prepared)

    result, atten_weight = fwd(Q, K, V)
    jax.block_until_ready((result, atten_weight))

    assert result.shape == (B, L, output_size)
    assert atten_weight.shape == (B, L, value_size1)

    ref_res, ref_aw = _reference(Q, K, V, params)
    # Tolerances account for the approximate EUP reciprocal in the softmax.
    assert jnp.allclose(result, ref_res, atol=2e-3, rtol=2e-2)
    assert jnp.allclose(atten_weight, ref_aw, atol=2e-3, rtol=2e-2)

    print("KERNEL_OK")
</pallas_src>

<mosaic_0001>
module attributes {stable_mosaic.version = 11 : i64} {
  func.func @_gz_atten_kernel(%arg0: i32, %arg1: memref<256x32xf32, #tpu.memory_space<vmem>>, %arg2: memref<256x32xf32, #tpu.memory_space<vmem>>, %arg3: memref<32x32x32xf32, #tpu.memory_space<vmem>>, %arg4: memref<32x64xf32, #tpu.memory_space<vmem>>, %arg5: memref<32x32xf32, #tpu.memory_space<vmem>>, %arg6: memref<1x64xf32, #tpu.memory_space<vmem>>, %arg7: memref<256x32xf32, #tpu.memory_space<vmem>>, %arg8: memref<256x32xf32, #tpu.memory_space<vmem>>) attributes {dimension_semantics = [#tpu.dimension_semantics<arbitrary>], iteration_bounds = array<i64: 1>, scalar_prefetch = 0 : i64, scratch_operands = 0 : i64, tpu.core_type = #tpu.core_type<tc>, window_params = [{transform_indices = @transform_0, window_bounds = array<i64: 256, 32>}, {transform_indices = @transform_1, window_bounds = array<i64: 256, 32>}, {transform_indices = @transform_2, window_bounds = array<i64: 32, 32, 32>}, {pipeline_mode = #tpu.pipeline_mode<synchronous>, transform_indices = @transform_3, window_bounds = array<i64: 32, 64>}, {pipeline_mode = #tpu.pipeline_mode<synchronous>, transform_indices = @transform_4, window_bounds = array<i64: 32, 32>}, {pipeline_mode = #tpu.pipeline_mode<synchronous>, transform_indices = @transform_5, window_bounds = array<i64: 1, 64>}, {transform_indices = @transform_6, window_bounds = array<i64: 256, 32>}, {transform_indices = @transform_7, window_bounds = array<i64: 256, 32>}]} {
    %c0 = arith.constant 0 : index
    %c0_0 = arith.constant 0 : index
    %0 = vector.load %arg1[%c0, %c0_0] : memref<256x32xf32, #tpu.memory_space<vmem>>, vector<256x32xf32>
    %c0_1 = arith.constant 0 : index
    %c0_2 = arith.constant 0 : index
    %1 = vector.load %arg4[%c0_1, %c0_2] : memref<32x64xf32, #tpu.memory_space<vmem>>, vector<32x64xf32>
    %cst = arith.constant dense<0.000000e+00> : vector<256x64xf32>
    %2 = tpu.matmul %0, %1, %cst {dimension_numbers = #tpu.dot_dimension_numbers<[1], [0], [0], [1], [0, 0, 1, 1], [], []>} : vector<256x32xf32>, vector<32x64xf32>, vector<256x64xf32> -> vector<256x64xf32>
    %c0_3 = arith.constant 0 : index
    %c0_4 = arith.constant 0 : index
    %3 = vector.load %arg6[%c0_3, %c0_4] : memref<1x64xf32, #tpu.memory_space<vmem>>, vector<1x64xf32>
    %4 = vector.broadcast %3 : vector<1x64xf32> to vector<256x64xf32>
    %5 = arith.addf %2, %4 : vector<256x64xf32>
    %6 = vector.extract_strided_slice %5 {offsets = [0, 0], sizes = [256, 32], strides = [1, 1]} : vector<256x64xf32> to vector<256x32xf32>
    %c0_5 = arith.constant 0 : index
    %c0_6 = arith.constant 0 : index
    %7 = vector.load %arg2[%c0_5, %c0_6] : memref<256x32xf32, #tpu.memory_space<vmem>>, vector<256x32xf32>
    %c0_7 = arith.constant 0 : index
    %c0_8 = arith.constant 0 : index
    %8 = vector.load %arg5[%c0_7, %c0_8] : memref<32x32xf32, #tpu.memory_space<vmem>>, vector<32x32xf32>
    %cst_9 = arith.constant dense<0.000000e+00> : vector<256x32xf32>
    %9 = tpu.matmul %7, %8, %cst_9 {dimension_numbers = #tpu.dot_dimension_numbers<[1], [0], [0], [1], [0, 0, 1, 1], [], []>} : vector<256x32xf32>, vector<32x32xf32>, vector<256x32xf32> -> vector<256x32xf32>
    %10 = arith.addf %6, %9 : vector<256x32xf32>
    %cst_10 = arith.constant dense<0xFF800000> : vector<256xf32>
    %11 = vector.multi_reduction <maximumf>, %10, %cst_10 [1] : vector<256x32xf32> to vector<256xf32>
    %12 = vector.shape_cast %11 : vector<256xf32> to vector<256x1xf32>
    %13 = vector.broadcast %12 : vector<256x1xf32> to vector<256x32xf32>
    %14 = arith.subf %10, %13 : vector<256x32xf32>
    %15 = math.exp %14 : vector<256x32xf32>
    %cst_11 = arith.constant dense<0.000000e+00> : vector<256xf32>
    %16 = vector.multi_reduction <add>, %15, %cst_11 [1] : vector<256x32xf32> to vector<256xf32>
    %17 = vector.shape_cast %16 : vector<256xf32> to vector<256x1xf32>
    %18 = tpu.reciprocal %17 {approx = true} : vector<256x1xf32> -> vector<256x1xf32>
    %19 = vector.broadcast %18 : vector<256x1xf32> to vector<256x32xf32>
    %20 = arith.mulf %15, %19 : vector<256x32xf32>
    %c0_12 = arith.constant 0 : index
    %c0_13 = arith.constant 0 : index
    %21 = vector.load %arg8[%c0_12, %c0_13] : memref<256x32xf32, #tpu.memory_space<vmem>>, vector<256x32xf32>
    tpu.vector_store %arg8[%c0_12, %c0_13], %20 {strides = array<i32>} : memref<256x32xf32, #tpu.memory_space<vmem>>, vector<256x32xf32>,
    %22 = vector.shape_cast %20 : vector<256x32xf32> to vector<32x8x32xf32>
    %c0_14 = arith.constant 0 : index
    %c0_15 = arith.constant 0 : index
    %c0_16 = arith.constant 0 : index
    %23 = vector.load %arg3[%c0_14, %c0_15, %c0_16] : memref<32x32x32xf32, #tpu.memory_space<vmem>>, vector<32x32x32xf32>
    "tpu.trace_start"() <{level = 10 : i32, message = "blv,bvo->blo"}> : () -> ()
    %cst_17 = arith.constant dense<0.000000e+00> : vector<32x8x32xf32>
    %24 = tpu.matmul %22, %23, %cst_17 {dimension_numbers = #tpu.dot_dimension_numbers<[2], [1], [1], [2], [0, 0, 0, 1, 1, 2], [0], [0]>} : vector<32x8x32xf32>, vector<32x32x32xf32>, vector<32x8x32xf32> -> vector<32x8x32xf32>
    "tpu.trace_stop"() : () -> ()
    %25 = vector.extract_strided_slice %5 {offsets = [0, 32], sizes = [256, 32], strides = [1, 1]} : vector<256x64xf32> to vector<256x32xf32>
    %26 = vector.shape_cast %24 : vector<32x8x32xf32> to vector<256x32xf32>
    %27 = arith.addf %25, %26 : vector<256x32xf32>
    %c0_18 = arith.constant 0 : index
    %c0_19 = arith.constant 0 : index
    %28 = vector.load %arg7[%c0_18, %c0_19] : memref<256x32xf32, #tpu.memory_space<vmem>>, vector<256x32xf32>
    tpu.vector_store %arg7[%c0_18, %c0_19], %27 {strides = array<i32>} : memref<256x32xf32, #tpu.memory_space<vmem>>, vector<256x32xf32>,
    return
  }
  func.func @transform_0(%arg0: i32) -> (i32, i32) {
    %c0_i32 = arith.constant 0 : i32
    %c0_i32_0 = arith.constant 0 : i32
    return %arg0, %c0_i32 : i32, i32
  }
  func.func @transform_1(%arg0: i32) -> (i32, i32) {
    %c0_i32 = arith.constant 0 : i32
    %c0_i32_0 = arith.constant 0 : i32
    return %arg0, %c0_i32 : i32, i32
  }
  func.func @transform_2(%arg0: i32) -> (i32, i32, i32) {
    %c0_i32 = arith.constant 0 : i32
    %c0_i32_0 = arith.constant 0 : i32
    %c0_i32_1 = arith.constant 0 : i32
    return %arg0, %c0_i32, %c0_i32_0 : i32, i32, i32
  }
  func.func @transform_3(%arg0: i32) -> (i32, i32) {
    %c0_i32 = arith.constant 0 : i32
    %c0_i32_0 = arith.constant 0 : i32
    %c0_i32_1 = arith.constant 0 : i32
    return %c0_i32, %c0_i32_0 : i32, i32
  }
  func.func @transform_4(%arg0: i32) -> (i32, i32) {
    %c0_i32 = arith.constant 0 : i32
    %c0_i32_0 = arith.constant 0 : i32
    %c0_i32_1 = arith.constant 0 : i32
    return %c0_i32, %c0_i32_0 : i32, i32
  }
  func.func @transform_5(%arg0: i32) -> (i32, i32) {
    %c0_i32 = arith.constant 0 : i32
    %c0_i32_0 = arith.constant 0 : i32
    %c0_i32_1 = arith.constant 0 : i32
    return %c0_i32, %c0_i32_0 : i32, i32
  }
  func.func @transform_6(%arg0: i32) -> (i32, i32) {
    %c0_i32 = arith.constant 0 : i32
    %c0_i32_0 = arith.constant 0 : i32
    return %arg0, %c0_i32 : i32, i32
  }
  func.func @transform_7(%arg0: i32) -> (i32, i32) {
    %c0_i32 = arith.constant 0 : i32
    %c0_i32_0 = arith.constant 0 : i32
    return %arg0, %c0_i32 : i32, i32
  }
}

</mosaic_0001>

<llo_original>
// kernel: fwd.1
$region0: #{fwd.1}
  #allocation0 [shape = 'u32[]', space=smem, size = 0x4, offset = 0x4, fixed_abs, tag = 'smem constant byte address 0x4 - core index']
  #allocation1 [shape = 'u32[144,128]{1,0:T(1,128)}', space=vmem, size = 0x12000, scoped, tag = 'internal scratch']
  %s0 = inlined_call_operand.vmem [shape: f32[256,32], index: 0, kind: input, shape index: {}]
  %s1 = inlined_call_operand.vmem [shape: f32[256,32], index: 1, kind: input, shape index: {}]
  %s2 = inlined_call_operand.vmem [shape: f32[32,32,32], index: 2, kind: input, shape index: {}]
  %s3 = inlined_call_operand.vmem [shape: f32[32,64], index: 3, kind: input, shape index: {}]
  %s4 = inlined_call_operand.vmem [shape: f32[32,32], index: 4, kind: input, shape index: {}]
  %s5 = inlined_call_operand.vmem [shape: f32[1,64], index: 5, kind: input, shape index: {}]
  %s6 = inlined_call_operand.hbm [shape: f32[256,32], index: 6, kind: output, shape index: {0}]
  %s7 = inlined_call_operand.hbm [shape: f32[256,32], index: 7, kind: output, shape index: {1}]
  %8 = xla_tuple %s6, %s7
  %s9 = sld [smem:[#allocation0]]
  $region42: #{fwd.1} parent=0
    _
  %s11 = ssub.s32 1, %s9
  %s12 = scalar_select 0, %s11, %s9
  $region1: #{fwd.1} parent=0
    #allocation2 [shape = 'u8[131072]{0}', space=vmem, size = 0x20000, scoped, tag = 'output window, operand 0, single buffered']
    #allocation3 [shape = 's32[1]{0}', space=sflag, size = 0x4, scoped, tag = 'scoped memory for fwd.1']
    #allocation4 [shape = 'u8[131072]{0}', space=vmem, size = 0x20000, scoped, tag = 'output window, operand 1, single buffered']
    #allocation5 [shape = 's32[1]{0}', space=sflag, size = 0x4, scoped, tag = 'scoped memory for fwd.1']
    %13 = vsyncpa [#allocation3], 0
    %14 = vsyncpa [#allocation5], 0
    // Predicated region
    $region2: #{fwd.1} parent=1 // pred_check
      _
    $region3: #{fwd.1} parent=1 // pred_check_branch
      %16 = sbr.rel (0) target = $region5
    $region4: #{fwd.1} parent=1 // pred_region
      _
    $region5: #{fwd.1} parent=1 // pred_fallthru
      _
    // Predicated region
    $region6: #{fwd.1} parent=1 // pred_check
      _
    $region7: #{fwd.1} parent=1 // pred_check_branch
      %18 = sbr.rel (0) target = $region9
    $region8: #{fwd.1} parent=1 // pred_region
      _
    $region9: #{fwd.1} parent=1 // pred_fallthru
      _
    // Predicated region
    $region10: #{fwd.1} parent=1 // pred_check
      _
    $region11: #{fwd.1} parent=1 // pred_check_branch
      %20 = sbr.rel (0) target = $region13
    $region12: #{fwd.1} parent=1 // pred_region
      _
    $region13: #{fwd.1} parent=1 // pred_fallthru
      _
    // Predicated region
    $region14: #{fwd.1} parent=1 // pred_check
      _
    $region15: #{fwd.1} parent=1 // pred_check_branch
      %22 = sbr.rel (0) target = $region17
    $region16: #{fwd.1} parent=1 // pred_region
      _
    $region17: #{fwd.1} parent=1 // pred_fallthru
      _
    // Predicated region
    $region18: #{fwd.1} parent=1 // pred_check
      _
    $region19: #{fwd.1} parent=1 // pred_check_branch
      %24 = sbr.rel (0) target = $region21
    $region20: #{fwd.1} parent=1 // pred_region
      _
    $region21: #{fwd.1} parent=1 // pred_fallthru
      _
    // Predicated region
    $region22: #{fwd.1} parent=1 // pred_check
      _
    $region23: #{fwd.1} parent=1 // pred_check_branch
      %26 = sbr.rel (0) target = $region25
    $region24: #{fwd.1} parent=1 // pred_region
      _
    $region25: #{fwd.1} parent=1 // pred_fallthru
      _
    %v27 = vld [vmem:[%s0] sm:$0xff]
    %v28 = vld [vmem:[%s0 + $0x8] sm:$0xff]
    %v29 = vld [vmem:[%s0 + $0x10] sm:$0xff]
    %v30 = vld [vmem:[%s0 + $0x18] sm:$0xff]
    %v31 = vld [vmem:[%s0 + $0x20] sm:$0xff]
    %v32 = vld [vmem:[%s0 + $0x28] sm:$0xff]
    %v33 = vld [vmem:[%s0 + $0x30] sm:$0xff]
    %v34 = vld [vmem:[%s0 + $0x38] sm:$0xff]
    %v35 = vld [vmem:[%s0 + $0x40] sm:$0xff]
    %v36 = vld [vmem:[%s0 + $0x48] sm:$0xff]
    %v37 = vld [vmem:[%s0 + $0x50] sm:$0xff]
    %v38 = vld [vmem:[%s0 + $0x58] sm:$0xff]
    %v39 = vld [vmem:[%s0 + $0x60] sm:$0xff]
    %v40 = vld [vmem:[%s0 + $0x68] sm:$0xff]
    %v41 = vld [vmem:[%s0 + $0x70] sm:$0xff]
    %v42 = vld [vmem:[%s0 + $0x78] sm:$0xff]
    %v43 = vld [vmem:[%s0 + $0x80] sm:$0xff]
    %v44 = vld [vmem:[%s0 + $0x88] sm:$0xff]
    %v45 = vld [vmem:[%s0 + $0x90] sm:$0xff]
    %v46 = vld [vmem:[%s0 + $0x98] sm:$0xff]
    %v47 = vld [vmem:[%s0 + $0xa0] sm:$0xff]
    %v48 = vld [vmem:[%s0 + $0xa8] sm:$0xff]
    %v49 = vld [vmem:[%s0 + $0xb0] sm:$0xff]
    %v50 = vld [vmem:[%s0 + $0xb8] sm:$0xff]
    %v51 = vld [vmem:[%s0 + $0xc0] sm:$0xff]
    %v52 = vld [vmem:[%s0 + $0xc8] sm:$0xff]
    %v53 = vld [vmem:[%s0 + $0xd0] sm:$0xff]
    %v54 = vld [vmem:[%s0 + $0xd8] sm:$0xff]
    %v55 = vld [vmem:[%s0 + $0xe0] sm:$0xff]
    %v56 = vld [vmem:[%s0 + $0xe8] sm:$0xff]
    %v57 = vld [vmem:[%s0 + $0xf0] sm:$0xff]
    %v58 = vld [vmem:[%s0 + $0xf8] sm:$0xff]
    %v59 = vld [vmem:[%s3] sm:$0xff]
    %v60 = vld [vmem:[%s3 + $0x8] sm:$0xff]
    %v61 = vld [vmem:[%s3 + $0x10] sm:$0xff]
    %v62 = vld [vmem:[%s3 + $0x18] sm:$0xff]
    %v63 = vld [vmem:[%s5] sm:$0x1]
    %v65 = vlaneseq
    %v66 = vshrl.u32 %v65, 7
    %v67 = vsub.s32 0, %v66
    %v68 = vrot.slane %v63, %v67
    %vm70 = vcmask 261120
    %v72 = vsel %vm70, %v27, 0
    %v75 = vsel %vm70, %v28, 0
    %v78 = vsel %vm70, %v29, 0
    %v81 = vsel %vm70, %v30, 0
    %v84 = vsel %vm70, %v31, 0
    %v87 = vsel %vm70, %v32, 0
    %v90 = vsel %vm70, %v33, 0
    %v93 = vsel %vm70, %v34, 0
    %v96 = vsel %vm70, %v35, 0
    %v99 = vsel %vm70, %v36, 0
    %v102 = vsel %vm70, %v37, 0
    %v105 = vsel %vm70, %v38, 0
    %v108 = vsel %vm70, %v39, 0
    %v111 = vsel %vm70, %v40, 0
    %v114 = vsel %vm70, %v41, 0
    %v117 = vsel %vm70, %v42, 0
    %v120 = vsel %vm70, %v43, 0
    %v123 = vsel %vm70, %v44, 0
    %v126 = vsel %vm70, %v45, 0
    %v129 = vsel %vm70, %v46, 0
    %v132 = vsel %vm70, %v47, 0
    %v135 = vsel %vm70, %v48, 0
    %v138 = vsel %vm70, %v49, 0
    %v141 = vsel %vm70, %v50, 0
    %v144 = vsel %vm70, %v51, 0
    %v147 = vsel %vm70, %v52, 0
    %v150 = vsel %vm70, %v53, 0
    %v153 = vsel %vm70, %v54, 0
    %v156 = vsel %vm70, %v55, 0
    %v159 = vsel %vm70, %v56, 0
    %v162 = vsel %vm70, %v57, 0
    %v165 = vsel %vm70, %v58, 0
    %167 = vmatprep.subr.mxu0 0.0
    %168 = vmatpush1.msra.mxu0 0.0
    %169 = vmatprep.subr.mxu0 0.0
    %170 = vmatpush1.msra.mxu0 0.0
    %171 = vmatprep.subr.mxu0 0.0
    %172 = vmatpush1.msra.mxu0 0.0
    %173 = vmatprep.subr.mxu0 0.0
    %174 = vmatpush1.msra.mxu0 0.0
    %175 = vmatprep.subr.mxu0 0.0
    %176 = vmatpush1.msra.mxu0 0.0
    %177 = vmatprep.subr.mxu0 0.0
    %178 = vmatpush1.msra.mxu0 0.0
    %179 = vmatprep.subr.mxu0 0.0
    %180 = vmatpush1.msra.mxu0 0.0
    %181 = vmatprep.subr.mxu0 0.0
    %182 = vmatpush1.msra.mxu0 0.0
    %183 = vmatprep.subr.mxu0 0.0
    %184 = vmatpush1.msra.mxu0 0.0
    %185 = vmatprep.subr.mxu0 0.0
    %186 = vmatpush1.msra.mxu0 0.0
    %187 = vmatprep.subr.mxu0 0.0
    %188 = vmatpush1.msra.mxu0 0.0
    %189 = vmatprep.subr.mxu0 0.0
    %190 = vmatpush1.msra.mxu0 0.0
    %191 = vmatprep.subr.mxu0 0.0
    %192 = vmatpush1.msra.mxu0 %v62
    %193 = vmatprep.subr.mxu0 0.0
    %194 = vmatpush1.msra.mxu0 %v61
    %195 = vmatprep.subr.mxu0 0.0
    %196 = vmatpush1.msra.mxu0 %v60
    %197 = vmatprep.subr.mxu0 0.0
    %198 = vmatpush1.msra.mxu0 %v59
    %199 = vmatprep.subr.mxu0 0.0
    %200 = vmatpush2.msra.mxu0 0.0
    %201 = vmatprep.subr.mxu0 0.0
    %202 = vmatpush2.msra.mxu0 0.0
    %203 = vmatprep.subr.mxu0 0.0
    %204 = vmatpush2.msra.mxu0 0.0
    %205 = vmatprep.subr.mxu0 0.0
    %206 = vmatpush2.msra.mxu0 0.0
    %207 = vmatprep.subr.mxu0 0.0
    %208 = vmatpush2.msra.mxu0 0.0
    %209 = vmatprep.subr.mxu0 0.0
    %210 = vmatpush2.msra.mxu0 0.0
    %211 = vmatprep.subr.mxu0 0.0
    %212 = vmatpush2.msra.mxu0 0.0
    %213 = vmatprep.subr.mxu0 0.0
    %214 = vmatpush2.msra.mxu0 0.0
    %215 = vmatprep.subr.mxu0 0.0
    %216 = vmatpush2.msra.mxu0 0.0
    %217 = vmatprep.subr.mxu0 0.0
    %218 = vmatpush2.msra.mxu0 0.0
    %219 = vmatprep.subr.mxu0 0.0
    %220 = vmatpush2.msra.mxu0 0.0
    %221 = vmatprep.subr.mxu0 0.0
    %222 = vmatpush2.msra.mxu0 0.0
    %223 = vmatprep.subr.mxu0 0.0
    %224 = vmatpush2.msra.mxu0 0.0
    %225 = vmatprep.subr.mxu0 0.0
    %226 = vmatpush2.msra.mxu0 0.0
    %227 = vmatprep.subr.mxu0 0.0
    %228 = vmatpush2.msra.mxu0 0.0
    %229 = vmatprep.subr.mxu0 0.0
    %230 = vmatpush2.msra.mxu0 0.0
    %231 = vmatprep.mubr.f32.mxu0 0.0
    %232 = vmatmul.mubr.f32.gmra.mxu0 %v72
    %v233 = vpop.f32.mrf.mxu0
    %v234 = vadd.f32 %v68, %v233
    %v235 = vpop.f32.mrf.mxu0
    %236 = vmatprep.mubr.f32.mxu0 0.0
    %237 = vmatmul.mubr.f32.gmra.mxu0 %v75
    %v238 = vpop.f32.mrf.mxu0
    %v239 = vadd.f32 %v68, %v238
    %v240 = vpop.f32.mrf.mxu0
    %241 = vmatprep.mubr.f32.mxu0 0.0
    %242 = vmatmul.mubr.f32.gmra.mxu0 %v78
    %v243 = vpop.f32.mrf.mxu0
    %v244 = vadd.f32 %v68, %v243
    %v245 = vpop.f32.mrf.mxu0
    %246 = vmatprep.mubr.f32.mxu0 0.0
    %247 = vmatmul.mubr.f32.gmra.mxu0 %v81
    %v248 = vpop.f32.mrf.mxu0
    %v249 = vadd.f32 %v68, %v248
    %v250 = vpop.f32.mrf.mxu0
    %251 = vmatprep.mubr.f32.mxu0 0.0
    %252 = vmatmul.mubr.f32.gmra.mxu0 %v84
    %v253 = vpop.f32.mrf.mxu0
    %v254 = vadd.f32 %v68, %v253
    %v255 = vpop.f32.mrf.mxu0
    %256 = vmatprep.mubr.f32.mxu0 0.0
    %257 = vmatmul.mubr.f32.gmra.mxu0 %v87
    %v258 = vpop.f32.mrf.mxu0
    %v259 = vadd.f32 %v68, %v258
    %v260 = vpop.f32.mrf.mxu0
    %261 = vmatprep.mubr.f32.mxu0 0.0
    %262 = vmatmul.mubr.f32.gmra.mxu0 %v90
    %v263 = vpop.f32.mrf.mxu0
    %v264 = vadd.f32 %v68, %v263
    %v265 = vpop.f32.mrf.mxu0
    %266 = vmatprep.mubr.f32.mxu0 0.0
    %267 = vmatmul.mubr.f32.gmra.mxu0 %v93
    %v268 = vpop.f32.mrf.mxu0
    %v269 = vadd.f32 %v68, %v268
    %v270 = vpop.f32.mrf.mxu0
    %271 = vmatprep.mubr.f32.mxu0 0.0
    %272 = vmatmul.mubr.f32.gmra.mxu0 %v96
    %v273 = vpop.f32.mrf.mxu0
    %v274 = vadd.f32 %v68, %v273
    %v275 = vpop.f32.mrf.mxu0
    %276 = vmatprep.mubr.f32.mxu0 0.0
    %277 = vmatmul.mubr.f32.gmra.mxu0 %v99
    %v278 = vpop.f32.mrf.mxu0
    %v279 = vadd.f32 %v68, %v278
    %v280 = vpop.f32.mrf.mxu0
    %281 = vmatprep.mubr.f32.mxu0 0.0
    %282 = vmatmul.mubr.f32.gmra.mxu0 %v102
    %v283 = vpop.f32.mrf.mxu0
    %v284 = vadd.f32 %v68, %v283
    %v285 = vpop.f32.mrf.mxu0
    %286 = vmatprep.mubr.f32.mxu0 0.0
    %287 = vmatmul.mubr.f32.gmra.mxu0 %v105
    %v288 = vpop.f32.mrf.mxu0
    %v289 = vadd.f32 %v68, %v288
    %v290 = vpop.f32.mrf.mxu0
    %291 = vmatprep.mubr.f32.mxu0 0.0
    %292 = vmatmul.mubr.f32.gmra.mxu0 %v108
    %v293 = vpop.f32.mrf.mxu0
    %v294 = vadd.f32 %v68, %v293
    %v295 = vpop.f32.mrf.mxu0
    %296 = vmatprep.mubr.f32.mxu0 0.0
    %297 = vmatmul.mubr.f32.gmra.mxu0 %v111
    %v298 = vpop.f32.mrf.mxu0
    %v299 = vadd.f32 %v68, %v298
    %v300 = vpop.f32.mrf.mxu0
    %301 = vmatprep.mubr.f32.mxu0 0.0
    %302 = vmatmul.mubr.f32.gmra.mxu0 %v114
    %v303 = vpop.f32.mrf.mxu0
    %v304 = vadd.f32 %v68, %v303
    %v305 = vpop.f32.mrf.mxu0
    %306 = vmatprep.mubr.f32.mxu0 0.0
    %307 = vmatmul.mubr.f32.gmra.mxu0 %v117
    %v308 = vpop.f32.mrf.mxu0
    %v309 = vadd.f32 %v68, %v308
    %v310 = vpop.f32.mrf.mxu0
    %311 = vmatprep.mubr.f32.mxu0 0.0
    %312 = vmatmul.mubr.f32.gmra.mxu0 %v120
    %v313 = vpop.f32.mrf.mxu0
    %v314 = vadd.f32 %v68, %v313
    %v315 = vpop.f32.mrf.mxu0
    %316 = vmatprep.mubr.f32.mxu0 0.0
    %317 = vmatmul.mubr.f32.gmra.mxu0 %v123
    %v318 = vpop.f32.mrf.mxu0
    %v319 = vadd.f32 %v68, %v318
    %v320 = vpop.f32.mrf.mxu0
    %321 = vmatprep.mubr.f32.mxu0 0.0
    %322 = vmatmul.mubr.f32.gmra.mxu0 %v126
    %v323 = vpop.f32.mrf.mxu0
    %v324 = vadd.f32 %v68, %v323
    %v325 = vpop.f32.mrf.mxu0
    %326 = vmatprep.mubr.f32.mxu0 0.0
    %327 = vmatmul.mubr.f32.gmra.mxu0 %v129
    %v328 = vpop.f32.mrf.mxu0
    %v329 = vadd.f32 %v68, %v328
    %v330 = vpop.f32.mrf.mxu0
    %331 = vmatprep.mubr.f32.mxu0 0.0
    %332 = vmatmul.mubr.f32.gmra.mxu0 %v132
    %v333 = vpop.f32.mrf.mxu0
    %v334 = vadd.f32 %v68, %v333
    %v335 = vpop.f32.mrf.mxu0
    %336 = vmatprep.mubr.f32.mxu0 0.0
    %337 = vmatmul.mubr.f32.gmra.mxu0 %v135
    %v338 = vpop.f32.mrf.mxu0
    %v339 = vadd.f32 %v68, %v338
    %v340 = vpop.f32.mrf.mxu0
    %341 = vmatprep.mubr.f32.mxu0 0.0
    %342 = vmatmul.mubr.f32.gmra.mxu0 %v138
    %v343 = vpop.f32.mrf.mxu0
    %v344 = vadd.f32 %v68, %v343
    %v345 = vpop.f32.mrf.mxu0
    %346 = vmatprep.mubr.f32.mxu0 0.0
    %347 = vmatmul.mubr.f32.gmra.mxu0 %v141
    %v348 = vpop.f32.mrf.mxu0
    %v349 = vadd.f32 %v68, %v348
    %v350 = vpop.f32.mrf.mxu0
    %351 = vmatprep.mubr.f32.mxu0 0.0
    %352 = vmatmul.mubr.f32.gmra.mxu0 %v144
    %v353 = vpop.f32.mrf.mxu0
    %v354 = vadd.f32 %v68, %v353
    %v355 = vpop.f32.mrf.mxu0
    %356 = vmatprep.mubr.f32.mxu0 0.0
    %357 = vmatmul.mubr.f32.gmra.mxu0 %v147
    %v358 = vpop.f32.mrf.mxu0
    %v359 = vadd.f32 %v68, %v358
    %v360 = vpop.f32.mrf.mxu0
    %361 = vmatprep.mubr.f32.mxu0 0.0
    %362 = vmatmul.mubr.f32.gmra.mxu0 %v150
    %v363 = vpop.f32.mrf.mxu0
    %v364 = vadd.f32 %v68, %v363
    %v365 = vpop.f32.mrf.mxu0
    %366 = vmatprep.mubr.f32.mxu0 0.0
    %367 = vmatmul.mubr.f32.gmra.mxu0 %v153
    %v368 = vpop.f32.mrf.mxu0
    %v369 = vadd.f32 %v68, %v368
    %v370 = vpop.f32.mrf.mxu0
    %371 = vmatprep.mubr.f32.mxu0 0.0
    %372 = vmatmul.mubr.f32.gmra.mxu0 %v156
    %v373 = vpop.f32.mrf.mxu0
    %v374 = vadd.f32 %v68, %v373
    %v375 = vpop.f32.mrf.mxu0
    %376 = vmatprep.mubr.f32.mxu0 0.0
    %377 = vmatmul.mubr.f32.gmra.mxu0 %v159
    %v378 = vpop.f32.mrf.mxu0
    %v379 = vadd.f32 %v68, %v378
    %v380 = vpop.f32.mrf.mxu0
    %381 = vmatprep.mubr.f32.mxu0 0.0
    %382 = vmatmul.mubr.f32.gmra.mxu0 %v162
    %v383 = vpop.f32.mrf.mxu0
    %v384 = vadd.f32 %v68, %v383
    %v385 = vpop.f32.mrf.mxu0
    %386 = vmatprep.mubr.f32.mxu0 0.0
    %387 = vmatmul.mubr.f32.gmra.mxu0 %v165
    %v388 = vpop.f32.mrf.mxu0
    %v389 = vadd.f32 %v68, %v388
    %v390 = vpop.f32.mrf.mxu0
    %391 = vdwg.mxu0
    %v392 = vld [vmem:[%s1] sm:$0xff]
    %v393 = vld [vmem:[%s1 + $0x8] sm:$0xff]
    %v394 = vld [vmem:[%s1 + $0x10] sm:$0xff]
    %v395 = vld [vmem:[%s1 + $0x18] sm:$0xff]
    %v396 = vld [vmem:[%s1 + $0x20] sm:$0xff]
    %v397 = vld [vmem:[%s1 + $0x28] sm:$0xff]
    %v398 = vld [vmem:[%s1 + $0x30] sm:$0xff]
    %v399 = vld [vmem:[%s1 + $0x38] sm:$0xff]
    %v400 = vld [vmem:[%s1 + $0x40] sm:$0xff]
    %v401 = vld [vmem:[%s1 + $0x48] sm:$0xff]
    %v402 = vld [vmem:[%s1 + $0x50] sm:$0xff]
    %v403 = vld [vmem:[%s1 + $0x58] sm:$0xff]
    %v404 = vld [vmem:[%s1 + $0x60] sm:$0xff]
    %v405 = vld [vmem:[%s1 + $0x68] sm:$0xff]
    %v406 = vld [vmem:[%s1 + $0x70] sm:$0xff]
    %v407 = vld [vmem:[%s1 + $0x78] sm:$0xff]
    %v408 = vld [vmem:[%s1 + $0x80] sm:$0xff]
    %v409 = vld [vmem:[%s1 + $0x88] sm:$0xff]
    %v410 = vld [vmem:[%s1 + $0x90] sm:$0xff]
    %v411 = vld [vmem:[%s1 + $0x98] sm:$0xff]
    %v412 = vld [vmem:[%s1 + $0xa0] sm:$0xff]
    %v413 = vld [vmem:[%s1 + $0xa8] sm:$0xff]
    %v414 = vld [vmem:[%s1 + $0xb0] sm:$0xff]
    %v415 = vld [vmem:[%s1 + $0xb8] sm:$0xff]
    %v416 = vld [vmem:[%s1 + $0xc0] sm:$0xff]
    %v417 = vld [vmem:[%s1 + $0xc8] sm:$0xff]
    %v418 = vld [vmem:[%s1 + $0xd0] sm:$0xff]
    %v419 = vld [vmem:[%s1 + $0xd8] sm:$0xff]
    %v420 = vld [vmem:[%s1 + $0xe0] sm:$0xff]
    %v421 = vld [vmem:[%s1 + $0xe8] sm:$0xff]
    %v422 = vld [vmem:[%s1 + $0xf0] sm:$0xff]
    %v423 = vld [vmem:[%s1 + $0xf8] sm:$0xff]
    %v424 = vld [vmem:[%s4] sm:$0xff]
    %v425 = vld [vmem:[%s4 + $0x8] sm:$0xff]
    %v426 = vld [vmem:[%s4 + $0x10] sm:$0xff]
    %v427 = vld [vmem:[%s4 + $0x18] sm:$0xff]
    %v429 = vsel %vm70, %v392, 0
    %v432 = vsel %vm70, %v393, 0
    %v435 = vsel %vm70, %v394, 0
    %v438 = vsel %vm70, %v395, 0
    %v441 = vsel %vm70, %v396, 0
    %v444 = vsel %vm70, %v397, 0
    %v447 = vsel %vm70, %v398, 0
    %v450 = vsel %vm70, %v399, 0
    %v453 = vsel %vm70, %v400, 0
    %v456 = vsel %vm70, %v401, 0
    %v459 = vsel %vm70, %v402, 0
    %v462 = vsel %vm70, %v403, 0
    %v465 = vsel %vm70, %v404, 0
    %v468 = vsel %vm70, %v405, 0
    %v471 = vsel %vm70, %v406, 0
    %v474 = vsel %vm70, %v407, 0
    %v477 = vsel %vm70, %v408, 0
    %v480 = vsel %vm70, %v409, 0
    %v483 = vsel %vm70, %v410, 0
    %v486 = vsel %vm70, %v411, 0
    %v489 = vsel %vm70, %v412, 0
    %v492 = vsel %vm70, %v413, 0
    %v495 = vsel %vm70, %v414, 0
    %v498 = vsel %vm70, %v415, 0
    %v501 = vsel %vm70, %v416, 0
    %v504 = vsel %vm70, %v417, 0
    %v507 = vsel %vm70, %v418, 0
    %v510 = vsel %vm70, %v419, 0
    %v513 = vsel %vm70, %v420, 0
    %v516 = vsel %vm70, %v421, 0
    %v519 = vsel %vm70, %v422, 0
    %v522 = vsel %vm70, %v423, 0
    %524 = vmatprep.subr.mxu0 0.0
    %525 = vmatpush1.msra.mxu0 0.0
    %526 = vmatprep.subr.mxu0 0.0
    %527 = vmatpush1.msra.mxu0 0.0
    %528 = vmatprep.subr.mxu0 0.0
    %529 = vmatpush1.msra.mxu0 0.0
    %530 = vmatprep.subr.mxu0 0.0
    %531 = vmatpush1.msra.mxu0 0.0
    %532 = vmatprep.subr.mxu0 0.0
    %533 = vmatpush1.msra.mxu0 0.0
    %534 = vmatprep.subr.mxu0 0.0
    %535 = vmatpush1.msra.mxu0 0.0
    %536 = vmatprep.subr.mxu0 0.0
    %537 = vmatpush1.msra.mxu0 0.0
    %538 = vmatprep.subr.mxu0 0.0
    %539 = vmatpush1.msra.mxu0 0.0
    %540 = vmatprep.subr.mxu0 0.0
    %541 = vmatpush1.msra.mxu0 0.0
    %542 = vmatprep.subr.mxu0 0.0
    %543 = vmatpush1.msra.mxu0 0.0
    %544 = vmatprep.subr.mxu0 0.0
    %545 = vmatpush1.msra.mxu0 0.0
    %546 = vmatprep.subr.mxu0 0.0
    %547 = vmatpush1.msra.mxu0 0.0
    %548 = vmatprep.subr.mxu0 0.0
    %549 = vmatpush1.msra.mxu0 %v427
    %550 = vmatprep.subr.mxu0 0.0
    %551 = vmatpush1.msra.mxu0 %v426
    %552 = vmatprep.subr.mxu0 0.0
    %553 = vmatpush1.msra.mxu0 %v425
    %554 = vmatprep.subr.mxu0 0.0
    %555 = vmatpush1.msra.mxu0 %v424
    %556 = vmatprep.subr.mxu0 0.0
    %557 = vmatpush2.msra.mxu0 0.0
    %558 = vmatprep.subr.mxu0 0.0
    %559 = vmatpush2.msra.mxu0 0.0
    %560 = vmatprep.subr.mxu0 0.0
    %561 = vmatpush2.msra.mxu0 0.0
    %562 = vmatprep.subr.mxu0 0.0
    %563 = vmatpush2.msra.mxu0 0.0
    %564 = vmatprep.subr.mxu0 0.0
    %565 = vmatpush2.msra.mxu0 0.0
    %566 = vmatprep.subr.mxu0 0.0
    %567 = vmatpush2.msra.mxu0 0.0
    %568 = vmatprep.subr.mxu0 0.0
    %569 = vmatpush2.msra.mxu0 0.0
    %570 = vmatprep.subr.mxu0 0.0
    %571 = vmatpush2.msra.mxu0 0.0
    %572 = vmatprep.subr.mxu0 0.0
    %573 = vmatpush2.msra.mxu0 0.0
    %574 = vmatprep.subr.mxu0 0.0
    %575 = vmatpush2.msra.mxu0 0.0
    %576 = vmatprep.subr.mxu0 0.0
    %577 = vmatpush2.msra.mxu0 0.0
    %578 = vmatprep.subr.mxu0 0.0
    %579 = vmatpush2.msra.mxu0 0.0
    %580 = vmatprep.subr.mxu0 0.0
    %581 = vmatpush2.msra.mxu0 0.0
    %582 = vmatprep.subr.mxu0 0.0
    %583 = vmatpush2.msra.mxu0 0.0
    %584 = vmatprep.subr.mxu0 0.0
    %585 = vmatpush2.msra.mxu0 0.0
    %586 = vmatprep.subr.mxu0 0.0
    %587 = vmatpush2.msra.mxu0 0.0
    %588 = vmatprep.mubr.f32.mxu0 0.0
    %589 = vmatmul.mubr.f32.gmra.mxu0 %v429
    %v590 = vpop.f32.mrf.mxu0
    %v591 = vadd.f32 0.0, %v590
    %v592 = vpop.f32.mrf.mxu0
    %593 = vmatprep.mubr.f32.mxu0 0.0
    %594 = vmatmul.mubr.f32.gmra.mxu0 %v432
    %v595 = vpop.f32.mrf.mxu0
    %v596 = vadd.f32 0.0, %v595
    %v597 = vpop.f32.mrf.mxu0
    %598 = vmatprep.mubr.f32.mxu0 0.0
    %599 = vmatmul.mubr.f32.gmra.mxu0 %v435
    %v600 = vpop.f32.mrf.mxu0
    %v601 = vadd.f32 0.0, %v600
    %v602 = vpop.f32.mrf.mxu0
    %603 = vmatprep.mubr.f32.mxu0 0.0
    %604 = vmatmul.mubr.f32.gmra.mxu0 %v438
    %v605 = vpop.f32.mrf.mxu0
    %v606 = vadd.f32 0.0, %v605
    %v607 = vpop.f32.mrf.mxu0
    %608 = vmatprep.mubr.f32.mxu0 0.0
    %609 = vmatmul.mubr.f32.gmra.mxu0 %v441
    %v610 = vpop.f32.mrf.mxu0
    %v611 = vadd.f32 0.0, %v610
    %v612 = vpop.f32.mrf.mxu0
    %613 = vmatprep.mubr.f32.mxu0 0.0
    %614 = vmatmul.mubr.f32.gmra.mxu0 %v444
    %v615 = vpop.f32.mrf.mxu0
    %v616 = vadd.f32 0.0, %v615
    %v617 = vpop.f32.mrf.mxu0
    %618 = vmatprep.mubr.f32.mxu0 0.0
    %619 = vmatmul.mubr.f32.gmra.mxu0 %v447
    %v620 = vpop.f32.mrf.mxu0
    %v621 = vadd.f32 0.0, %v620
    %v622 = vpop.f32.mrf.mxu0
    %623 = vmatprep.mubr.f32.mxu0 0.0
    %624 = vmatmul.mubr.f32.gmra.mxu0 %v450
    %v625 = vpop.f32.mrf.mxu0
    %v626 = vadd.f32 0.0, %v625
    %v627 = vpop.f32.mrf.mxu0
    %628 = vmatprep.mubr.f32.mxu0 0.0
    %629 = vmatmul.mubr.f32.gmra.mxu0 %v453
    %v630 = vpop.f32.mrf.mxu0
    %v631 = vadd.f32 0.0, %v630
    %v632 = vpop.f32.mrf.mxu0
    %633 = vmatprep.mubr.f32.mxu0 0.0
    %634 = vmatmul.mubr.f32.gmra.mxu0 %v456
    %v635 = vpop.f32.mrf.mxu0
    %v636 = vadd.f32 0.0, %v635
    %v637 = vpop.f32.mrf.mxu0
    %638 = vmatprep.mubr.f32.mxu0 0.0
    %639 = vmatmul.mubr.f32.gmra.mxu0 %v459
    %v640 = vpop.f32.mrf.mxu0
    %v641 = vadd.f32 0.0, %v640
    %v642 = vpop.f32.mrf.mxu0
    %643 = vmatprep.mubr.f32.mxu0 0.0
    %644 = vmatmul.mubr.f32.gmra.mxu0 %v462
    %v645 = vpop.f32.mrf.mxu0
    %v646 = vadd.f32 0.0, %v645
    %v647 = vpop.f32.mrf.mxu0
    %648 = vmatprep.mubr.f32.mxu0 0.0
    %649 = vmatmul.mubr.f32.gmra.mxu0 %v465
    %v650 = vpop.f32.mrf.mxu0
    %v651 = vadd.f32 0.0, %v650
    %v652 = vpop.f32.mrf.mxu0
    %653 = vmatprep.mubr.f32.mxu0 0.0
    %654 = vmatmul.mubr.f32.gmra.mxu0 %v468
    %v655 = vpop.f32.mrf.mxu0
    %v656 = vadd.f32 0.0, %v655
    %v657 = vpop.f32.mrf.mxu0
    %658 = vmatprep.mubr.f32.mxu0 0.0
    %659 = vmatmul.mubr.f32.gmra.mxu0 %v471
    %v660 = vpop.f32.mrf.mxu0
    %v661 = vadd.f32 0.0, %v660
    %v662 = vpop.f32.mrf.mxu0
    %663 = vmatprep.mubr.f32.mxu0 0.0
    %664 = vmatmul.mubr.f32.gmra.mxu0 %v474
    %v665 = vpop.f32.mrf.mxu0
    %v666 = vadd.f32 0.0, %v665
    %v667 = vpop.f32.mrf.mxu0
    %668 = vmatprep.mubr.f32.mxu0 0.0
    %669 = vmatmul.mubr.f32.gmra.mxu0 %v477
    %v670 = vpop.f32.mrf.mxu0
    %v671 = vadd.f32 0.0, %v670
    %v672 = vpop.f32.mrf.mxu0
    %673 = vmatprep.mubr.f32.mxu0 0.0
    %674 = vmatmul.mubr.f32.gmra.mxu0 %v480
    %v675 = vpop.f32.mrf.mxu0
    %v676 = vadd.f32 0.0, %v675
    %v677 = vpop.f32.mrf.mxu0
    %678 = vmatprep.mubr.f32.mxu0 0.0
    %679 = vmatmul.mubr.f32.gmra.mxu0 %v483
    %v680 = vpop.f32.mrf.mxu0
    %v681 = vadd.f32 0.0, %v680
    %v682 = vpop.f32.mrf.mxu0
    %683 = vmatprep.mubr.f32.mxu0 0.0
    %684 = vmatmul.mubr.f32.gmra.mxu0 %v486
    %v685 = vpop.f32.mrf.mxu0
    %v686 = vadd.f32 0.0, %v685
    %v687 = vpop.f32.mrf.mxu0
    %688 = vmatprep.mubr.f32.mxu0 0.0
    %689 = vmatmul.mubr.f32.gmra.mxu0 %v489
    %v690 = vpop.f32.mrf.mxu0
    %v691 = vadd.f32 0.0, %v690
    %v692 = vpop.f32.mrf.mxu0
    %693 = vmatprep.mubr.f32.mxu0 0.0
    %694 = vmatmul.mubr.f32.gmra.mxu0 %v492
    %v695 = vpop.f32.mrf.mxu0
    %v696 = vadd.f32 0.0, %v695
    %v697 = vpop.f32.mrf.mxu0
    %698 = vmatprep.mubr.f32.mxu0 0.0
    %699 = vmatmul.mubr.f32.gmra.mxu0 %v495
    %v700 = vpop.f32.mrf.mxu0
    %v701 = vadd.f32 0.0, %v700
    %v702 = vpop.f32.mrf.mxu0
    %703 = vmatprep.mubr.f32.mxu0 0.0
    %704 = vmatmul.mubr.f32.gmra.mxu0 %v498
    %v705 = vpop.f32.mrf.mxu0
    %v706 = vadd.f32 0.0, %v705
    %v707 = vpop.f32.mrf.mxu0
    %708 = vmatprep.mubr.f32.mxu0 0.0
    %709 = vmatmul.mubr.f32.gmra.mxu0 %v501
    %v710 = vpop.f32.mrf.mxu0
    %v711 = vadd.f32 0.0, %v710
    %v712 = vpop.f32.mrf.mxu0
    %713 = vmatprep.mubr.f32.mxu0 0.0
    %714 = vmatmul.mubr.f32.gmra.mxu0 %v504
    %v715 = vpop.f32.mrf.mxu0
    %v716 = vadd.f32 0.0, %v715
    %v717 = vpop.f32.mrf.mxu0
    %718 = vmatprep.mubr.f32.mxu0 0.0
    %719 = vmatmul.mubr.f32.gmra.mxu0 %v507
    %v720 = vpop.f32.mrf.mxu0
    %v721 = vadd.f32 0.0, %v720
    %v722 = vpop.f32.mrf.mxu0
    %723 = vmatprep.mubr.f32.mxu0 0.0
    %724 = vmatmul.mubr.f32.gmra.mxu0 %v510
    %v725 = vpop.f32.mrf.mxu0
    %v726 = vadd.f32 0.0, %v725
    %v727 = vpop.f32.mrf.mxu0
    %728 = vmatprep.mubr.f32.mxu0 0.0
    %729 = vmatmul.mubr.f32.gmra.mxu0 %v513
    %v730 = vpop.f32.mrf.mxu0
    %v731 = vadd.f32 0.0, %v730
    %v732 = vpop.f32.mrf.mxu0
    %733 = vmatprep.mubr.f32.mxu0 0.0
    %734 = vmatmul.mubr.f32.gmra.mxu0 %v516
    %v735 = vpop.f32.mrf.mxu0
    %v736 = vadd.f32 0.0, %v735
    %v737 = vpop.f32.mrf.mxu0
    %738 = vmatprep.mubr.f32.mxu0 0.0
    %739 = vmatmul.mubr.f32.gmra.mxu0 %v519
    %v740 = vpop.f32.mrf.mxu0
    %v741 = vadd.f32 0.0, %v740
    %v742 = vpop.f32.mrf.mxu0
    %743 = vmatprep.mubr.f32.mxu0 0.0
    %744 = vmatmul.mubr.f32.gmra.mxu0 %v522
    %v745 = vpop.f32.mrf.mxu0
    %v746 = vadd.f32 0.0, %v745
    %v747 = vpop.f32.mrf.mxu0
    %748 = vdwg.mxu0
    %v749 = vadd.f32 %v234, %v591
    %v750 = vadd.f32 %v239, %v596
    %v751 = vadd.f32 %v244, %v601
    %v752 = vadd.f32 %v249, %v606
    %v753 = vadd.f32 %v254, %v611
    %v754 = vadd.f32 %v259, %v616
    %v755 = vadd.f32 %v264, %v621
    %v756 = vadd.f32 %v269, %v626
    %v757 = vadd.f32 %v274, %v631
    %v758 = vadd.f32 %v279, %v636
    %v759 = vadd.f32 %v284, %v641
    %v760 = vadd.f32 %v289, %v646
    %v761 = vadd.f32 %v294, %v651
    %v762 = vadd.f32 %v299, %v656
    %v763 = vadd.f32 %v304, %v661
    %v764 = vadd.f32 %v309, %v666
    %v765 = vadd.f32 %v314, %v671
    %v766 = vadd.f32 %v319, %v676
    %v767 = vadd.f32 %v324, %v681
    %v768 = vadd.f32 %v329, %v686
    %v769 = vadd.f32 %v334, %v691
    %v770 = vadd.f32 %v339, %v696
    %v771 = vadd.f32 %v344, %v701
    %v772 = vadd.f32 %v349, %v706
    %v773 = vadd.f32 %v354, %v711
    %v774 = vadd.f32 %v359, %v716
    %v775 = vadd.f32 %v364, %v721
    %v776 = vadd.f32 %v369, %v726
    %v777 = vadd.f32 %v374, %v731
    %v778 = vadd.f32 %v379, %v736
    %v779 = vadd.f32 %v384, %v741
    %v780 = vadd.f32 %v389, %v746
    %v781 = vsel %vm70, %v749, -inf
    %782 = vmax.xlane.f32.xlu0 %v781
    %v783 = vpop.xlane.xlu0 %782
    %v784 = vsel %vm70, %v750, -inf
    %785 = vmax.xlane.f32.xlu0 %v784
    %v786 = vpop.xlane.xlu0 %785
    %v787 = vsel %vm70, %v751, -inf
    %788 = vmax.xlane.f32.xlu0 %v787
    %v789 = vpop.xlane.xlu0 %788
    %v790 = vsel %vm70, %v752, -inf
    %791 = vmax.xlane.f32.xlu0 %v790
    %v792 = vpop.xlane.xlu0 %791
    %v793 = vsel %vm70, %v753, -inf
    %794 = vmax.xlane.f32.xlu0 %v793
    %v795 = vpop.xlane.xlu0 %794
    %v796 = vsel %vm70, %v754, -inf
    %797 = vmax.xlane.f32.xlu0 %v796
    %v798 = vpop.xlane.xlu0 %797
    %v799 = vsel %vm70, %v755, -inf
    %800 = vmax.xlane.f32.xlu0 %v799
    %v801 = vpop.xlane.xlu0 %800
    %v802 = vsel %vm70, %v756, -inf
    %803 = vmax.xlane.f32.xlu0 %v802
    %v804 = vpop.xlane.xlu0 %803
    %v805 = vsel %vm70, %v757, -inf
    %806 = vmax.xlane.f32.xlu0 %v805
    %v807 = vpop.xlane.xlu0 %806
    %v808 = vsel %vm70, %v758, -inf
    %809 = vmax.xlane.f32.xlu0 %v808
    %v810 = vpop.xlane.xlu0 %809
    %v811 = vsel %vm70, %v759, -inf
    %812 = vmax.xlane.f32.xlu0 %v811
    %v813 = vpop.xlane.xlu0 %812
    %v814 = vsel %vm70, %v760, -inf
    %815 = vmax.xlane.f32.xlu0 %v814
    %v816 = vpop.xlane.xlu0 %815
    %v817 = vsel %vm70, %v761, -inf
    %818 = vmax.xlane.f32.xlu0 %v817
    %v819 = vpop.xlane.xlu0 %818
    %v820 = vsel %vm70, %v762, -inf
    %821 = vmax.xlane.f32.xlu0 %v820
    %v822 = vpop.xlane.xlu0 %821
    %v823 = vsel %vm70, %v763, -inf
    %824 = vmax.xlane.f32.xlu0 %v823
    %v825 = vpop.xlane.xlu0 %824
    %v826 = vsel %vm70, %v764, -inf
    %827 = vmax.xlane.f32.xlu0 %v826
    %v828 = vpop.xlane.xlu0 %827
    %v829 = vsel %vm70, %v765, -inf
    %830 = vmax.xlane.f32.xlu0 %v829
    %v831 = vpop.xlane.xlu0 %830
    %v832 = vsel %vm70, %v766, -inf
    %833 = vmax.xlane.f32.xlu0 %v832
    %v834 = vpop.xlane.xlu0 %833
    %v835 = vsel %vm70, %v767, -inf
    %836 = vmax.xlane.f32.xlu0 %v835
    %v837 = vpop.xlane.xlu0 %836
    %v838 = vsel %vm70, %v768, -inf
    %839 = vmax.xlane.f32.xlu0 %v838
    %v840 = vpop.xlane.xlu0 %839
    %v841 = vsel %vm70, %v769, -inf
    %842 = vmax.xlane.f32.xlu0 %v841
    %v843 = vpop.xlane.xlu0 %842
    %v844 = vsel %vm70, %v770, -inf
    %845 = vmax.xlane.f32.xlu0 %v844
    %v846 = vpop.xlane.xlu0 %845
    %v847 = vsel %vm70, %v771, -inf
    %848 = vmax.xlane.f32.xlu0 %v847
    %v849 = vpop.xlane.xlu0 %848
    %v850 = vsel %vm70, %v772, -inf
    %851 = vmax.xlane.f32.xlu0 %v850
    %v852 = vpop.xlane.xlu0 %851
    %v853 = vsel %vm70, %v773, -inf
    %854 = vmax.xlane.f32.xlu0 %v853
    %v855 = vpop.xlane.xlu0 %854
    %v856 = vsel %vm70, %v774, -inf
    %857 = vmax.xlane.f32.xlu0 %v856
    %v858 = vpop.xlane.xlu0 %857
    %v859 = vsel %vm70, %v775, -inf
    %860 = vmax.xlane.f32.xlu0 %v859
    %v861 = vpop.xlane.xlu0 %860
    %v862 = vsel %vm70, %v776, -inf
    %863 = vmax.xlane.f32.xlu0 %v862
    %v864 = vpop.xlane.xlu0 %863
    %v865 = vsel %vm70, %v777, -inf
    %866 = vmax.xlane.f32.xlu0 %v865
    %v867 = vpop.xlane.xlu0 %866
    %v868 = vsel %vm70, %v778, -inf
    %869 = vmax.xlane.f32.xlu0 %v868
    %v870 = vpop.xlane.xlu0 %869
    %v871 = vsel %vm70, %v779, -inf
    %872 = vmax.xlane.f32.xlu0 %v871
    %v873 = vpop.xlane.xlu0 %872
    %v874 = vsel %vm70, %v780, -inf
    %875 = vmax.xlane.f32.xlu0 %v874
    %v876 = vpop.xlane.xlu0 %875
    %v877 = vsub.f32 %v749, %v783
    %v878 = vsub.f32 %v750, %v786
    %v879 = vsub.f32 %v751, %v789
    %v880 = vsub.f32 %v752, %v792
    %v881 = vsub.f32 %v753, %v795
    %v882 = vsub.f32 %v754, %v798
    %v883 = vsub.f32 %v755, %v801
    %v884 = vsub.f32 %v756, %v804
    %v885 = vsub.f32 %v757, %v807
    %v886 = vsub.f32 %v758, %v810
    %v887 = vsub.f32 %v759, %v813
    %v888 = vsub.f32 %v760, %v816
    %v889 = vsub.f32 %v761, %v819
    %v890 = vsub.f32 %v762, %v822
    %v891 = vsub.f32 %v763, %v825
    %v892 = vsub.f32 %v764, %v828
    %v893 = vsub.f32 %v765, %v831
    %v894 = vsub.f32 %v766, %v834
    %v895 = vsub.f32 %v767, %v837
    %v896 = vsub.f32 %v768, %v840
    %v897 = vsub.f32 %v769, %v843
    %v898 = vsub.f32 %v770, %v846
    %v899 = vsub.f32 %v771, %v849
    %v900 = vsub.f32 %v772, %v852
    %v901 = vsub.f32 %v773, %v855
    %v902 = vsub.f32 %v774, %v858
    %v903 = vsub.f32 %v775, %v861
    %v904 = vsub.f32 %v776, %v864
    %v905 = vsub.f32 %v777, %v867
    %v906 = vsub.f32 %v778, %v870
    %v907 = vsub.f32 %v779, %v873
    %v908 = vsub.f32 %v780, %v876
    %v909 = vmul.f32 %v877, 1.442695
    %v910 = vpow.pop %v909
    %v911 = vmul.f32 %v878, 1.442695
    %v912 = vpow.pop %v911
    %v913 = vmul.f32 %v879, 1.442695
    %v914 = vpow.pop %v913
    %v915 = vmul.f32 %v880, 1.442695
    %v916 = vpow.pop %v915
    %v917 = vmul.f32 %v881, 1.442695
    %v918 = vpow.pop %v917
    %v919 = vmul.f32 %v882, 1.442695
    %v920 = vpow.pop %v919
    %v921 = vmul.f32 %v883, 1.442695
    %v922 = vpow.pop %v921
    %v923 = vmul.f32 %v884, 1.442695
    %v924 = vpow.pop %v923
    %v925 = vmul.f32 %v885, 1.442695
    %v926 = vpow.pop %v925
    %v927 = vmul.f32 %v886, 1.442695
    %v928 = vpow.pop %v927
    %v929 = vmul.f32 %v887, 1.442695
    %v930 = vpow.pop %v929
    %v931 = vmul.f32 %v888, 1.442695
    %v932 = vpow.pop %v931
    %v933 = vmul.f32 %v889, 1.442695
    %v934 = vpow.pop %v933
    %v935 = vmul.f32 %v890, 1.442695
    %v936 = vpow.pop %v935
    %v937 = vmul.f32 %v891, 1.442695
    %v938 = vpow.pop %v937
    %v939 = vmul.f32 %v892, 1.442695
    %v940 = vpow.pop %v939
    %v941 = vmul.f32 %v893, 1.442695
    %v942 = vpow.pop %v941
    %v943 = vmul.f32 %v894, 1.442695
    %v944 = vpow.pop %v943
    %v945 = vmul.f32 %v895, 1.442695
    %v946 = vpow.pop %v945
    %v947 = vmul.f32 %v896, 1.442695
    %v948 = vpow.pop %v947
    %v949 = vmul.f32 %v897, 1.442695
    %v950 = vpow.pop %v949
    %v951 = vmul.f32 %v898, 1.442695
    %v952 = vpow.pop %v951
    %v953 = vmul.f32 %v899, 1.442695
    %v954 = vpow.pop %v953
    %v955 = vmul.f32 %v900, 1.442695
    %v956 = vpow.pop %v955
    %v957 = vmul.f32 %v901, 1.442695
    %v958 = vpow.pop %v957
    %v959 = vmul.f32 %v902, 1.442695
    %v960 = vpow.pop %v959
    %v961 = vmul.f32 %v903, 1.442695
    %v962 = vpow.pop %v961
    %v963 = vmul.f32 %v904, 1.442695
    %v964 = vpow.pop %v963
    %v965 = vmul.f32 %v905, 1.442695
    %v966 = vpow.pop %v965
    %v967 = vmul.f32 %v906, 1.442695
    %v968 = vpow.pop %v967
    %v969 = vmul.f32 %v907, 1.442695
    %v970 = vpow.pop %v969
    %v971 = vmul.f32 %v908, 1.442695
    %v972 = vpow.pop %v971
    %v973 = vsel %vm70, %v910, 0.0
    %974 = vadd.xlane.f32.xlu0 %v973
    %v975 = vpop.xlane.xlu0 %974
    %v976 = vsel %vm70, %v912, 0.0
    %977 = vadd.xlane.f32.xlu0 %v976
    %v978 = vpop.xlane.xlu0 %977
    %v979 = vsel %vm70, %v914, 0.0
    %980 = vadd.xlane.f32.xlu0 %v979
    %v981 = vpop.xlane.xlu0 %980
    %v982 = vsel %vm70, %v916, 0.0
    %983 = vadd.xlane.f32.xlu0 %v982
    %v984 = vpop.xlane.xlu0 %983
    %v985 = vsel %vm70, %v918, 0.0
    %986 = vadd.xlane.f32.xlu0 %v985
    %v987 = vpop.xlane.xlu0 %986
    %v988 = vsel %vm70, %v920, 0.0
    %989 = vadd.xlane.f32.xlu0 %v988
    %v990 = vpop.xlane.xlu0 %989
    %v991 = vsel %vm70, %v922, 0.0
    %992 = vadd.xlane.f32.xlu0 %v991
    %v993 = vpop.xlane.xlu0 %992
    %v994 = vsel %vm70, %v924, 0.0
    %995 = vadd.xlane.f32.xlu0 %v994
    %v996 = vpop.xlane.xlu0 %995
    %v997 = vsel %vm70, %v926, 0.0
    %998 = vadd.xlane.f32.xlu0 %v997
    %v999 = vpop.xlane.xlu0 %998
    %v1000 = vsel %vm70, %v928, 0.0
    %1001 = vadd.xlane.f32.xlu0 %v1000
    %v1002 = vpop.xlane.xlu0 %1001
    %v1003 = vsel %vm70, %v930, 0.0
    %1004 = vadd.xlane.f32.xlu0 %v1003
    %v1005 = vpop.xlane.xlu0 %1004
    %v1006 = vsel %vm70, %v932, 0.0
    %1007 = vadd.xlane.f32.xlu0 %v1006
    %v1008 = vpop.xlane.xlu0 %1007
    %v1009 = vsel %vm70, %v934, 0.0
    %1010 = vadd.xlane.f32.xlu0 %v1009
    %v1011 = vpop.xlane.xlu0 %1010
    %v1012 = vsel %vm70, %v936, 0.0
    %1013 = vadd.xlane.f32.xlu0 %v1012
    %v1014 = vpop.xlane.xlu0 %1013
    %v1015 = vsel %vm70, %v938, 0.0
    %1016 = vadd.xlane.f32.xlu0 %v1015
    %v1017 = vpop.xlane.xlu0 %1016
    %v1018 = vsel %vm70, %v940, 0.0
    %1019 = vadd.xlane.f32.xlu0 %v1018
    %v1020 = vpop.xlane.xlu0 %1019
    %v1021 = vsel %vm70, %v942, 0.0
    %1022 = vadd.xlane.f32.xlu0 %v1021
    %v1023 = vpop.xlane.xlu0 %1022
    %v1024 = vsel %vm70, %v944, 0.0
    %1025 = vadd.xlane.f32.xlu0 %v1024
    %v1026 = vpop.xlane.xlu0 %1025
    %v1027 = vsel %vm70, %v946, 0.0
    %1028 = vadd.xlane.f32.xlu0 %v1027
    %v1029 = vpop.xlane.xlu0 %1028
    %v1030 = vsel %vm70, %v948, 0.0
    %1031 = vadd.xlane.f32.xlu0 %v1030
    %v1032 = vpop.xlane.xlu0 %1031
    %v1033 = vsel %vm70, %v950, 0.0
    %1034 = vadd.xlane.f32.xlu0 %v1033
    %v1035 = vpop.xlane.xlu0 %1034
    %v1036 = vsel %vm70, %v952, 0.0
    %1037 = vadd.xlane.f32.xlu0 %v1036
    %v1038 = vpop.xlane.xlu0 %1037
    %v1039 = vsel %vm70, %v954, 0.0
    %1040 = vadd.xlane.f32.xlu0 %v1039
    %v1041 = vpop.xlane.xlu0 %1040
    %v1042 = vsel %vm70, %v956, 0.0
    %1043 = vadd.xlane.f32.xlu0 %v1042
    %v1044 = vpop.xlane.xlu0 %1043
    %v1045 = vsel %vm70, %v958, 0.0
    %1046 = vadd.xlane.f32.xlu0 %v1045
    %v1047 = vpop.xlane.xlu0 %1046
    %v1048 = vsel %vm70, %v960, 0.0
    %1049 = vadd.xlane.f32.xlu0 %v1048
    %v1050 = vpop.xlane.xlu0 %1049
    %v1051 = vsel %vm70, %v962, 0.0
    %1052 = vadd.xlane.f32.xlu0 %v1051
    %v1053 = vpop.xlane.xlu0 %1052
    %v1054 = vsel %vm70, %v964, 0.0
    %1055 = vadd.xlane.f32.xlu0 %v1054
    %v1056 = vpop.xlane.xlu0 %1055
    %v1057 = vsel %vm70, %v966, 0.0
    %1058 = vadd.xlane.f32.xlu0 %v1057
    %v1059 = vpop.xlane.xlu0 %1058
    %v1060 = vsel %vm70, %v968, 0.0
    %1061 = vadd.xlane.f32.xlu0 %v1060
    %v1062 = vpop.xlane.xlu0 %1061
    %v1063 = vsel %vm70, %v970, 0.0
    %1064 = vadd.xlane.f32.xlu0 %v1063
    %v1065 = vpop.xlane.xlu0 %1064
    %v1066 = vsel %vm70, %v972, 0.0
    %1067 = vadd.xlane.f32.xlu0 %v1066
    %v1068 = vpop.xlane.xlu0 %1067
    %v1069 = vrcp.pop %v975
    %v1070 = vrcp.pop %v978
    %v1071 = vrcp.pop %v981
    %v1072 = vrcp.pop %v984
    %v1073 = vrcp.pop %v987
    %v1074 = vrcp.pop %v990
    %v1075 = vrcp.pop %v993
    %v1076 = vrcp.pop %v996
    %v1077 = vrcp.pop %v999
    %v1078 = vrcp.pop %v1002
    %v1079 = vrcp.pop %v1005
    %v1080 = vrcp.pop %v1008
    %v1081 = vrcp.pop %v1011
    %v1082 = vrcp.pop %v1014
    %v1083 = vrcp.pop %v1017
    %v1084 = vrcp.pop %v1020
    %v1085 = vrcp.pop %v1023
    %v1086 = vrcp.pop %v1026
    %v1087 = vrcp.pop %v1029
    %v1088 = vrcp.pop %v1032
    %v1089 = vrcp.pop %v1035
    %v1090 = vrcp.pop %v1038
    %v1091 = vrcp.pop %v1041
    %v1092 = vrcp.pop %v1044
    %v1093 = vrcp.pop %v1047
    %v1094 = vrcp.pop %v1050
    %v1095 = vrcp.pop %v1053
    %v1096 = vrcp.pop %v1056
    %v1097 = vrcp.pop %v1059
    %v1098 = vrcp.pop %v1062
    %v1099 = vrcp.pop %v1065
    %v1100 = vrcp.pop %v1068
    %v1101 = vmul.f32 %v910, %v1069
    %v1102 = vmul.f32 %v912, %v1070
    %v1103 = vmul.f32 %v914, %v1071
    %v1104 = vmul.f32 %v916, %v1072
    %v1105 = vmul.f32 %v918, %v1073
    %v1106 = vmul.f32 %v920, %v1074
    %v1107 = vmul.f32 %v922, %v1075
    %v1108 = vmul.f32 %v924, %v1076
    %v1109 = vmul.f32 %v926, %v1077
    %v1110 = vmul.f32 %v928, %v1078
    %v1111 = vmul.f32 %v930, %v1079
    %v1112 = vmul.f32 %v932, %v1080
    %v1113 = vmul.f32 %v934, %v1081
    %v1114 = vmul.f32 %v936, %v1082
    %v1115 = vmul.f32 %v938, %v1083
    %v1116 = vmul.f32 %v940, %v1084
    %v1117 = vmul.f32 %v942, %v1085
    %v1118 = vmul.f32 %v944, %v1086
    %v1119 = vmul.f32 %v946, %v1087
    %v1120 = vmul.f32 %v948, %v1088
    %v1121 = vmul.f32 %v950, %v1089
    %v1122 = vmul.f32 %v952, %v1090
    %v1123 = vmul.f32 %v954, %v1091
    %v1124 = vmul.f32 %v956, %v1092
    %v1125 = vmul.f32 %v958, %v1093
    %v1126 = vmul.f32 %v960, %v1094
    %v1127 = vmul.f32 %v962, %v1095
    %v1128 = vmul.f32 %v964, %v1096
    %v1129 = vmul.f32 %v966, %v1097
    %v1130 = vmul.f32 %v968, %v1098
    %v1131 = vmul.f32 %v970, %v1099
    %v1132 = vmul.f32 %v972, %v1100
    %1133 = vst.msk [vmem:[#allocation4] sm:$0xff] %vm70, %v1101
    %1134 = vst.msk [vmem:[#allocation4 + $0x8] sm:$0xff] %vm70, %v1102
    %1135 = vst.msk [vmem:[#allocation4 + $0x10] sm:$0xff] %vm70, %v1103
    %1136 = vst.msk [vmem:[#allocation4 + $0x18] sm:$0xff] %vm70, %v1104
    %1137 = vst.msk [vmem:[#allocation4 + $0x20] sm:$0xff] %vm70, %v1105
    %1138 = vst.msk [vmem:[#allocation4 + $0x28] sm:$0xff] %vm70, %v1106
    %1139 = vst.msk [vmem:[#allocation4 + $0x30] sm:$0xff] %vm70, %v1107
    %1140 = vst.msk [vmem:[#allocation4 + $0x38] sm:$0xff] %vm70, %v1108
    %1141 = vst.msk [vmem:[#allocation4 + $0x40] sm:$0xff] %vm70, %v1109
    %1142 = vst.msk [vmem:[#allocation4 + $0x48] sm:$0xff] %vm70, %v1110
    %1143 = vst.msk [vmem:[#allocation4 + $0x50] sm:$0xff] %vm70, %v1111
    %1144 = vst.msk [vmem:[#allocation4 + $0x58] sm:$0xff] %vm70, %v1112
    %1145 = vst.msk [vmem:[#allocation4 + $0x60] sm:$0xff] %vm70, %v1113
    %1146 = vst.msk [vmem:[#allocation4 + $0x68] sm:$0xff] %vm70, %v1114
    %1147 = vst.msk [vmem:[#allocation4 + $0x70] sm:$0xff] %vm70, %v1115
    %1148 = vst.msk [vmem:[#allocation4 + $0x78] sm:$0xff] %vm70, %v1116
    %1149 = vst.msk [vmem:[#allocation4 + $0x80] sm:$0xff] %vm70, %v1117
    %1150 = vst.msk [vmem:[#allocation4 + $0x88] sm:$0xff] %vm70, %v1118
    %1151 = vst.msk [vmem:[#allocation4 + $0x90] sm:$0xff] %vm70, %v1119
    %1152 = vst.msk [vmem:[#allocation4 + $0x98] sm:$0xff] %vm70, %v1120
    %1153 = vst.msk [vmem:[#allocation4 + $0xa0] sm:$0xff] %vm70, %v1121
    %1154 = vst.msk [vmem:[#allocation4 + $0xa8] sm:$0xff] %vm70, %v1122
    %1155 = vst.msk [vmem:[#allocation4 + $0xb0] sm:$0xff] %vm70, %v1123
    %1156 = vst.msk [vmem:[#allocation4 + $0xb8] sm:$0xff] %vm70, %v1124
    %1157 = vst.msk [vmem:[#allocation4 + $0xc0] sm:$0xff] %vm70, %v1125
    %1158 = vst.msk [vmem:[#allocation4 + $0xc8] sm:$0xff] %vm70, %v1126
    %1159 = vst.msk [vmem:[#allocation4 + $0xd0] sm:$0xff] %vm70, %v1127
    %1160 = vst.msk [vmem:[#allocation4 + $0xd8] sm:$0xff] %vm70, %v1128
    %1161 = vst.msk [vmem:[#allocation4 + $0xe0] sm:$0xff] %vm70, %v1129
    %1162 = vst.msk [vmem:[#allocation4 + $0xe8] sm:$0xff] %vm70, %v1130
    %1163 = vst.msk [vmem:[#allocation4 + $0xf0] sm:$0xff] %vm70, %v1131
    %1164 = vst.msk [vmem:[#allocation4 + $0xf8] sm:$0xff] %vm70, %v1132
    %v1165 = vld [vmem:[%s2] sm:$0xff]
    %v1166 = vld [vmem:[%s2 + $0x8] sm:$0xff]
    %v1167 = vld [vmem:[%s2 + $0x10] sm:$0xff]
    %v1168 = vld [vmem:[%s2 + $0x18] sm:$0xff]
    %v1169 = vld [vmem:[%s2 + $0x20] sm:$0xff]
    %v1170 = vld [vmem:[%s2 + $0x28] sm:$0xff]
    %v1171 = vld [vmem:[%s2 + $0x30] sm:$0xff]
    %v1172 = vld [vmem:[%s2 + $0x38] sm:$0xff]
    %v1173 = vld [vmem:[%s2 + $0x40] sm:$0xff]
    %v1174 = vld [vmem:[%s2 + $0x48] sm:$0xff]
    %v1175 = vld [vmem:[%s2 + $0x50] sm:$0xff]
    %v1176 = vld [vmem:[%s2 + $0x58] sm:$0xff]
    %v1177 = vld [vmem:[%s2 + $0x60] sm:$0xff]
    %v1178 = vld [vmem:[%s2 + $0x68] sm:$0xff]
    %v1179 = vld [vmem:[%s2 + $0x70] sm:$0xff]
    %v1180 = vld [vmem:[%s2 + $0x78] sm:$0xff]
    %v1181 = vld [vmem:[%s2 + $0x80] sm:$0xff]
    %v1182 = vld [vmem:[%s2 + $0x88] sm:$0xff]
    %v1183 = vld [vmem:[%s2 + $0x90] sm:$0xff]
    %v1184 = vld [vmem:[%s2 + $0x98] sm:$0xff]
    %v1185 = vld [vmem:[%s2 + $0xa0] sm:$0xff]
    %v1186 = vld [vmem:[%s2 + $0xa8] sm:$0xff]
    %v1187 = vld [vmem:[%s2 + $0xb0] sm:$0xff]
    %v1188 = vld [vmem:[%s2 + $0xb8] sm:$0xff]
    %v1189 = vld [vmem:[%s2 + $0xc0] sm:$0xff]
    %v1190 = vld [vmem:[%s2 + $0xc8] sm:$0xff]
    %v1191 = vld [vmem:[%s2 + $0xd0] sm:$0xff]
    %v1192 = vld [vmem:[%s2 + $0xd8] sm:$0xff]
    %v1193 = vld [vmem:[%s2 + $0xe0] sm:$0xff]
    %v1194 = vld [vmem:[%s2 + $0xe8] sm:$0xff]
    %v1195 = vld [vmem:[%s2 + $0xf0] sm:$0xff]
    %v1196 = vld [vmem:[%s2 + $0xf8] sm:$0xff]
    %v1197 = vld [vmem:[%s2 + $0x100] sm:$0xff]
    %v1198 = vld [vmem:[%s2 + $0x108] sm:$0xff]
    %v1199 = vld [vmem:[%s2 + $0x110] sm:$0xff]
    %v1200 = vld [vmem:[%s2 + $0x118] sm:$0xff]
    %v1201 = vld [vmem:[%s2 + $0x120] sm:$0xff]
    %v1202 = vld [vmem:[%s2 + $0x128] sm:$0xff]
    %v1203 = vld [vmem:[%s2 + $0x130] sm:$0xff]
    %v1204 = vld [vmem:[%s2 + $0x138] sm:$0xff]
    %v1205 = vld [vmem:[%s2 + $0x140] sm:$0xff]
    %v1206 = vld [vmem:[%s2 + $0x148] sm:$0xff]
    %v1207 = vld [vmem:[%s2 + $0x150] sm:$0xff]
    %v1208 = vld [vmem:[%s2 + $0x158] sm:$0xff]
    %v1209 = vld [vmem:[%s2 + $0x160] sm:$0xff]
    %v1210 = vld [vmem:[%s2 + $0x168] sm:$0xff]
    %v1211 = vld [vmem:[%s2 + $0x170] sm:$0xff]
    %v1212 = vld [vmem:[%s2 + $0x178] sm:$0xff]
    %v1213 = vld [vmem:[%s2 + $0x180] sm:$0xff]
    %v1214 = vld [vmem:[%s2 + $0x188] sm:$0xff]
    %v1215 = vld [vmem:[%s2 + $0x190] sm:$0xff]
    %v1216 = vld [vmem:[%s2 + $0x198] sm:$0xff]
    %v1217 = vld [vmem:[%s2 + $0x1a0] sm:$0xff]
    %v1218 = vld [vmem:[%s2 + $0x1a8] sm:$0xff]
    %v1219 = vld [vmem:[%s2 + $0x1b0] sm:$0xff]
    %v1220 = vld [vmem:[%s2 + $0x1b8] sm:$0xff]
    %v1221 = vld [vmem:[%s2 + $0x1c0] sm:$0xff]
    %v1222 = vld [vmem:[%s2 + $0x1c8] sm:$0xff]
    %v1223 = vld [vmem:[%s2 + $0x1d0] sm:$0xff]
    %v1224 = vld [vmem:[%s2 + $0x1d8] sm:$0xff]
    %v1225 = vld [vmem:[%s2 + $0x1e0] sm:$0xff]
    %v1226 = vld [vmem:[%s2 + $0x1e8] sm:$0xff]
    %v1227 = vld [vmem:[%s2 + $0x1f0] sm:$0xff]
    %v1228 = vld [vmem:[%s2 + $0x1f8] sm:$0xff]
    %v1229 = vld [vmem:[%s2 + $0x200] sm:$0xff]
    %v1230 = vld [vmem:[%s2 + $0x208] sm:$0xff]
    %v1231 = vld [vmem:[%s2 + $0x210] sm:$0xff]
    %v1232 = vld [vmem:[%s2 + $0x218] sm:$0xff]
    %v1233 = vld [vmem:[%s2 + $0x220] sm:$0xff]
    %v1234 = vld [vmem:[%s2 + $0x228] sm:$0xff]
    %v1235 = vld [vmem:[%s2 + $0x230] sm:$0xff]
    %v1236 = vld [vmem:[%s2 + $0x238] sm:$0xff]
    %v1237 = vld [vmem:[%s2 + $0x240] sm:$0xff]
    %v1238 = vld [vmem:[%s2 + $0x248] sm:$0xff]
    %v1239 = vld [vmem:[%s2 + $0x250] sm:$0xff]
    %v1240 = vld [vmem:[%s2 + $0x258] sm:$0xff]
    %v1241 = vld [vmem:[%s2 + $0x260] sm:$0xff]
    %v1242 = vld [vmem:[%s2 + $0x268] sm:$0xff]
    %v1243 = vld [vmem:[%s2 + $0x270] sm:$0xff]
    %v1244 = vld [vmem:[%s2 + $0x278] sm:$0xff]
    %v1245 = vld [vmem:[%s2 + $0x280] sm:$0xff]
    %v1246 = vld [vmem:[%s2 + $0x288] sm:$0xff]
    %v1247 = vld [vmem:[%s2 + $0x290] sm:$0xff]
    %v1248 = vld [vmem:[%s2 + $0x298] sm:$0xff]
    %v1249 = vld [vmem:[%s2 + $0x2a0] sm:$0xff]
    %v1250 = vld [vmem:[%s2 + $0x2a8] sm:$0xff]
    %v1251 = vld [vmem:[%s2 + $0x2b0] sm:$0xff]
    %v1252 = vld [vmem:[%s2 + $0x2b8] sm:$0xff]
    %v1253 = vld [vmem:[%s2 + $0x2c0] sm:$0xff]
    %v1254 = vld [vmem:[%s2 + $0x2c8] sm:$0xff]
    %v1255 = vld [vmem:[%s2 + $0x2d0] sm:$0xff]
    %v1256 = vld [vmem:[%s2 + $0x2d8] sm:$0xff]
    %v1257 = vld [vmem:[%s2 + $0x2e0] sm:$0xff]
    %v1258 = vld [vmem:[%s2 + $0x2e8] sm:$0xff]
    %v1259 = vld [vmem:[%s2 + $0x2f0] sm:$0xff]
    %v1260 = vld [vmem:[%s2 + $0x2f8] sm:$0xff]
    %v1261 = vld [vmem:[%s2 + $0x300] sm:$0xff]
    %v1262 = vld [vmem:[%s2 + $0x308] sm:$0xff]
    %v1263 = vld [vmem:[%s2 + $0x310] sm:$0xff]
    %v1264 = vld [vmem:[%s2 + $0x318] sm:$0xff]
    %v1265 = vld [vmem:[%s2 + $0x320] sm:$0xff]
    %v1266 = vld [vmem:[%s2 + $0x328] sm:$0xff]
    %v1267 = vld [vmem:[%s2 + $0x330] sm:$0xff]
    %v1268 = vld [vmem:[%s2 + $0x338] sm:$0xff]
    %v1269 = vld [vmem:[%s2 + $0x340] sm:$0xff]
    %v1270 = vld [vmem:[%s2 + $0x348] sm:$0xff]
    %v1271 = vld [vmem:[%s2 + $0x350] sm:$0xff]
    %v1272 = vld [vmem:[%s2 + $0x358] sm:$0xff]
    %v1273 = vld [vmem:[%s2 + $0x360] sm:$0xff]
    %v1274 = vld [vmem:[%s2 + $0x368] sm:$0xff]
    %v1275 = vld [vmem:[%s2 + $0x370] sm:$0xff]
    %v1276 = vld [vmem:[%s2 + $0x378] sm:$0xff]
    %v1277 = vld [vmem:[%s2 + $0x380] sm:$0xff]
    %v1278 = vld [vmem:[%s2 + $0x388] sm:$0xff]
    %v1279 = vld [vmem:[%s2 + $0x390] sm:$0xff]
    %v1280 = vld [vmem:[%s2 + $0x398] sm:$0xff]
    %v1281 = vld [vmem:[%s2 + $0x3a0] sm:$0xff]
    %v1282 = vld [vmem:[%s2 + $0x3a8] sm:$0xff]
    %v1283 = vld [vmem:[%s2 + $0x3b0] sm:$0xff]
    %v1284 = vld [vmem:[%s2 + $0x3b8] sm:$0xff]
    %v1285 = vld [vmem:[%s2 + $0x3c0] sm:$0xff]
    %v1286 = vld [vmem:[%s2 + $0x3c8] sm:$0xff]
    %v1287 = vld [vmem:[%s2 + $0x3d0] sm:$0xff]
    %v1288 = vld [vmem:[%s2 + $0x3d8] sm:$0xff]
    %v1289 = vld [vmem:[%s2 + $0x3e0] sm:$0xff]
    %v1290 = vld [vmem:[%s2 + $0x3e8] sm:$0xff]
    %v1291 = vld [vmem:[%s2 + $0x3f0] sm:$0xff]
    %v1292 = vld [vmem:[%s2 + $0x3f8] sm:$0xff]
    %v1294 = vsel %vm70, %v1101, 0
    %1296 = vmatprep.subr.mxu0 0.0
    %1297 = vmatpush1.msra.mxu0 0.0
    %1298 = vmatprep.subr.mxu0 0.0
    %1299 = vmatpush1.msra.mxu0 0.0
    %1300 = vmatprep.subr.mxu0 0.0
    %1301 = vmatpush1.msra.mxu0 0.0
    %1302 = vmatprep.subr.mxu0 0.0
    %1303 = vmatpush1.msra.mxu0 0.0
    %1304 = vmatprep.subr.mxu0 0.0
    %1305 = vmatpush1.msra.mxu0 0.0
    %1306 = vmatprep.subr.mxu0 0.0
    %1307 = vmatpush1.msra.mxu0 0.0
    %1308 = vmatprep.subr.mxu0 0.0
    %1309 = vmatpush1.msra.mxu0 0.0
    %1310 = vmatprep.subr.mxu0 0.0
    %1311 = vmatpush1.msra.mxu0 0.0
    %1312 = vmatprep.subr.mxu0 0.0
    %1313 = vmatpush1.msra.mxu0 0.0
    %1314 = vmatprep.subr.mxu0 0.0
    %1315 = vmatpush1.msra.mxu0 0.0
    %1316 = vmatprep.subr.mxu0 0.0
    %1317 = vmatpush1.msra.mxu0 0.0
    %1318 = vmatprep.subr.mxu0 0.0
    %1319 = vmatpush1.msra.mxu0 0.0
    %1320 = vmatprep.subr.mxu0 0.0
    %1321 = vmatpush1.msra.mxu0 %v1168
    %1322 = vmatprep.subr.mxu0 0.0
    %1323 = vmatpush1.msra.mxu0 %v1167
    %1324 = vmatprep.subr.mxu0 0.0
    %1325 = vmatpush1.msra.mxu0 %v1166
    %1326 = vmatprep.subr.mxu0 0.0
    %1327 = vmatpush1.msra.mxu0 %v1165
    %1328 = vmatprep.subr.mxu0 0.0
    %1329 = vmatpush2.msra.mxu0 0.0
    %1330 = vmatprep.subr.mxu0 0.0
    %1331 = vmatpush2.msra.mxu0 0.0
    %1332 = vmatprep.subr.mxu0 0.0
    %1333 = vmatpush2.msra.mxu0 0.0
    %1334 = vmatprep.subr.mxu0 0.0
    %1335 = vmatpush2.msra.mxu0 0.0
    %1336 = vmatprep.subr.mxu0 0.0
    %1337 = vmatpush2.msra.mxu0 0.0
    %1338 = vmatprep.subr.mxu0 0.0
    %1339 = vmatpush2.msra.mxu0 0.0
    %1340 = vmatprep.subr.mxu0 0.0
    %1341 = vmatpush2.msra.mxu0 0.0
    %1342 = vmatprep.subr.mxu0 0.0
    %1343 = vmatpush2.msra.mxu0 0.0
    %1344 = vmatprep.subr.mxu0 0.0
    %1345 = vmatpush2.msra.mxu0 0.0
    %1346 = vmatprep.subr.mxu0 0.0
    %1347 = vmatpush2.msra.mxu0 0.0
    %1348 = vmatprep.subr.mxu0 0.0
    %1349 = vmatpush2.msra.mxu0 0.0
    %1350 = vmatprep.subr.mxu0 0.0
    %1351 = vmatpush2.msra.mxu0 0.0
    %1352 = vmatprep.subr.mxu0 0.0
    %1353 = vmatpush2.msra.mxu0 0.0
    %1354 = vmatprep.subr.mxu0 0.0
    %1355 = vmatpush2.msra.mxu0 0.0
    %1356 = vmatprep.subr.mxu0 0.0
    %1357 = vmatpush2.msra.mxu0 0.0
    %1358 = vmatprep.subr.mxu0 0.0
    %1359 = vmatpush2.msra.mxu0 0.0
    %1360 = vmatprep.mubr.f32.mxu0 0.0
    %1361 = vmatmul.mubr.f32.gmra.mxu0 %v1294
    %v1362 = vpop.f32.mrf.mxu0
    %v1363 = vadd.f32 0.0, %v1362
    %v1364 = vpop.f32.mrf.mxu0
    %1365 = vdwg.mxu0
    %v1367 = vsel %vm70, %v1102, 0
    %1369 = vmatprep.subr.mxu0 0.0
    %1370 = vmatpush1.msra.mxu0 0.0
    %1371 = vmatprep.subr.mxu0 0.0
    %1372 = vmatpush1.msra.mxu0 0.0
    %1373 = vmatprep.subr.mxu0 0.0
    %1374 = vmatpush1.msra.mxu0 0.0
    %1375 = vmatprep.subr.mxu0 0.0
    %1376 = vmatpush1.msra.mxu0 0.0
    %1377 = vmatprep.subr.mxu0 0.0
    %1378 = vmatpush1.msra.mxu0 0.0
    %1379 = vmatprep.subr.mxu0 0.0
    %1380 = vmatpush1.msra.mxu0 0.0
    %1381 = vmatprep.subr.mxu0 0.0
    %1382 = vmatpush1.msra.mxu0 0.0
    %1383 = vmatprep.subr.mxu0 0.0
    %1384 = vmatpush1.msra.mxu0 0.0
    %1385 = vmatprep.subr.mxu0 0.0
    %1386 = vmatpush1.msra.mxu0 0.0
    %1387 = vmatprep.subr.mxu0 0.0
    %1388 = vmatpush1.msra.mxu0 0.0
    %1389 = vmatprep.subr.mxu0 0.0
    %1390 = vmatpush1.msra.mxu0 0.0
    %1391 = vmatprep.subr.mxu0 0.0
    %1392 = vmatpush1.msra.mxu0 0.0
    %1393 = vmatprep.subr.mxu0 0.0
    %1394 = vmatpush1.msra.mxu0 %v1172
    %1395 = vmatprep.subr.mxu0 0.0
    %1396 = vmatpush1.msra.mxu0 %v1171
    %1397 = vmatprep.subr.mxu0 0.0
    %1398 = vmatpush1.msra.mxu0 %v1170
    %1399 = vmatprep.subr.mxu0 0.0
    %1400 = vmatpush1.msra.mxu0 %v1169
    %1401 = vmatprep.subr.mxu0 0.0
    %1402 = vmatpush2.msra.mxu0 0.0
    %1403 = vmatprep.subr.mxu0 0.0
    %1404 = vmatpush2.msra.mxu0 0.0
    %1405 = vmatprep.subr.mxu0 0.0
    %1406 = vmatpush2.msra.mxu0 0.0
    %1407 = vmatprep.subr.mxu0 0.0
    %1408 = vmatpush2.msra.mxu0 0.0
    %1409 = vmatprep.subr.mxu0 0.0
    %1410 = vmatpush2.msra.mxu0 0.0
    %1411 = vmatprep.subr.mxu0 0.0
    %1412 = vmatpush2.msra.mxu0 0.0
    %1413 = vmatprep.subr.mxu0 0.0
    %1414 = vmatpush2.msra.mxu0 0.0
    %1415 = vmatprep.subr.mxu0 0.0
    %1416 = vmatpush2.msra.mxu0 0.0
    %1417 = vmatprep.subr.mxu0 0.0
    %1418 = vmatpush2.msra.mxu0 0.0
    %1419 = vmatprep.subr.mxu0 0.0
    %1420 = vmatpush2.msra.mxu0 0.0
    %1421 = vmatprep.subr.mxu0 0.0
    %1422 = vmatpush2.msra.mxu0 0.0
    %1423 = vmatprep.subr.mxu0 0.0
    %1424 = vmatpush2.msra.mxu0 0.0
    %1425 = vmatprep.subr.mxu0 0.0
    %1426 = vmatpush2.msra.mxu0 0.0
    %1427 = vmatprep.subr.mxu0 0.0
    %1428 = vmatpush2.msra.mxu0 0.0
    %1429 = vmatprep.subr.mxu0 0.0
    %1430 = vmatpush2.msra.mxu0 0.0
    %1431 = vmatprep.subr.mxu0 0.0
    %1432 = vmatpush2.msra.mxu0 0.0
    %1433 = vmatprep.mubr.f32.mxu0 0.0
    %1434 = vmatmul.mubr.f32.gmra.mxu0 %v1367
    %v1435 = vpop.f32.mrf.mxu0
    %v1436 = vadd.f32 0.0, %v1435
    %v1437 = vpop.f32.mrf.mxu0
    %1438 = vdwg.mxu0
    %v1440 = vsel %vm70, %v1103, 0
    %1442 = vmatprep.subr.mxu0 0.0
    %1443 = vmatpush1.msra.mxu0 0.0
    %1444 = vmatprep.subr.mxu0 0.0
    %1445 = vmatpush1.msra.mxu0 0.0
    %1446 = vmatprep.subr.mxu0 0.0
    %1447 = vmatpush1.msra.mxu0 0.0
    %1448 = vmatprep.subr.mxu0 0.0
    %1449 = vmatpush1.msra.mxu0 0.0
    %1450 = vmatprep.subr.mxu0 0.0
    %1451 = vmatpush1.msra.mxu0 0.0
    %1452 = vmatprep.subr.mxu0 0.0
    %1453 = vmatpush1.msra.mxu0 0.0
    %1454 = vmatprep.subr.mxu0 0.0
    %1455 = vmatpush1.msra.mxu0 0.0
    %1456 = vmatprep.subr.mxu0 0.0
    %1457 = vmatpush1.msra.mxu0 0.0
    %1458 = vmatprep.subr.mxu0 0.0
    %1459 = vmatpush1.msra.mxu0 0.0
    %1460 = vmatprep.subr.mxu0 0.0
    %1461 = vmatpush1.msra.mxu0 0.0
    %1462 = vmatprep.subr.mxu0 0.0
    %1463 = vmatpush1.msra.mxu0 0.0
    %1464 = vmatprep.subr.mxu0 0.0
    %1465 = vmatpush1.msra.mxu0 0.0
    %1466 = vmatprep.subr.mxu0 0.0
    %1467 = vmatpush1.msra.mxu0 %v1176
    %1468 = vmatprep.subr.mxu0 0.0
    %1469 = vmatpush1.msra.mxu0 %v1175
    %1470 = vmatprep.subr.mxu0 0.0
    %1471 = vmatpush1.msra.mxu0 %v1174
    %1472 = vmatprep.subr.mxu0 0.0
    %1473 = vmatpush1.msra.mxu0 %v1173
    %1474 = vmatprep.subr.mxu0 0.0
    %1475 = vmatpush2.msra.mxu0 0.0
    %1476 = vmatprep.subr.mxu0 0.0
    %1477 = vmatpush2.msra.mxu0 0.0
    %1478 = vmatprep.subr.mxu0 0.0
    %1479 = vmatpush2.msra.mxu0 0.0
    %1480 = vmatprep.subr.mxu0 0.0
    %1481 = vmatpush2.msra.mxu0 0.0
    %1482 = vmatprep.subr.mxu0 0.0
    %1483 = vmatpush2.msra.mxu0 0.0
    %1484 = vmatprep.subr.mxu0 0.0
    %1485 = vmatpush2.msra.mxu0 0.0
    %1486 = vmatprep.subr.mxu0 0.0
    %1487 = vmatpush2.msra.mxu0 0.0
    %1488 = vmatprep.subr.mxu0 0.0
    %1489 = vmatpush2.msra.mxu0 0.0
    %1490 = vmatprep.subr.mxu0 0.0
    %1491 = vmatpush2.msra.mxu0 0.0
    %1492 = vmatprep.subr.mxu0 0.0
    %1493 = vmatpush2.msra.mxu0 0.0
    %1494 = vmatprep.subr.mxu0 0.0
    %1495 = vmatpush2.msra.mxu0 0.0
    %1496 = vmatprep.subr.mxu0 0.0
    %1497 = vmatpush2.msra.mxu0 0.0
    %1498 = vmatprep.subr.mxu0 0.0
    %1499 = vmatpush2.msra.mxu0 0.0
    %1500 = vmatprep.subr.mxu0 0.0
    %1501 = vmatpush2.msra.mxu0 0.0
    %1502 = vmatprep.subr.mxu0 0.0
    %1503 = vmatpush2.msra.mxu0 0.0
    %1504 = vmatprep.subr.mxu0 0.0
    %1505 = vmatpush2.msra.mxu0 0.0
    %1506 = vmatprep.mubr.f32.mxu0 0.0
    %1507 = vmatmul.mubr.f32.gmra.mxu0 %v1440
    %v1508 = vpop.f32.mrf.mxu0
    %v1509 = vadd.f32 0.0, %v1508
    %v1510 = vpop.f32.mrf.mxu0
    %1511 = vdwg.mxu0
    %v1513 = vsel %vm70, %v1104, 0
    %1515 = vmatprep.subr.mxu0 0.0
    %1516 = vmatpush1.msra.mxu0 0.0
    %1517 = vmatprep.subr.mxu0 0.0
    %1518 = vmatpush1.msra.mxu0 0.0
    %1519 = vmatprep.subr.mxu0 0.0
    %1520 = vmatpush1.msra.mxu0 0.0
    %1521 = vmatprep.subr.mxu0 0.0
    %1522 = vmatpush1.msra.mxu0 0.0
    %1523 = vmatprep.subr.mxu0 0.0
    %1524 = vmatpush1.msra.mxu0 0.0
    %1525 = vmatprep.subr.mxu0 0.0
    %1526 = vmatpush1.msra.mxu0 0.0
    %1527 = vmatprep.subr.mxu0 0.0
    %1528 = vmatpush1.msra.mxu0 0.0
    %1529 = vmatprep.subr.mxu0 0.0
    %1530 = vmatpush1.msra.mxu0 0.0
    %1531 = vmatprep.subr.mxu0 0.0
    %1532 = vmatpush1.msra.mxu0 0.0
    %1533 = vmatprep.subr.mxu0 0.0
    %1534 = vmatpush1.msra.mxu0 0.0
    %1535 = vmatprep.subr.mxu0 0.0
    %1536 = vmatpush1.msra.mxu0 0.0
    %1537 = vmatprep.subr.mxu0 0.0
    %1538 = vmatpush1.msra.mxu0 0.0
    %1539 = vmatprep.subr.mxu0 0.0
    %1540 = vmatpush1.msra.mxu0 %v1180
    %1541 = vmatprep.subr.mxu0 0.0
    %1542 = vmatpush1.msra.mxu0 %v1179
    %1543 = vmatprep.subr.mxu0 0.0
    %1544 = vmatpush1.msra.mxu0 %v1178
    %1545 = vmatprep.subr.mxu0 0.0
    %1546 = vmatpush1.msra.mxu0 %v1177
    %1547 = vmatprep.subr.mxu0 0.0
    %1548 = vmatpush2.msra.mxu0 0.0
    %1549 = vmatprep.subr.mxu0 0.0
    %1550 = vmatpush2.msra.mxu0 0.0
    %1551 = vmatprep.subr.mxu0 0.0
    %1552 = vmatpush2.msra.mxu0 0.0
    %1553 = vmatprep.subr.mxu0 0.0
    %1554 = vmatpush2.msra.mxu0 0.0
    %1555 = vmatprep.subr.mxu0 0.0
    %1556 = vmatpush2.msra.mxu0 0.0
    %1557 = vmatprep.subr.mxu0 0.0
    %1558 = vmatpush2.msra.mxu0 0.0
    %1559 = vmatprep.subr.mxu0 0.0
    %1560 = vmatpush2.msra.mxu0 0.0
    %1561 = vmatprep.subr.mxu0 0.0
    %1562 = vmatpush2.msra.mxu0 0.0
    %1563 = vmatprep.subr.mxu0 0.0
    %1564 = vmatpush2.msra.mxu0 0.0
    %1565 = vmatprep.subr.mxu0 0.0
    %1566 = vmatpush2.msra.mxu0 0.0
    %1567 = vmatprep.subr.mxu0 0.0
    %1568 = vmatpush2.msra.mxu0 0.0
    %1569 = vmatprep.subr.mxu0 0.0
    %1570 = vmatpush2.msra.mxu0 0.0
    %1571 = vmatprep.subr.mxu0 0.0
    %1572 = vmatpush2.msra.mxu0 0.0
    %1573 = vmatprep.subr.mxu0 0.0
    %1574 = vmatpush2.msra.mxu0 0.0
    %1575 = vmatprep.subr.mxu0 0.0
    %1576 = vmatpush2.msra.mxu0 0.0
    %1577 = vmatprep.subr.mxu0 0.0
    %1578 = vmatpush2.msra.mxu0 0.0
    %1579 = vmatprep.mubr.f32.mxu0 0.0
    %1580 = vmatmul.mubr.f32.gmra.mxu0 %v1513
    %v1581 = vpop.f32.mrf.mxu0
    %v1582 = vadd.f32 0.0, %v1581
    %v1583 = vpop.f32.mrf.mxu0
    %1584 = vdwg.mxu0
    %v1586 = vsel %vm70, %v1105, 0
    %1588 = vmatprep.subr.mxu0 0.0
    %1589 = vmatpush1.msra.mxu0 0.0
    %1590 = vmatprep.subr.mxu0 0.0
    %1591 = vmatpush1.msra.mxu0 0.0
    %1592 = vmatprep.subr.mxu0 0.0
    %1593 = vmatpush1.msra.mxu0 0.0
    %1594 = vmatprep.subr.mxu0 0.0
    %1595 = vmatpush1.msra.mxu0 0.0
    %1596 = vmatprep.subr.mxu0 0.0
    %1597 = vmatpush1.msra.mxu0 0.0
    %1598 = vmatprep.subr.mxu0 0.0
    %1599 = vmatpush1.msra.mxu0 0.0
    %1600 = vmatprep.subr.mxu0 0.0
    %1601 = vmatpush1.msra.mxu0 0.0
    %1602 = vmatprep.subr.mxu0 0.0
    %1603 = vmatpush1.msra.mxu0 0.0
    %1604 = vmatprep.subr.mxu0 0.0
    %1605 = vmatpush1.msra.mxu0 0.0
    %1606 = vmatprep.subr.mxu0 0.0
    %1607 = vmatpush1.msra.mxu0 0.0
    %1608 = vmatprep.subr.mxu0 0.0
    %1609 = vmatpush1.msra.mxu0 0.0
    %1610 = vmatprep.subr.mxu0 0.0
    %1611 = vmatpush1.msra.mxu0 0.0
    %1612 = vmatprep.subr.mxu0 0.0
    %1613 = vmatpush1.msra.mxu0 %v1184
    %1614 = vmatprep.subr.mxu0 0.0
    %1615 = vmatpush1.msra.mxu0 %v1183
    %1616 = vmatprep.subr.mxu0 0.0
    %1617 = vmatpush1.msra.mxu0 %v1182
    %1618 = vmatprep.subr.mxu0 0.0
    %1619 = vmatpush1.msra.mxu0 %v1181
    %1620 = vmatprep.subr.mxu0 0.0
    %1621 = vmatpush2.msra.mxu0 0.0
    %1622 = vmatprep.subr.mxu0 0.0
    %1623 = vmatpush2.msra.mxu0 0.0
    %1624 = vmatprep.subr.mxu0 0.0
    %1625 = vmatpush2.msra.mxu0 0.0
    %1626 = vmatprep.subr.mxu0 0.0
    %1627 = vmatpush2.msra.mxu0 0.0
    %1628 = vmatprep.subr.mxu0 0.0
    %1629 = vmatpush2.msra.mxu0 0.0
    %1630 = vmatprep.subr.mxu0 0.0
    %1631 = vmatpush2.msra.mxu0 0.0
    %1632 = vmatprep.subr.mxu0 0.0
    %1633 = vmatpush2.msra.mxu0 0.0
    %1634 = vmatprep.subr.mxu0 0.0
    %1635 = vmatpush2.msra.mxu0 0.0
    %1636 = vmatprep.subr.mxu0 0.0
    %1637 = vmatpush2.msra.mxu0 0.0
    %1638 = vmatprep.subr.mxu0 0.0
    %1639 = vmatpush2.msra.mxu0 0.0
    %1640 = vmatprep.subr.mxu0 0.0
    %1641 = vmatpush2.msra.mxu0 0.0
    %1642 = vmatprep.subr.mxu0 0.0
    %1643 = vmatpush2.msra.mxu0 0.0
    %1644 = vmatprep.subr.mxu0 0.0
    %1645 = vmatpush2.msra.mxu0 0.0
    %1646 = vmatprep.subr.mxu0 0.0
    %1647 = vmatpush2.msra.mxu0 0.0
    %1648 = vmatprep.subr.mxu0 0.0
    %1649 = vmatpush2.msra.mxu0 0.0
    %1650 = vmatprep.subr.mxu0 0.0
    %1651 = vmatpush2.msra.mxu0 0.0
    %1652 = vmatprep.mubr.f32.mxu0 0.0
    %1653 = vmatmul.mubr.f32.gmra.mxu0 %v1586
    %v1654 = vpop.f32.mrf.mxu0
    %v1655 = vadd.f32 0.0, %v1654
    %v1656 = vpop.f32.mrf.mxu0
    %1657 = vdwg.mxu0
    %v1659 = vsel %vm70, %v1106, 0
    %1661 = vmatprep.subr.mxu0 0.0
    %1662 = vmatpush1.msra.mxu0 0.0
    %1663 = vmatprep.subr.mxu0 0.0
    %1664 = vmatpush1.msra.mxu0 0.0
    %1665 = vmatprep.subr.mxu0 0.0
    %1666 = vmatpush1.msra.mxu0 0.0
    %1667 = vmatprep.subr.mxu0 0.0
    %1668 = vmatpush1.msra.mxu0 0.0
    %1669 = vmatprep.subr.mxu0 0.0
    %1670 = vmatpush1.msra.mxu0 0.0
    %1671 = vmatprep.subr.mxu0 0.0
    %1672 = vmatpush1.msra.mxu0 0.0
    %1673 = vmatprep.subr.mxu0 0.0
    %1674 = vmatpush1.msra.mxu0 0.0
    %1675 = vmatprep.subr.mxu0 0.0
    %1676 = vmatpush1.msra.mxu0 0.0
    %1677 = vmatprep.subr.mxu0 0.0
    %1678 = vmatpush1.msra.mxu0 0.0
    %1679 = vmatprep.subr.mxu0 0.0
    %1680 = vmatpush1.msra.mxu0 0.0
    %1681 = vmatprep.subr.mxu0 0.0
    %1682 = vmatpush1.msra.mxu0 0.0
    %1683 = vmatprep.subr.mxu0 0.0
    %1684 = vmatpush1.msra.mxu0 0.0
    %1685 = vmatprep.subr.mxu0 0.0
    %1686 = vmatpush1.msra.mxu0 %v1188
    %1687 = vmatprep.subr.mxu0 0.0
    %1688 = vmatpush1.msra.mxu0 %v1187
    %1689 = vmatprep.subr.mxu0 0.0
    %1690 = vmatpush1.msra.mxu0 %v1186
    %1691 = vmatprep.subr.mxu0 0.0
    %1692 = vmatpush1.msra.mxu0 %v1185
    %1693 = vmatprep.subr.mxu0 0.0
    %1694 = vmatpush2.msra.mxu0 0.0
    %1695 = vmatprep.subr.mxu0 0.0
    %1696 = vmatpush2.msra.mxu0 0.0
    %1697 = vmatprep.subr.mxu0 0.0
    %1698 = vmatpush2.msra.mxu0 0.0
    %1699 = vmatprep.subr.mxu0 0.0
    %1700 = vmatpush2.msra.mxu0 0.0
    %1701 = vmatprep.subr.mxu0 0.0
    %1702 = vmatpush2.msra.mxu0 0.0
    %1703 = vmatprep.subr.mxu0 0.0
    %1704 = vmatpush2.msra.mxu0 0.0
    %1705 = vmatprep.subr.mxu0 0.0
    %1706 = vmatpush2.msra.mxu0 0.0
    %1707 = vmatprep.subr.mxu0 0.0
    %1708 = vmatpush2.msra.mxu0 0.0
    %1709 = vmatprep.subr.mxu0 0.0
    %1710 = vmatpush2.msra.mxu0 0.0
    %1711 = vmatprep.subr.mxu0 0.0
    %1712 = vmatpush2.msra.mxu0 0.0
    %1713 = vmatprep.subr.mxu0 0.0
    %1714 = vmatpush2.msra.mxu0 0.0
    %1715 = vmatprep.subr.mxu0 0.0
    %1716 = vmatpush2.msra.mxu0 0.0
    %1717 = vmatprep.subr.mxu0 0.0
    %1718 = vmatpush2.msra.mxu0 0.0
    %1719 = vmatprep.subr.mxu0 0.0
    %1720 = vmatpush2.msra.mxu0 0.0
    %1721 = vmatprep.subr.mxu0 0.0
    %1722 = vmatpush2.msra.mxu0 0.0
    %1723 = vmatprep.subr.mxu0 0.0
    %1724 = vmatpush2.msra.mxu0 0.0
    %1725 = vmatprep.mubr.f32.mxu0 0.0
    %1726 = vmatmul.mubr.f32.gmra.mxu0 %v1659
    %v1727 = vpop.f32.mrf.mxu0
    %v1728 = vadd.f32 0.0, %v1727
    %v1729 = vpop.f32.mrf.mxu0
    %1730 = vdwg.mxu0
    %v1732 = vsel %vm70, %v1107, 0
    %1734 = vmatprep.subr.mxu0 0.0
    %1735 = vmatpush1.msra.mxu0 0.0
    %1736 = vmatprep.subr.mxu0 0.0
    %1737 = vmatpush1.msra.mxu0 0.0
    %1738 = vmatprep.subr.mxu0 0.0
    %1739 = vmatpush1.msra.mxu0 0.0
    %1740 = vmatprep.subr.mxu0 0.0
    %1741 = vmatpush1.msra.mxu0 0.0
    %1742 = vmatprep.subr.mxu0 0.0
    %1743 = vmatpush1.msra.mxu0 0.0
    %1744 = vmatprep.subr.mxu0 0.0
    %1745 = vmatpush1.msra.mxu0 0.0
    %1746 = vmatprep.subr.mxu0 0.0
    %1747 = vmatpush1.msra.mxu0 0.0
    %1748 = vmatprep.subr.mxu0 0.0
    %1749 = vmatpush1.msra.mxu0 0.0
    %1750 = vmatprep.subr.mxu0 0.0
    %1751 = vmatpush1.msra.mxu0 0.0
    %1752 = vmatprep.subr.mxu0 0.0
    %1753 = vmatpush1.msra.mxu0 0.0
    %1754 = vmatprep.subr.mxu0 0.0
    %1755 = vmatpush1.msra.mxu0 0.0
    %1756 = vmatprep.subr.mxu0 0.0
    %1757 = vmatpush1.msra.mxu0 0.0
    %1758 = vmatprep.subr.mxu0 0.0
    %1759 = vmatpush1.msra.mxu0 %v1192
    %1760 = vmatprep.subr.mxu0 0.0
    %1761 = vmatpush1.msra.mxu0 %v1191
    %1762 = vmatprep.subr.mxu0 0.0
    %1763 = vmatpush1.msra.mxu0 %v1190
    %1764 = vmatprep.subr.mxu0 0.0
    %1765 = vmatpush1.msra.mxu0 %v1189
    %1766 = vmatprep.subr.mxu0 0.0
    %1767 = vmatpush2.msra.mxu0 0.0
    %1768 = vmatprep.subr.mxu0 0.0
    %1769 = vmatpush2.msra.mxu0 0.0
    %1770 = vmatprep.subr.mxu0 0.0
    %1771 = vmatpush2.msra.mxu0 0.0
    %1772 = vmatprep.subr.mxu0 0.0
    %1773 = vmatpush2.msra.mxu0 0.0
    %1774 = vmatprep.subr.mxu0 0.0
    %1775 = vmatpush2.msra.mxu0 0.0
    %1776 = vmatprep.subr.mxu0 0.0
    %1777 = vmatpush2.msra.mxu0 0.0
    %1778 = vmatprep.subr.mxu0 0.0
    %1779 = vmatpush2.msra.mxu0 0.0
    %1780 = vmatprep.subr.mxu0 0.0
    %1781 = vmatpush2.msra.mxu0 0.0
    %1782 = vmatprep.subr.mxu0 0.0
    %1783 = vmatpush2.msra.mxu0 0.0
    %1784 = vmatprep.subr.mxu0 0.0
    %1785 = vmatpush2.msra.mxu0 0.0
    %1786 = vmatprep.subr.mxu0 0.0
    %1787 = vmatpush2.msra.mxu0 0.0
    %1788 = vmatprep.subr.mxu0 0.0
    %1789 = vmatpush2.msra.mxu0 0.0
    %1790 = vmatprep.subr.mxu0 0.0
    %1791 = vmatpush2.msra.mxu0 0.0
    %1792 = vmatprep.subr.mxu0 0.0
    %1793 = vmatpush2.msra.mxu0 0.0
    %1794 = vmatprep.subr.mxu0 0.0
    %1795 = vmatpush2.msra.mxu0 0.0
    %1796 = vmatprep.subr.mxu0 0.0
    %1797 = vmatpush2.msra.mxu0 0.0
    %1798 = vmatprep.mubr.f32.mxu0 0.0
    %1799 = vmatmul.mubr.f32.gmra.mxu0 %v1732
    %v1800 = vpop.f32.mrf.mxu0
    %v1801 = vadd.f32 0.0, %v1800
    %v1802 = vpop.f32.mrf.mxu0
    %1803 = vdwg.mxu0
    %v1805 = vsel %vm70, %v1108, 0
    %1807 = vmatprep.subr.mxu0 0.0
    %1808 = vmatpush1.msra.mxu0 0.0
    %1809 = vmatprep.subr.mxu0 0.0
    %1810 = vmatpush1.msra.mxu0 0.0
    %1811 = vmatprep.subr.mxu0 0.0
    %1812 = vmatpush1.msra.mxu0 0.0
    %1813 = vmatprep.subr.mxu0 0.0
    %1814 = vmatpush1.msra.mxu0 0.0
    %1815 = vmatprep.subr.mxu0 0.0
    %1816 = vmatpush1.msra.mxu0 0.0
    %1817 = vmatprep.subr.mxu0 0.0
    %1818 = vmatpush1.msra.mxu0 0.0
    %1819 = vmatprep.subr.mxu0 0.0
    %1820 = vmatpush1.msra.mxu0 0.0
    %1821 = vmatprep.subr.mxu0 0.0
    %1822 = vmatpush1.msra.mxu0 0.0
    %1823 = vmatprep.subr.mxu0 0.0
    %1824 = vmatpush1.msra.mxu0 0.0
    %1825 = vmatprep.subr.mxu0 0.0
    %1826 = vmatpush1.msra.mxu0 0.0
    %1827 = vmatprep.subr.mxu0 0.0
    %1828 = vmatpush1.msra.mxu0 0.0
    %1829 = vmatprep.subr.mxu0 0.0
    %1830 = vmatpush1.msra.mxu0 0.0
    %1831 = vmatprep.subr.mxu0 0.0
    %1832 = vmatpush1.msra.mxu0 %v1196
    %1833 = vmatprep.subr.mxu0 0.0
    %1834 = vmatpush1.msra.mxu0 %v1195
    %1835 = vmatprep.subr.mxu0 0.0
    %1836 = vmatpush1.msra.mxu0 %v1194
    %1837 = vmatprep.subr.mxu0 0.0
    %1838 = vmatpush1.msra.mxu0 %v1193
    %1839 = vmatprep.subr.mxu0 0.0
    %1840 = vmatpush2.msra.mxu0 0.0
    %1841 = vmatprep.subr.mxu0 0.0
    %1842 = vmatpush2.msra.mxu0 0.0
    %1843 = vmatprep.subr.mxu0 0.0
    %1844 = vmatpush2.msra.mxu0 0.0
    %1845 = vmatprep.subr.mxu0 0.0
    %1846 = vmatpush2.msra.mxu0 0.0
    %1847 = vmatprep.subr.mxu0 0.0
    %1848 = vmatpush2.msra.mxu0 0.0
    %1849 = vmatprep.subr.mxu0 0.0
    %1850 = vmatpush2.msra.mxu0 0.0
    %1851 = vmatprep.subr.mxu0 0.0
    %1852 = vmatpush2.msra.mxu0 0.0
    %1853 = vmatprep.subr.mxu0 0.0
    %1854 = vmatpush2.msra.mxu0 0.0
    %1855 = vmatprep.subr.mxu0 0.0
    %1856 = vmatpush2.msra.mxu0 0.0
    %1857 = vmatprep.subr.mxu0 0.0
    %1858 = vmatpush2.msra.mxu0 0.0
    %1859 = vmatprep.subr.mxu0 0.0
    %1860 = vmatpush2.msra.mxu0 0.0
    %1861 = vmatprep.subr.mxu0 0.0
    %1862 = vmatpush2.msra.mxu0 0.0
    %1863 = vmatprep.subr.mxu0 0.0
    %1864 = vmatpush2.msra.mxu0 0.0
    %1865 = vmatprep.subr.mxu0 0.0
    %1866 = vmatpush2.msra.mxu0 0.0
    %1867 = vmatprep.subr.mxu0 0.0
    %1868 = vmatpush2.msra.mxu0 0.0
    %1869 = vmatprep.subr.mxu0 0.0
    %1870 = vmatpush2.msra.mxu0 0.0
    %1871 = vmatprep.mubr.f32.mxu0 0.0
    %1872 = vmatmul.mubr.f32.gmra.mxu0 %v1805
    %v1873 = vpop.f32.mrf.mxu0
    %v1874 = vadd.f32 0.0, %v1873
    %v1875 = vpop.f32.mrf.mxu0
    %1876 = vdwg.mxu0
    %v1878 = vsel %vm70, %v1109, 0
    %1880 = vmatprep.subr.mxu0 0.0
    %1881 = vmatpush1.msra.mxu0 0.0
    %1882 = vmatprep.subr.mxu0 0.0
    %1883 = vmatpush1.msra.mxu0 0.0
    %1884 = vmatprep.subr.mxu0 0.0
    %1885 = vmatpush1.msra.mxu0 0.0
    %1886 = vmatprep.subr.mxu0 0.0
    %1887 = vmatpush1.msra.mxu0 0.0
    %1888 = vmatprep.subr.mxu0 0.0
    %1889 = vmatpush1.msra.mxu0 0.0
    %1890 = vmatprep.subr.mxu0 0.0
    %1891 = vmatpush1.msra.mxu0 0.0
    %1892 = vmatprep.subr.mxu0 0.0
    %1893 = vmatpush1.msra.mxu0 0.0
    %1894 = vmatprep.subr.mxu0 0.0
    %1895 = vmatpush1.msra.mxu0 0.0
    %1896 = vmatprep.subr.mxu0 0.0
    %1897 = vmatpush1.msra.mxu0 0.0
    %1898 = vmatprep.subr.mxu0 0.0
    %1899 = vmatpush1.msra.mxu0 0.0
    %1900 = vmatprep.subr.mxu0 0.0
    %1901 = vmatpush1.msra.mxu0 0.0
    %1902 = vmatprep.subr.mxu0 0.0
    %1903 = vmatpush1.msra.mxu0 0.0
    %1904 = vmatprep.subr.mxu0 0.0
    %1905 = vmatpush1.msra.mxu0 %v1200
    %1906 = vmatprep.subr.mxu0 0.0
    %1907 = vmatpush1.msra.mxu0 %v1199
    %1908 = vmatprep.subr.mxu0 0.0
    %1909 = vmatpush1.msra.mxu0 %v1198
    %1910 = vmatprep.subr.mxu0 0.0
    %1911 = vmatpush1.msra.mxu0 %v1197
    %1912 = vmatprep.subr.mxu0 0.0
    %1913 = vmatpush2.msra.mxu0 0.0
    %1914 = vmatprep.subr.mxu0 0.0
    %1915 = vmatpush2.msra.mxu0 0.0
    %1916 = vmatprep.subr.mxu0 0.0
    %1917 = vmatpush2.msra.mxu0 0.0
    %1918 = vmatprep.subr.mxu0 0.0
    %1919 = vmatpush2.msra.mxu0 0.0
    %1920 = vmatprep.subr.mxu0 0.0
    %1921 = vmatpush2.msra.mxu0 0.0
    %1922 = vmatprep.subr.mxu0 0.0
    %1923 = vmatpush2.msra.mxu0 0.0
    %1924 = vmatprep.subr.mxu0 0.0
    %1925 = vmatpush2.msra.mxu0 0.0
    %1926 = vmatprep.subr.mxu0 0.0
    %1927 = vmatpush2.msra.mxu0 0.0
    %1928 = vmatprep.subr.mxu0 0.0
    %1929 = vmatpush2.msra.mxu0 0.0
    %1930 = vmatprep.subr.mxu0 0.0
    %1931 = vmatpush2.msra.mxu0 0.0
    %1932 = vmatprep.subr.mxu0 0.0
    %1933 = vmatpush2.msra.mxu0 0.0
    %1934 = vmatprep.subr.mxu0 0.0
    %1935 = vmatpush2.msra.mxu0 0.0
    %1936 = vmatprep.subr.mxu0 0.0
    %1937 = vmatpush2.msra.mxu0 0.0
    %1938 = vmatprep.subr.mxu0 0.0
    %1939 = vmatpush2.msra.mxu0 0.0
    %1940 = vmatprep.subr.mxu0 0.0
    %1941 = vmatpush2.msra.mxu0 0.0
    %1942 = vmatprep.subr.mxu0 0.0
    %1943 = vmatpush2.msra.mxu0 0.0
    %1944 = vmatprep.mubr.f32.mxu0 0.0
    %1945 = vmatmul.mubr.f32.gmra.mxu0 %v1878
    %v1946 = vpop.f32.mrf.mxu0
    %v1947 = vadd.f32 0.0, %v1946
    %v1948 = vpop.f32.mrf.mxu0
    %1949 = vdwg.mxu0
    %v1951 = vsel %vm70, %v1110, 0
    %1953 = vmatprep.subr.mxu0 0.0
    %1954 = vmatpush1.msra.mxu0 0.0
    %1955 = vmatprep.subr.mxu0 0.0
    %1956 = vmatpush1.msra.mxu0 0.0
    %1957 = vmatprep.subr.mxu0 0.0
    %1958 = vmatpush1.msra.mxu0 0.0
    %1959 = vmatprep.subr.mxu0 0.0
    %1960 = vmatpush1.msra.mxu0 0.0
    %1961 = vmatprep.subr.mxu0 0.0
    %1962 = vmatpush1.msra.mxu0 0.0
    %1963 = vmatprep.subr.mxu0 0.0
    %1964 = vmatpush1.msra.mxu0 0.0
    %1965 = vmatprep.subr.mxu0 0.0
    %1966 = vmatpush1.msra.mxu0 0.0
    %1967 = vmatprep.subr.mxu0 0.0
    %1968 = vmatpush1.msra.mxu0 0.0
    %1969 = vmatprep.subr.mxu0 0.0
    %1970 = vmatpush1.msra.mxu0 0.0
    %1971 = vmatprep.subr.mxu0 0.0
    %1972 = vmatpush1.msra.mxu0 0.0
    %1973 = vmatprep.subr.mxu0 0.0
    %1974 = vmatpush1.msra.mxu0 0.0
    %1975 = vmatprep.subr.mxu0 0.0
    %1976 = vmatpush1.msra.mxu0 0.0
    %1977 = vmatprep.subr.mxu0 0.0
    %1978 = vmatpush1.msra.mxu0 %v1204
    %1979 = vmatprep.subr.mxu0 0.0
    %1980 = vmatpush1.msra.mxu0 %v1203
    %1981 = vmatprep.subr.mxu0 0.0
    %1982 = vmatpush1.msra.mxu0 %v1202
    %1983 = vmatprep.subr.mxu0 0.0
    %1984 = vmatpush1.msra.mxu0 %v1201
    %1985 = vmatprep.subr.mxu0 0.0
    %1986 = vmatpush2.msra.mxu0 0.0
    %1987 = vmatprep.subr.mxu0 0.0
    %1988 = vmatpush2.msra.mxu0 0.0
    %1989 = vmatprep.subr.mxu0 0.0
    %1990 = vmatpush2.msra.mxu0 0.0
    %1991 = vmatprep.subr.mxu0 0.0
    %1992 = vmatpush2.msra.mxu0 0.0
    %1993 = vmatprep.subr.mxu0 0.0
    %1994 = vmatpush2.msra.mxu0 0.0
    %1995 = vmatprep.subr.mxu0 0.0
    %1996 = vmatpush2.msra.mxu0 0.0
    %1997 = vmatprep.subr.mxu0 0.0
    %1998 = vmatpush2.msra.mxu0 0.0
    %1999 = vmatprep.subr.mxu0 0.0
    %2000 = vmatpush2.msra.mxu0 0.0
    %2001 = vmatprep.subr.mxu0 0.0
    %2002 = vmatpush2.msra.mxu0 0.0
    %2003 = vmatprep.subr.mxu0 0.0
    %2004 = vmatpush2.msra.mxu0 0.0
    %2005 = vmatprep.subr.mxu0 0.0
    %2006 = vmatpush2.msra.mxu0 0.0
    %2007 = vmatprep.subr.mxu0 0.0
    %2008 = vmatpush2.msra.mxu0 0.0
    %2009 = vmatprep.subr.mxu0 0.0
    %2010 = vmatpush2.msra.mxu0 0.0
    %2011 = vmatprep.subr.mxu0 0.0
    %2012 = vmatpush2.msra.mxu0 0.0
    %2013 = vmatprep.subr.mxu0 0.0
    %2014 = vmatpush2.msra.mxu0 0.0
    %2015 = vmatprep.subr.mxu0 0.0
    %2016 = vmatpush2.msra.mxu0 0.0
    %2017 = vmatprep.mubr.f32.mxu0 0.0
    %2018 = vmatmul.mubr.f32.gmra.mxu0 %v1951
    %v2019 = vpop.f32.mrf.mxu0
    %v2020 = vadd.f32 0.0, %v2019
    %v2021 = vpop.f32.mrf.mxu0
    %2022 = vdwg.mxu0
    %v2024 = vsel %vm70, %v1111, 0
    %2026 = vmatprep.subr.mxu0 0.0
    %2027 = vmatpush1.msra.mxu0 0.0
    %2028 = vmatprep.subr.mxu0 0.0
    %2029 = vmatpush1.msra.mxu0 0.0
    %2030 = vmatprep.subr.mxu0 0.0
    %2031 = vmatpush1.msra.mxu0 0.0
    %2032 = vmatprep.subr.mxu0 0.0
    %2033 = vmatpush1.msra.mxu0 0.0
    %2034 = vmatprep.subr.mxu0 0.0
    %2035 = vmatpush1.msra.mxu0 0.0
    %2036 = vmatprep.subr.mxu0 0.0
    %2037 = vmatpush1.msra.mxu0 0.0
    %2038 = vmatprep.subr.mxu0 0.0
    %2039 = vmatpush1.msra.mxu0 0.0
    %2040 = vmatprep.subr.mxu0 0.0
    %2041 = vmatpush1.msra.mxu0 0.0
    %2042 = vmatprep.subr.mxu0 0.0
    %2043 = vmatpush1.msra.mxu0 0.0
    %2044 = vmatprep.subr.mxu0 0.0
    %2045 = vmatpush1.msra.mxu0 0.0
    %2046 = vmatprep.subr.mxu0 0.0
    %2047 = vmatpush1.msra.mxu0 0.0
    %2048 = vmatprep.subr.mxu0 0.0
    %2049 = vmatpush1.msra.mxu0 0.0
    %2050 = vmatprep.subr.mxu0 0.0
    %2051 = vmatpush1.msra.mxu0 %v1208
    %2052 = vmatprep.subr.mxu0 0.0
    %2053 = vmatpush1.msra.mxu0 %v1207
    %2054 = vmatprep.subr.mxu0 0.0
    %2055 = vmatpush1.msra.mxu0 %v1206
    %2056 = vmatprep.subr.mxu0 0.0
    %2057 = vmatpush1.msra.mxu0 %v1205
    %2058 = vmatprep.subr.mxu0 0.0
    %2059 = vmatpush2.msra.mxu0 0.0
    %2060 = vmatprep.subr.mxu0 0.0
    %2061 = vmatpush2.msra.mxu0 0.0
    %2062 = vmatprep.subr.mxu0 0.0
    %2063 = vmatpush2.msra.mxu0 0.0
    %2064 = vmatprep.subr.mxu0 0.0
    %2065 = vmatpush2.msra.mxu0 0.0
    %2066 = vmatprep.subr.mxu0 0.0
    %2067 = vmatpush2.msra.mxu0 0.0
    %2068 = vmatprep.subr.mxu0 0.0
    %2069 = vmatpush2.msra.mxu0 0.0
    %2070 = vmatprep.subr.mxu0 0.0
    %2071 = vmatpush2.msra.mxu0 0.0
    %2072 = vmatprep.subr.mxu0 0.0
    %2073 = vmatpush2.msra.mxu0 0.0
    %2074 = vmatprep.subr.mxu0 0.0
    %2075 = vmatpush2.msra.mxu0 0.0
    %2076 = vmatprep.subr.mxu0 0.0
    %2077 = vmatpush2.msra.mxu0 0.0
    %2078 = vmatprep.subr.mxu0 0.0
    %2079 = vmatpush2.msra.mxu0 0.0
    %2080 = vmatprep.subr.mxu0 0.0
    %2081 = vmatpush2.msra.mxu0 0.0
    %2082 = vmatprep.subr.mxu0 0.0
    %2083 = vmatpush2.msra.mxu0 0.0
    %2084 = vmatprep.subr.mxu0 0.0
    %2085 = vmatpush2.msra.mxu0 0.0
    %2086 = vmatprep.subr.mxu0 0.0
    %2087 = vmatpush2.msra.mxu0 0.0
    %2088 = vmatprep.subr.mxu0 0.0
    %2089 = vmatpush2.msra.mxu0 0.0
    %2090 = vmatprep.mubr.f32.mxu0 0.0
    %2091 = vmatmul.mubr.f32.gmra.mxu0 %v2024
    %v2092 = vpop.f32.mrf.mxu0
    %v2093 = vadd.f32 0.0, %v2092
    %v2094 = vpop.f32.mrf.mxu0
    %2095 = vdwg.mxu0
    %v2097 = vsel %vm70, %v1112, 0
    %2099 = vmatprep.subr.mxu0 0.0
    %2100 = vmatpush1.msra.mxu0 0.0
    %2101 = vmatprep.subr.mxu0 0.0
    %2102 = vmatpush1.msra.mxu0 0.0
    %2103 = vmatprep.subr.mxu0 0.0
    %2104 = vmatpush1.msra.mxu0 0.0
    %2105 = vmatprep.subr.mxu0 0.0
    %2106 = vmatpush1.msra.mxu0 0.0
    %2107 = vmatprep.subr.mxu0 0.0
    %2108 = vmatpush1.msra.mxu0 0.0
    %2109 = vmatprep.subr.mxu0 0.0
    %2110 = vmatpush1.msra.mxu0 0.0
    %2111 = vmatprep.subr.mxu0 0.0
    %2112 = vmatpush1.msra.mxu0 0.0
    %2113 = vmatprep.subr.mxu0 0.0
    %2114 = vmatpush1.msra.mxu0 0.0
    %2115 = vmatprep.subr.mxu0 0.0
    %2116 = vmatpush1.msra.mxu0 0.0
    %2117 = vmatprep.subr.mxu0 0.0
    %2118 = vmatpush1.msra.mxu0 0.0
    %2119 = vmatprep.subr.mxu0 0.0
    %2120 = vmatpush1.msra.mxu0 0.0
    %2121 = vmatprep.subr.mxu0 0.0
    %2122 = vmatpush1.msra.mxu0 0.0
    %2123 = vmatprep.subr.mxu0 0.0
    %2124 = vmatpush1.msra.mxu0 %v1212
    %2125 = vmatprep.subr.mxu0 0.0
    %2126 = vmatpush1.msra.mxu0 %v1211
    %2127 = vmatprep.subr.mxu0 0.0
    %2128 = vmatpush1.msra.mxu0 %v1210
    %2129 = vmatprep.subr.mxu0 0.0
    %2130 = vmatpush1.msra.mxu0 %v1209
    %2131 = vmatprep.subr.mxu0 0.0
    %2132 = vmatpush2.msra.mxu0 0.0
    %2133 = vmatprep.subr.mxu0 0.0
    %2134 = vmatpush2.msra.mxu0 0.0
    %2135 = vmatprep.subr.mxu0 0.0
    %2136 = vmatpush2.msra.mxu0 0.0
    %2137 = vmatprep.subr.mxu0 0.0
    %2138 = vmatpush2.msra.mxu0 0.0
    %2139 = vmatprep.subr.mxu0 0.0
    %2140 = vmatpush2.msra.mxu0 0.0
    %2141 = vmatprep.subr.mxu0 0.0
    %2142 = vmatpush2.msra.mxu0 0.0
    %2143 = vmatprep.subr.mxu0 0.0
    %2144 = vmatpush2.msra.mxu0 0.0
    %2145 = vmatprep.subr.mxu0 0.0
    %2146 = vmatpush2.msra.mxu0 0.0
    %2147 = vmatprep.subr.mxu0 0.0
    %2148 = vmatpush2.msra.mxu0 0.0
    %2149 = vmatprep.subr.mxu0 0.0
    %2150 = vmatpush2.msra.mxu0 0.0
    %2151 = vmatprep.subr.mxu0 0.0
    %2152 = vmatpush2.msra.mxu0 0.0
    %2153 = vmatprep.subr.mxu0 0.0
    %2154 = vmatpush2.msra.mxu0 0.0
    %2155 = vmatprep.subr.mxu0 0.0
    %2156 = vmatpush2.msra.mxu0 0.0
    %2157 = vmatprep.subr.mxu0 0.0
    %2158 = vmatpush2.msra.mxu0 0.0
    %2159 = vmatprep.subr.mxu0 0.0
    %2160 = vmatpush2.msra.mxu0 0.0
    %2161 = vmatprep.subr.mxu0 0.0
    %2162 = vmatpush2.msra.mxu0 0.0
    %2163 = vmatprep.mubr.f32.mxu0 0.0
    %2164 = vmatmul.mubr.f32.gmra.mxu0 %v2097
    %v2165 = vpop.f32.mrf.mxu0
    %v2166 = vadd.f32 0.0, %v2165
    %v2167 = vpop.f32.mrf.mxu0
    %2168 = vdwg.mxu0
    %v2170 = vsel %vm70, %v1113, 0
    %2172 = vmatprep.subr.mxu0 0.0
    %2173 = vmatpush1.msra.mxu0 0.0
    %2174 = vmatprep.subr.mxu0 0.0
    %2175 = vmatpush1.msra.mxu0 0.0
    %2176 = vmatprep.subr.mxu0 0.0
    %2177 = vmatpush1.msra.mxu0 0.0
    %2178 = vmatprep.subr.mxu0 0.0
    %2179 = vmatpush1.msra.mxu0 0.0
    %2180 = vmatprep.subr.mxu0 0.0
    %2181 = vmatpush1.msra.mxu0 0.0
    %2182 = vmatprep.subr.mxu0 0.0
    %2183 = vmatpush1.msra.mxu0 0.0
    %2184 = vmatprep.subr.mxu0 0.0
    %2185 = vmatpush1.msra.mxu0 0.0
    %2186 = vmatprep.subr.mxu0 0.0
    %2187 = vmatpush1.msra.mxu0 0.0
    %2188 = vmatprep.subr.mxu0 0.0
    %2189 = vmatpush1.msra.mxu0 0.0
    %2190 = vmatprep.subr.mxu0 0.0
    %2191 = vmatpush1.msra.mxu0 0.0
    %2192 = vmatprep.subr.mxu0 0.0
    %2193 = vmatpush1.msra.mxu0 0.0
    %2194 = vmatprep.subr.mxu0 0.0
    %2195 = vmatpush1.msra.mxu0 0.0
    %2196 = vmatprep.subr.mxu0 0.0
    %2197 = vmatpush1.msra.mxu0 %v1216
    %2198 = vmatprep.subr.mxu0 0.0
    %2199 = vmatpush1.msra.mxu0 %v1215
    %2200 = vmatprep.subr.mxu0 0.0
    %2201 = vmatpush1.msra.mxu0 %v1214
    %2202 = vmatprep.subr.mxu0 0.0
    %2203 = vmatpush1.msra.mxu0 %v1213
    %2204 = vmatprep.subr.mxu0 0.0
    %2205 = vmatpush2.msra.mxu0 0.0
    %2206 = vmatprep.subr.mxu0 0.0
    %2207 = vmatpush2.msra.mxu0 0.0
    %2208 = vmatprep.subr.mxu0 0.0
    %2209 = vmatpush2.msra.mxu0 0.0
    %2210 = vmatprep.subr.mxu0 0.0
    %2211 = vmatpush2.msra.mxu0 0.0
    %2212 = vmatprep.subr.mxu0 0.0
    %2213 = vmatpush2.msra.mxu0 0.0
    %2214 = vmatprep.subr.mxu0 0.0
    %2215 = vmatpush2.msra.mxu0 0.0
    %2216 = vmatprep.subr.mxu0 0.0
    %2217 = vmatpush2.msra.mxu0 0.0
    %2218 = vmatprep.subr.mxu0 0.0
    %2219 = vmatpush2.msra.mxu0 0.0
    %2220 = vmatprep.subr.mxu0 0.0
    %2221 = vmatpush2.msra.mxu0 0.0
    %2222 = vmatprep.subr.mxu0 0.0
    %2223 = vmatpush2.msra.mxu0 0.0
    %2224 = vmatprep.subr.mxu0 0.0
    %2225 = vmatpush2.msra.mxu0 0.0
    %2226 = vmatprep.subr.mxu0 0.0
    %2227 = vmatpush2.msra.mxu0 0.0
    %2228 = vmatprep.subr.mxu0 0.0
    %2229 = vmatpush2.msra.mxu0 0.0
    %2230 = vmatprep.subr.mxu0 0.0
    %2231 = vmatpush2.msra.mxu0 0.0
    %2232 = vmatprep.subr.mxu0 0.0
    %2233 = vmatpush2.msra.mxu0 0.0
    %2234 = vmatprep.subr.mxu0 0.0
    %2235 = vmatpush2.msra.mxu0 0.0
    %2236 = vmatprep.mubr.f32.mxu0 0.0
    %2237 = vmatmul.mubr.f32.gmra.mxu0 %v2170
    %v2238 = vpop.f32.mrf.mxu0
    %v2239 = vadd.f32 0.0, %v2238
    %v2240 = vpop.f32.mrf.mxu0
    %2241 = vdwg.mxu0
    %v2243 = vsel %vm70, %v1114, 0
    %2245 = vmatprep.subr.mxu0 0.0
    %2246 = vmatpush1.msra.mxu0 0.0
    %2247 = vmatprep.subr.mxu0 0.0
    %2248 = vmatpush1.msra.mxu0 0.0
    %2249 = vmatprep.subr.mxu0 0.0
    %2250 = vmatpush1.msra.mxu0 0.0
    %2251 = vmatprep.subr.mxu0 0.0
    %2252 = vmatpush1.msra.mxu0 0.0
    %2253 = vmatprep.subr.mxu0 0.0
    %2254 = vmatpush1.msra.mxu0 0.0
    %2255 = vmatprep.subr.mxu0 0.0
    %2256 = vmatpush1.msra.mxu0 0.0
    %2257 = vmatprep.subr.mxu0 0.0
    %2258 = vmatpush1.msra.mxu0 0.0
    %2259 = vmatprep.subr.mxu0 0.0
    %2260 = vmatpush1.msra.mxu0 0.0
    %2261 = vmatprep.subr.mxu0 0.0
    %2262 = vmatpush1.msra.mxu0 0.0
    %2263 = vmatprep.subr.mxu0 0.0
    %2264 = vmatpush1.msra.mxu0 0.0
    %2265 = vmatprep.subr.mxu0 0.0
    %2266 = vmatpush1.msra.mxu0 0.0
    %2267 = vmatprep.subr.mxu0 0.0
    %2268 = vmatpush1.msra.mxu0 0.0
    %2269 = vmatprep.subr.mxu0 0.0
    %2270 = vmatpush1.msra.mxu0 %v1220
    %2271 = vmatprep.subr.mxu0 0.0
    %2272 = vmatpush1.msra.mxu0 %v1219
    %2273 = vmatprep.subr.mxu0 0.0
    %2274 = vmatpush1.msra.mxu0 %v1218
    %2275 = vmatprep.subr.mxu0 0.0
    %2276 = vmatpush1.msra.mxu0 %v1217
    %2277 = vmatprep.subr.mxu0 0.0
    %2278 = vmatpush2.msra.mxu0 0.0
    %2279 = vmatprep.subr.mxu0 0.0
    %2280 = vmatpush2.msra.mxu0 0.0
    %2281 = vmatprep.subr.mxu0 0.0
    %2282 = vmatpush2.msra.mxu0 0.0
    %2283 = vmatprep.subr.mxu0 0.0
    %2284 = vmatpush2.msra.mxu0 0.0
    %2285 = vmatprep.subr.mxu0 0.0
    %2286 = vmatpush2.msra.mxu0 0.0
    %2287 = vmatprep.subr.mxu0 0.0
    %2288 = vmatpush2.msra.mxu0 0.0
    %2289 = vmatprep.subr.mxu0 0.0
    %2290 = vmatpush2.msra.mxu0 0.0
    %2291 = vmatprep.subr.mxu0 0.0
    %2292 = vmatpush2.msra.mxu0 0.0
    %2293 = vmatprep.subr.mxu0 0.0
    %2294 = vmatpush2.msra.mxu0 0.0
    %2295 = vmatprep.subr.mxu0 0.0
    %2296 = vmatpush2.msra.mxu0 0.0
    %2297 = vmatprep.subr.mxu0 0.0
    %2298 = vmatpush2.msra.mxu0 0.0
    %2299 = vmatprep.subr.mxu0 0.0
    %2300 = vmatpush2.msra.mxu0 0.0
    %2301 = vmatprep.subr.mxu0 0.0
    %2302 = vmatpush2.msra.mxu0 0.0
    %2303 = vmatprep.subr.mxu0 0.0
    %2304 = vmatpush2.msra.mxu0 0.0
    %2305 = vmatprep.subr.mxu0 0.0
    %2306 = vmatpush2.msra.mxu0 0.0
    %2307 = vmatprep.subr.mxu0 0.0
    %2308 = vmatpush2.msra.mxu0 0.0
    %2309 = vmatprep.mubr.f32.mxu0 0.0
    %2310 = vmatmul.mubr.f32.gmra.mxu0 %v2243
    %v2311 = vpop.f32.mrf.mxu0
    %v2312 = vadd.f32 0.0, %v2311
    %v2313 = vpop.f32.mrf.mxu0
    %2314 = vdwg.mxu0
    %v2316 = vsel %vm70, %v1115, 0
    %2318 = vmatprep.subr.mxu0 0.0
    %2319 = vmatpush1.msra.mxu0 0.0
    %2320 = vmatprep.subr.mxu0 0.0
    %2321 = vmatpush1.msra.mxu0 0.0
    %2322 = vmatprep.subr.mxu0 0.0
    %2323 = vmatpush1.msra.mxu0 0.0
    %2324 = vmatprep.subr.mxu0 0.0
    %2325 = vmatpush1.msra.mxu0 0.0
    %2326 = vmatprep.subr.mxu0 0.0
    %2327 = vmatpush1.msra.mxu0 0.0
    %2328 = vmatprep.subr.mxu0 0.0
    %2329 = vmatpush1.msra.mxu0 0.0
    %2330 = vmatprep.subr.mxu0 0.0
    %2331 = vmatpush1.msra.mxu0 0.0
    %2332 = vmatprep.subr.mxu0 0.0
    %2333 = vmatpush1.msra.mxu0 0.0
    %2334 = vmatprep.subr.mxu0 0.0
    %2335 = vmatpush1.msra.mxu0 0.0
    %2336 = vmatprep.subr.mxu0 0.0
    %2337 = vmatpush1.msra.mxu0 0.0
    %2338 = vmatprep.subr.mxu0 0.0
    %2339 = vmatpush1.msra.mxu0 0.0
    %2340 = vmatprep.subr.mxu0 0.0
    %2341 = vmatpush1.msra.mxu0 0.0
    %2342 = vmatprep.subr.mxu0 0.0
    %2343 = vmatpush1.msra.mxu0 %v1224
    %2344 = vmatprep.subr.mxu0 0.0
    %2345 = vmatpush1.msra.mxu0 %v1223
    %2346 = vmatprep.subr.mxu0 0.0
    %2347 = vmatpush1.msra.mxu0 %v1222
    %2348 = vmatprep.subr.mxu0 0.0
    %2349 = vmatpush1.msra.mxu0 %v1221
    %2350 = vmatprep.subr.mxu0 0.0
    %2351 = vmatpush2.msra.mxu0 0.0
    %2352 = vmatprep.subr.mxu0 0.0
    %2353 = vmatpush2.msra.mxu0 0.0
    %2354 = vmatprep.subr.mxu0 0.0
    %2355 = vmatpush2.msra.mxu0 0.0
    %2356 = vmatprep.subr.mxu0 0.0
    %2357 = vmatpush2.msra.mxu0 0.0
    %2358 = vmatprep.subr.mxu0 0.0
    %2359 = vmatpush2.msra.mxu0 0.0
    %2360 = vmatprep.subr.mxu0 0.0
    %2361 = vmatpush2.msra.mxu0 0.0
    %2362 = vmatprep.subr.mxu0 0.0
    %2363 = vmatpush2.msra.mxu0 0.0
    %2364 = vmatprep.subr.mxu0 0.0
    %2365 = vmatpush2.msra.mxu0 0.0
    %2366 = vmatprep.subr.mxu0 0.0
    %2367 = vmatpush2.msra.mxu0 0.0
    %2368 = vmatprep.subr.mxu0 0.0
    %2369 = vmatpush2.msra.mxu0 0.0
    %2370 = vmatprep.subr.mxu0 0.0
    %2371 = vmatpush2.msra.mxu0 0.0
    %2372 = vmatprep.subr.mxu0 0.0
    %2373 = vmatpush2.msra.mxu0 0.0
    %2374 = vmatprep.subr.mxu0 0.0
    %2375 = vmatpush2.msra.mxu0 0.0
    %2376 = vmatprep.subr.mxu0 0.0
    %2377 = vmatpush2.msra.mxu0 0.0
    %2378 = vmatprep.subr.mxu0 0.0
    %2379 = vmatpush2.msra.mxu0 0.0
    %2380 = vmatprep.subr.mxu0 0.0
    %2381 = vmatpush2.msra.mxu0 0.0
    %2382 = vmatprep.mubr.f32.mxu0 0.0
    %2383 = vmatmul.mubr.f32.gmra.mxu0 %v2316
    %v2384 = vpop.f32.mrf.mxu0
    %v2385 = vadd.f32 0.0, %v2384
    %v2386 = vpop.f32.mrf.mxu0
    %2387 = vdwg.mxu0
    %v2389 = vsel %vm70, %v1116, 0
    %2391 = vmatprep.subr.mxu0 0.0
    %2392 = vmatpush1.msra.mxu0 0.0
    %2393 = vmatprep.subr.mxu0 0.0
    %2394 = vmatpush1.msra.mxu0 0.0
    %2395 = vmatprep.subr.mxu0 0.0
    %2396 = vmatpush1.msra.mxu0 0.0
    %2397 = vmatprep.subr.mxu0 0.0
    %2398 = vmatpush1.msra.mxu0 0.0
    %2399 = vmatprep.subr.mxu0 0.0
    %2400 = vmatpush1.msra.mxu0 0.0
    %2401 = vmatprep.subr.mxu0 0.0
    %2402 = vmatpush1.msra.mxu0 0.0
    %2403 = vmatprep.subr.mxu0 0.0
    %2404 = vmatpush1.msra.mxu0 0.0
    %2405 = vmatprep.subr.mxu0 0.0
    %2406 = vmatpush1.msra.mxu0 0.0
    %2407 = vmatprep.subr.mxu0 0.0
    %2408 = vmatpush1.msra.mxu0 0.0
    %2409 = vmatprep.subr.mxu0 0.0
    %2410 = vmatpush1.msra.mxu0 0.0
    %2411 = vmatprep.subr.mxu0 0.0
    %2412 = vmatpush1.msra.mxu0 0.0
    %2413 = vmatprep.subr.mxu0 0.0
    %2414 = vmatpush1.msra.mxu0 0.0
    %2415 = vmatprep.subr.mxu0 0.0
    %2416 = vmatpush1.msra.mxu0 %v1228
    %2417 = vmatprep.subr.mxu0 0.0
    %2418 = vmatpush1.msra.mxu0 %v1227
    %2419 = vmatprep.subr.mxu0 0.0
    %2420 = vmatpush1.msra.mxu0 %v1226
    %2421 = vmatprep.subr.mxu0 0.0
    %2422 = vmatpush1.msra.mxu0 %v1225
    %2423 = vmatprep.subr.mxu0 0.0
    %2424 = vmatpush2.msra.mxu0 0.0
    %2425 = vmatprep.subr.mxu0 0.0
    %2426 = vmatpush2.msra.mxu0 0.0
    %2427 = vmatprep.subr.mxu0 0.0
    %2428 = vmatpush2.msra.mxu0 0.0
    %2429 = vmatprep.subr.mxu0 0.0
    %2430 = vmatpush2.msra.mxu0 0.0
    %2431 = vmatprep.subr.mxu0 0.0
    %2432 = vmatpush2.msra.mxu0 0.0
    %2433 = vmatprep.subr.mxu0 0.0
    %2434 = vmatpush2.msra.mxu0 0.0
    %2435 = vmatprep.subr.mxu0 0.0
    %2436 = vmatpush2.msra.mxu0 0.0
    %2437 = vmatprep.subr.mxu0 0.0
    %2438 = vmatpush2.msra.mxu0 0.0
    %2439 = vmatprep.subr.mxu0 0.0
    %2440 = vmatpush2.msra.mxu0 0.0
    %2441 = vmatprep.subr.mxu0 0.0
    %2442 = vmatpush2.msra.mxu0 0.0
    %2443 = vmatprep.subr.mxu0 0.0
    %2444 = vmatpush2.msra.mxu0 0.0
    %2445 = vmatprep.subr.mxu0 0.0
    %2446 = vmatpush2.msra.mxu0 0.0
    %2447 = vmatprep.subr.mxu0 0.0
    %2448 = vmatpush2.msra.mxu0 0.0
    %2449 = vmatprep.subr.mxu0 0.0
    %2450 = vmatpush2.msra.mxu0 0.0
    %2451 = vmatprep.subr.mxu0 0.0
    %2452 = vmatpush2.msra.mxu0 0.0
    %2453 = vmatprep.subr.mxu0 0.0
    %2454 = vmatpush2.msra.mxu0 0.0
    %2455 = vmatprep.mubr.f32.mxu0 0.0
    %2456 = vmatmul.mubr.f32.gmra.mxu0 %v2389
    %v2457 = vpop.f32.mrf.mxu0
    %v2458 = vadd.f32 0.0, %v2457
    %v2459 = vpop.f32.mrf.mxu0
    %2460 = vdwg.mxu0
    %v2462 = vsel %vm70, %v1117, 0
    %2464 = vmatprep.subr.mxu0 0.0
    %2465 = vmatpush1.msra.mxu0 0.0
    %2466 = vmatprep.subr.mxu0 0.0
    %2467 = vmatpush1.msra.mxu0 0.0
    %2468 = vmatprep.subr.mxu0 0.0
    %2469 = vmatpush1.msra.mxu0 0.0
    %2470 = vmatprep.subr.mxu0 0.0
    %2471 = vmatpush1.msra.mxu0 0.0
    %2472 = vmatprep.subr.mxu0 0.0
    %2473 = vmatpush1.msra.mxu0 0.0
    %2474 = vmatprep.subr.mxu0 0.0
    %2475 = vmatpush1.msra.mxu0 0.0
    %2476 = vmatprep.subr.mxu0 0.0
    %2477 = vmatpush1.msra.mxu0 0.0
    %2478 = vmatprep.subr.mxu0 0.0
    %2479 = vmatpush1.msra.mxu0 0.0
    %2480 = vmatprep.subr.mxu0 0.0
    %2481 = vmatpush1.msra.mxu0 0.0
    %2482 = vmatprep.subr.mxu0 0.0
    %2483 = vmatpush1.msra.mxu0 0.0
    %2484 = vmatprep.subr.mxu0 0.0
    %2485 = vmatpush1.msra.mxu0 0.0
    %2486 = vmatprep.subr.mxu0 0.0
    %2487 = vmatpush1.msra.mxu0 0.0
    %2488 = vmatprep.subr.mxu0 0.0
    %2489 = vmatpush1.msra.mxu0 %v1232
    %2490 = vmatprep.subr.mxu0 0.0
    %2491 = vmatpush1.msra.mxu0 %v1231
    %2492 = vmatprep.subr.mxu0 0.0
    %2493 = vmatpush1.msra.mxu0 %v1230
    %2494 = vmatprep.subr.mxu0 0.0
    %2495 = vmatpush1.msra.mxu0 %v1229
    %2496 = vmatprep.subr.mxu0 0.0
    %2497 = vmatpush2.msra.mxu0 0.0
    %2498 = vmatprep.subr.mxu0 0.0
    %2499 = vmatpush2.msra.mxu0 0.0
    %2500 = vmatprep.subr.mxu0 0.0
    %2501 = vmatpush2.msra.mxu0 0.0
    %2502 = vmatprep.subr.mxu0 0.0
    %2503 = vmatpush2.msra.mxu0 0.0
    %2504 = vmatprep.subr.mxu0 0.0
    %2505 = vmatpush2.msra.mxu0 0.0
    %2506 = vmatprep.subr.mxu0 0.0
    %2507 = vmatpush2.msra.mxu0 0.0
    %2508 = vmatprep.subr.mxu0 0.0
    %2509 = vmatpush2.msra.mxu0 0.0
    %2510 = vmatprep.subr.mxu0 0.0
    %2511 = vmatpush2.msra.mxu0 0.0
    %2512 = vmatprep.subr.mxu0 0.0
    %2513 = vmatpush2.msra.mxu0 0.0
    %2514 = vmatprep.subr.mxu0 0.0
    %2515 = vmatpush2.msra.mxu0 0.0
    %2516 = vmatprep.subr.mxu0 0.0
    %2517 = vmatpush2.msra.mxu0 0.0
    %2518 = vmatprep.subr.mxu0 0.0
    %2519 = vmatpush2.msra.mxu0 0.0
    %2520 = vmatprep.subr.mxu0 0.0
    %2521 = vmatpush2.msra.mxu0 0.0
    %2522 = vmatprep.subr.mxu0 0.0
    %2523 = vmatpush2.msra.mxu0 0.0
    %2524 = vmatprep.subr.mxu0 0.0
    %2525 = vmatpush2.msra.mxu0 0.0
    %2526 = vmatprep.subr.mxu0 0.0
    %2527 = vmatpush2.msra.mxu0 0.0
    %2528 = vmatprep.mubr.f32.mxu0 0.0
    %2529 = vmatmul.mubr.f32.gmra.mxu0 %v2462
    %v2530 = vpop.f32.mrf.mxu0
    %v2531 = vadd.f32 0.0, %v2530
    %v2532 = vpop.f32.mrf.mxu0
    %2533 = vdwg.mxu0
    %v2535 = vsel %vm70, %v1118, 0
    %2537 = vmatprep.subr.mxu0 0.0
    %2538 = vmatpush1.msra.mxu0 0.0
    %2539 = vmatprep.subr.mxu0 0.0
    %2540 = vmatpush1.msra.mxu0 0.0
    %2541 = vmatprep.subr.mxu0 0.0
    %2542 = vmatpush1.msra.mxu0 0.0
    %2543 = vmatprep.subr.mxu0 0.0
    %2544 = vmatpush1.msra.mxu0 0.0
    %2545 = vmatprep.subr.mxu0 0.0
    %2546 = vmatpush1.msra.mxu0 0.0
    %2547 = vmatprep.subr.mxu0 0.0
    %2548 = vmatpush1.msra.mxu0 0.0
    %2549 = vmatprep.subr.mxu0 0.0
    %2550 = vmatpush1.msra.mxu0 0.0
    %2551 = vmatprep.subr.mxu0 0.0
    %2552 = vmatpush1.msra.mxu0 0.0
    %2553 = vmatprep.subr.mxu0 0.0
    %2554 = vmatpush1.msra.mxu0 0.0
    %2555 = vmatprep.subr.mxu0 0.0
    %2556 = vmatpush1.msra.mxu0 0.0
    %2557 = vmatprep.subr.mxu0 0.0
    %2558 = vmatpush1.msra.mxu0 0.0
    %2559 = vmatprep.subr.mxu0 0.0
    %2560 = vmatpush1.msra.mxu0 0.0
    %2561 = vmatprep.subr.mxu0 0.0
    %2562 = vmatpush1.msra.mxu0 %v1236
    %2563 = vmatprep.subr.mxu0 0.0
    %2564 = vmatpush1.msra.mxu0 %v1235
    %2565 = vmatprep.subr.mxu0 0.0
    %2566 = vmatpush1.msra.mxu0 %v1234
    %2567 = vmatprep.subr.mxu0 0.0
    %2568 = vmatpush1.msra.mxu0 %v1233
    %2569 = vmatprep.subr.mxu0 0.0
    %2570 = vmatpush2.msra.mxu0 0.0
    %2571 = vmatprep.subr.mxu0 0.0
    %2572 = vmatpush2.msra.mxu0 0.0
    %2573 = vmatprep.subr.mxu0 0.0
    %2574 = vmatpush2.msra.mxu0 0.0
    %2575 = vmatprep.subr.mxu0 0.0
    %2576 = vmatpush2.msra.mxu0 0.0
    %2577 = vmatprep.subr.mxu0 0.0
    %2578 = vmatpush2.msra.mxu0 0.0
    %2579 = vmatprep.subr.mxu0 0.0
    %2580 = vmatpush2.msra.mxu0 0.0
    %2581 = vmatprep.subr.mxu0 0.0
    %2582 = vmatpush2.msra.mxu0 0.0
    %2583 = vmatprep.subr.mxu0 0.0
    %2584 = vmatpush2.msra.mxu0 0.0
    %2585 = vmatprep.subr.mxu0 0.0
    %2586 = vmatpush2.msra.mxu0 0.0
    %2587 = vmatprep.subr.mxu0 0.0
    %2588 = vmatpush2.msra.mxu0 0.0
    %2589 = vmatprep.subr.mxu0 0.0
    %2590 = vmatpush2.msra.mxu0 0.0
    %2591 = vmatprep.subr.mxu0 0.0
    %2592 = vmatpush2.msra.mxu0 0.0
    %2593 = vmatprep.subr.mxu0 0.0
    %2594 = vmatpush2.msra.mxu0 0.0
    %2595 = vmatprep.subr.mxu0 0.0
    %2596 = vmatpush2.msra.mxu0 0.0
    %2597 = vmatprep.subr.mxu0 0.0
    %2598 = vmatpush2.msra.mxu0 0.0
    %2599 = vmatprep.subr.mxu0 0.0
    %2600 = vmatpush2.msra.mxu0 0.0
    %2601 = vmatprep.mubr.f32.mxu0 0.0
    %2602 = vmatmul.mubr.f32.gmra.mxu0 %v2535
    %v2603 = vpop.f32.mrf.mxu0
    %v2604 = vadd.f32 0.0, %v2603
    %v2605 = vpop.f32.mrf.mxu0
    %2606 = vdwg.mxu0
    %v2608 = vsel %vm70, %v1119, 0
    %2610 = vmatprep.subr.mxu0 0.0
    %2611 = vmatpush1.msra.mxu0 0.0
    %2612 = vmatprep.subr.mxu0 0.0
    %2613 = vmatpush1.msra.mxu0 0.0
    %2614 = vmatprep.subr.mxu0 0.0
    %2615 = vmatpush1.msra.mxu0 0.0
    %2616 = vmatprep.subr.mxu0 0.0
    %2617 = vmatpush1.msra.mxu0 0.0
    %2618 = vmatprep.subr.mxu0 0.0
    %2619 = vmatpush1.msra.mxu0 0.0
    %2620 = vmatprep.subr.mxu0 0.0
    %2621 = vmatpush1.msra.mxu0 0.0
    %2622 = vmatprep.subr.mxu0 0.0
    %2623 = vmatpush1.msra.mxu0 0.0
    %2624 = vmatprep.subr.mxu0 0.0
    %2625 = vmatpush1.msra.mxu0 0.0
    %2626 = vmatprep.subr.mxu0 0.0
    %2627 = vmatpush1.msra.mxu0 0.0
    %2628 = vmatprep.subr.mxu0 0.0
    %2629 = vmatpush1.msra.mxu0 0.0
    %2630 = vmatprep.subr.mxu0 0.0
    %2631 = vmatpush1.msra.mxu0 0.0
    %2632 = vmatprep.subr.mxu0 0.0
    %2633 = vmatpush1.msra.mxu0 0.0
    %2634 = vmatprep.subr.mxu0 0.0
    %2635 = vmatpush1.msra.mxu0 %v1240
    %2636 = vmatprep.subr.mxu0 0.0
    %2637 = vmatpush1.msra.mxu0 %v1239
    %2638 = vmatprep.subr.mxu0 0.0
    %2639 = vmatpush1.msra.mxu0 %v1238
    %2640 = vmatprep.subr.mxu0 0.0
    %2641 = vmatpush1.msra.mxu0 %v1237
    %2642 = vmatprep.subr.mxu0 0.0
    %2643 = vmatpush2.msra.mxu0 0.0
    %2644 = vmatprep.subr.mxu0 0.0
    %2645 = vmatpush2.msra.mxu0 0.0
    %2646 = vmatprep.subr.mxu0 0.0
    %2647 = vmatpush2.msra.mxu0 0.0
    %2648 = vmatprep.subr.mxu0 0.0
    %2649 = vmatpush2.msra.mxu0 0.0
    %2650 = vmatprep.subr.mxu0 0.0
    %2651 = vmatpush2.msra.mxu0 0.0
    %2652 = vmatprep.subr.mxu0 0.0
    %2653 = vmatpush2.msra.mxu0 0.0
    %2654 = vmatprep.subr.mxu0 0.0
    %2655 = vmatpush2.msra.mxu0 0.0
    %2656 = vmatprep.subr.mxu0 0.0
    %2657 = vmatpush2.msra.mxu0 0.0
    %2658 = vmatprep.subr.mxu0 0.0
    %2659 = vmatpush2.msra.mxu0 0.0
    %2660 = vmatprep.subr.mxu0 0.0
    %2661 = vmatpush2.msra.mxu0 0.0
    %2662 = vmatprep.subr.mxu0 0.0
    %2663 = vmatpush2.msra.mxu0 0.0
    %2664 = vmatprep.subr.mxu0 0.0
    %2665 = vmatpush2.msra.mxu0 0.0
    %2666 = vmatprep.subr.mxu0 0.0
    %2667 = vmatpush2.msra.mxu0 0.0
    %2668 = vmatprep.subr.mxu0 0.0
    %2669 = vmatpush2.msra.mxu0 0.0
    %2670 = vmatprep.subr.mxu0 0.0
    %2671 = vmatpush2.msra.mxu0 0.0
    %2672 = vmatprep.subr.mxu0 0.0
    %2673 = vmatpush2.msra.mxu0 0.0
    %2674 = vmatprep.mubr.f32.mxu0 0.0
    %2675 = vmatmul.mubr.f32.gmra.mxu0 %v2608
    %v2676 = vpop.f32.mrf.mxu0
    %v2677 = vadd.f32 0.0, %v2676
    %v2678 = vpop.f32.mrf.mxu0
    %2679 = vdwg.mxu0
    %v2681 = vsel %vm70, %v1120, 0
    %2683 = vmatprep.subr.mxu0 0.0
    %2684 = vmatpush1.msra.mxu0 0.0
    %2685 = vmatprep.subr.mxu0 0.0
    %2686 = vmatpush1.msra.mxu0 0.0
    %2687 = vmatprep.subr.mxu0 0.0
    %2688 = vmatpush1.msra.mxu0 0.0
    %2689 = vmatprep.subr.mxu0 0.0
    %2690 = vmatpush1.msra.mxu0 0.0
    %2691 = vmatprep.subr.mxu0 0.0
    %2692 = vmatpush1.msra.mxu0 0.0
    %2693 = vmatprep.subr.mxu0 0.0
    %2694 = vmatpush1.msra.mxu0 0.0
    %2695 = vmatprep.subr.mxu0 0.0
    %2696 = vmatpush1.msra.mxu0 0.0
    %2697 = vmatprep.subr.mxu0 0.0
    %2698 = vmatpush1.msra.mxu0 0.0
    %2699 = vmatprep.subr.mxu0 0.0
    %2700 = vmatpush1.msra.mxu0 0.0
    %2701 = vmatprep.subr.mxu0 0.0
    %2702 = vmatpush1.msra.mxu0 0.0
    %2703 = vmatprep.subr.mxu0 0.0
    %2704 = vmatpush1.msra.mxu0 0.0
    %2705 = vmatprep.subr.mxu0 0.0
    %2706 = vmatpush1.msra.mxu0 0.0
    %2707 = vmatprep.subr.mxu0 0.0
    %2708 = vmatpush1.msra.mxu0 %v1244
    %2709 = vmatprep.subr.mxu0 0.0
    %2710 = vmatpush1.msra.mxu0 %v1243
    %2711 = vmatprep.subr.mxu0 0.0
    %2712 = vmatpush1.msra.mxu0 %v1242
    %2713 = vmatprep.subr.mxu0 0.0
    %2714 = vmatpush1.msra.mxu0 %v1241
    %2715 = vmatprep.subr.mxu0 0.0
    %2716 = vmatpush2.msra.mxu0 0.0
    %2717 = vmatprep.subr.mxu0 0.0
    %2718 = vmatpush2.msra.mxu0 0.0
    %2719 = vmatprep.subr.mxu0 0.0
    %2720 = vmatpush2.msra.mxu0 0.0
    %2721 = vmatprep.subr.mxu0 0.0
    %2722 = vmatpush2.msra.mxu0 0.0
    %2723 = vmatprep.subr.mxu0 0.0
    %2724 = vmatpush2.msra.mxu0 0.0
    %2725 = vmatprep.subr.mxu0 0.0
    %2726 = vmatpush2.msra.mxu0 0.0
    %2727 = vmatprep.subr.mxu0 0.0
    %2728 = vmatpush2.msra.mxu0 0.0
    %2729 = vmatprep.subr.mxu0 0.0
    %2730 = vmatpush2.msra.mxu0 0.0
    %2731 = vmatprep.subr.mxu0 0.0
    %2732 = vmatpush2.msra.mxu0 0.0
    %2733 = vmatprep.subr.mxu0 0.0
    %2734 = vmatpush2.msra.mxu0 0.0
    %2735 = vmatprep.subr.mxu0 0.0
    %2736 = vmatpush2.msra.mxu0 0.0
    %2737 = vmatprep.subr.mxu0 0.0
    %2738 = vmatpush2.msra.mxu0 0.0
    %2739 = vmatprep.subr.mxu0 0.0
    %2740 = vmatpush2.msra.mxu0 0.0
    %2741 = vmatprep.subr.mxu0 0.0
    %2742 = vmatpush2.msra.mxu0 0.0
    %2743 = vmatprep.subr.mxu0 0.0
    %2744 = vmatpush2.msra.mxu0 0.0
    %2745 = vmatprep.subr.mxu0 0.0
    %2746 = vmatpush2.msra.mxu0 0.0
    %2747 = vmatprep.mubr.f32.mxu0 0.0
    %2748 = vmatmul.mubr.f32.gmra.mxu0 %v2681
    %v2749 = vpop.f32.mrf.mxu0
    %v2750 = vadd.f32 0.0, %v2749
    %v2751 = vpop.f32.mrf.mxu0
    %2752 = vdwg.mxu0
    %v2754 = vsel %vm70, %v1121, 0
    %2756 = vmatprep.subr.mxu0 0.0
    %2757 = vmatpush1.msra.mxu0 0.0
    %2758 = vmatprep.subr.mxu0 0.0
    %2759 = vmatpush1.msra.mxu0 0.0
    %2760 = vmatprep.subr.mxu0 0.0
    %2761 = vmatpush1.msra.mxu0 0.0
    %2762 = vmatprep.subr.mxu0 0.0
    %2763 = vmatpush1.msra.mxu0 0.0
    %2764 = vmatprep.subr.mxu0 0.0
    %2765 = vmatpush1.msra.mxu0 0.0
    %2766 = vmatprep.subr.mxu0 0.0
    %2767 = vmatpush1.msra.mxu0 0.0
    %2768 = vmatprep.subr.mxu0 0.0
    %2769 = vmatpush1.msra.mxu0 0.0
    %2770 = vmatprep.subr.mxu0 0.0
    %2771 = vmatpush1.msra.mxu0 0.0
    %2772 = vmatprep.subr.mxu0 0.0
    %2773 = vmatpush1.msra.mxu0 0.0
    %2774 = vmatprep.subr.mxu0 0.0
    %2775 = vmatpush1.msra.mxu0 0.0
    %2776 = vmatprep.subr.mxu0 0.0
    %2777 = vmatpush1.msra.mxu0 0.0
    %2778 = vmatprep.subr.mxu0 0.0
    %2779 = vmatpush1.msra.mxu0 0.0
    %2780 = vmatprep.subr.mxu0 0.0
    %2781 = vmatpush1.msra.mxu0 %v1248
    %2782 = vmatprep.subr.mxu0 0.0
    %2783 = vmatpush1.msra.mxu0 %v1247
    %2784 = vmatprep.subr.mxu0 0.0
    %2785 = vmatpush1.msra.mxu0 %v1246
    %2786 = vmatprep.subr.mxu0 0.0
    %2787 = vmatpush1.msra.mxu0 %v1245
    %2788 = vmatprep.subr.mxu0 0.0
    %2789 = vmatpush2.msra.mxu0 0.0
    %2790 = vmatprep.subr.mxu0 0.0
    %2791 = vmatpush2.msra.mxu0 0.0
    %2792 = vmatprep.subr.mxu0 0.0
    %2793 = vmatpush2.msra.mxu0 0.0
    %2794 = vmatprep.subr.mxu0 0.0
    %2795 = vmatpush2.msra.mxu0 0.0
    %2796 = vmatprep.subr.mxu0 0.0
    %2797 = vmatpush2.msra.mxu0 0.0
    %2798 = vmatprep.subr.mxu0 0.0
    %2799 = vmatpush2.msra.mxu0 0.0
    %2800 = vmatprep.subr.mxu0 0.0
    %2801 = vmatpush2.msra.mxu0 0.0
    %2802 = vmatprep.subr.mxu0 0.0
    %2803 = vmatpush2.msra.mxu0 0.0
    %2804 = vmatprep.subr.mxu0 0.0
    %2805 = vmatpush2.msra.mxu0 0.0
    %2806 = vmatprep.subr.mxu0 0.0
    %2807 = vmatpush2.msra.mxu0 0.0
    %2808 = vmatprep.subr.mxu0 0.0
    %2809 = vmatpush2.msra.mxu0 0.0
    %2810 = vmatprep.subr.mxu0 0.0
    %2811 = vmatpush2.msra.mxu0 0.0
    %2812 = vmatprep.subr.mxu0 0.0
    %2813 = vmatpush2.msra.mxu0 0.0
    %2814 = vmatprep.subr.mxu0 0.0
    %2815 = vmatpush2.msra.mxu0 0.0
    %2816 = vmatprep.subr.mxu0 0.0
    %2817 = vmatpush2.msra.mxu0 0.0
    %2818 = vmatprep.subr.mxu0 0.0
    %2819 = vmatpush2.msra.mxu0 0.0
    %2820 = vmatprep.mubr.f32.mxu0 0.0
    %2821 = vmatmul.mubr.f32.gmra.mxu0 %v2754
    %v2822 = vpop.f32.mrf.mxu0
    %v2823 = vadd.f32 0.0, %v2822
    %v2824 = vpop.f32.mrf.mxu0
    %2825 = vdwg.mxu0
    %v2827 = vsel %vm70, %v1122, 0
    %2829 = vmatprep.subr.mxu0 0.0
    %2830 = vmatpush1.msra.mxu0 0.0
    %2831 = vmatprep.subr.mxu0 0.0
    %2832 = vmatpush1.msra.mxu0 0.0
    %2833 = vmatprep.subr.mxu0 0.0
    %2834 = vmatpush1.msra.mxu0 0.0
    %2835 = vmatprep.subr.mxu0 0.0
    %2836 = vmatpush1.msra.mxu0 0.0
    %2837 = vmatprep.subr.mxu0 0.0
    %2838 = vmatpush1.msra.mxu0 0.0
    %2839 = vmatprep.subr.mxu0 0.0
    %2840 = vmatpush1.msra.mxu0 0.0
    %2841 = vmatprep.subr.mxu0 0.0
    %2842 = vmatpush1.msra.mxu0 0.0
    %2843 = vmatprep.subr.mxu0 0.0
    %2844 = vmatpush1.msra.mxu0 0.0
    %2845 = vmatprep.subr.mxu0 0.0
    %2846 = vmatpush1.msra.mxu0 0.0
    %2847 = vmatprep.subr.mxu0 0.0
    %2848 = vmatpush1.msra.mxu0 0.0
    %2849 = vmatprep.subr.mxu0 0.0
    %2850 = vmatpush1.msra.mxu0 0.0
    %2851 = vmatprep.subr.mxu0 0.0
    %2852 = vmatpush1.msra.mxu0 0.0
    %2853 = vmatprep.subr.mxu0 0.0
    %2854 = vmatpush1.msra.mxu0 %v1252
    %2855 = vmatprep.subr.mxu0 0.0
    %2856 = vmatpush1.msra.mxu0 %v1251
    %2857 = vmatprep.subr.mxu0 0.0
    %2858 = vmatpush1.msra.mxu0 %v1250
    %2859 = vmatprep.subr.mxu0 0.0
    %2860 = vmatpush1.msra.mxu0 %v1249
    %2861 = vmatprep.subr.mxu0 0.0
    %2862 = vmatpush2.msra.mxu0 0.0
    %2863 = vmatprep.subr.mxu0 0.0
    %2864 = vmatpush2.msra.mxu0 0.0
    %2865 = vmatprep.subr.mxu0 0.0
    %2866 = vmatpush2.msra.mxu0 0.0
    %2867 = vmatprep.subr.mxu0 0.0
    %2868 = vmatpush2.msra.mxu0 0.0
    %2869 = vmatprep.subr.mxu0 0.0
    %2870 = vmatpush2.msra.mxu0 0.0
    %2871 = vmatprep.subr.mxu0 0.0
    %2872 = vmatpush2.msra.mxu0 0.0
    %2873 = vmatprep.subr.mxu0 0.0
    %2874 = vmatpush2.msra.mxu0 0.0
    %2875 = vmatprep.subr.mxu0 0.0
    %2876 = vmatpush2.msra.mxu0 0.0
    %2877 = vmatprep.subr.mxu0 0.0
    %2878 = vmatpush2.msra.mxu0 0.0
    %2879 = vmatprep.subr.mxu0 0.0
    %2880 = vmatpush2.msra.mxu0 0.0
    %2881 = vmatprep.subr.mxu0 0.0
    %2882 = vmatpush2.msra.mxu0 0.0
    %2883 = vmatprep.subr.mxu0 0.0
    %2884 = vmatpush2.msra.mxu0 0.0
    %2885 = vmatprep.subr.mxu0 0.0
    %2886 = vmatpush2.msra.mxu0 0.0
    %2887 = vmatprep.subr.mxu0 0.0
    %2888 = vmatpush2.msra.mxu0 0.0
    %2889 = vmatprep.subr.mxu0 0.0
    %2890 = vmatpush2.msra.mxu0 0.0
    %2891 = vmatprep.subr.mxu0 0.0
    %2892 = vmatpush2.msra.mxu0 0.0
    %2893 = vmatprep.mubr.f32.mxu0 0.0
    %2894 = vmatmul.mubr.f32.gmra.mxu0 %v2827
    %v2895 = vpop.f32.mrf.mxu0
    %v2896 = vadd.f32 0.0, %v2895
    %v2897 = vpop.f32.mrf.mxu0
    %2898 = vdwg.mxu0
    %v2900 = vsel %vm70, %v1123, 0
    %2902 = vmatprep.subr.mxu0 0.0
    %2903 = vmatpush1.msra.mxu0 0.0
    %2904 = vmatprep.subr.mxu0 0.0
    %2905 = vmatpush1.msra.mxu0 0.0
    %2906 = vmatprep.subr.mxu0 0.0
    %2907 = vmatpush1.msra.mxu0 0.0
    %2908 = vmatprep.subr.mxu0 0.0
    %2909 = vmatpush1.msra.mxu0 0.0
    %2910 = vmatprep.subr.mxu0 0.0
    %2911 = vmatpush1.msra.mxu0 0.0
    %2912 = vmatprep.subr.mxu0 0.0
    %2913 = vmatpush1.msra.mxu0 0.0
    %2914 = vmatprep.subr.mxu0 0.0
    %2915 = vmatpush1.msra.mxu0 0.0
    %2916 = vmatprep.subr.mxu0 0.0
    %2917 = vmatpush1.msra.mxu0 0.0
    %2918 = vmatprep.subr.mxu0 0.0
    %2919 = vmatpush1.msra.mxu0 0.0
    %2920 = vmatprep.subr.mxu0 0.0
    %2921 = vmatpush1.msra.mxu0 0.0
    %2922 = vmatprep.subr.mxu0 0.0
    %2923 = vmatpush1.msra.mxu0 0.0
    %2924 = vmatprep.subr.mxu0 0.0
    %2925 = vmatpush1.msra.mxu0 0.0
    %2926 = vmatprep.subr.mxu0 0.0
    %2927 = vmatpush1.msra.mxu0 %v1256
    %2928 = vmatprep.subr.mxu0 0.0
    %2929 = vmatpush1.msra.mxu0 %v1255
    %2930 = vmatprep.subr.mxu0 0.0
    %2931 = vmatpush1.msra.mxu0 %v1254
    %2932 = vmatprep.subr.mxu0 0.0
    %2933 = vmatpush1.msra.mxu0 %v1253
    %2934 = vmatprep.subr.mxu0 0.0
    %2935 = vmatpush2.msra.mxu0 0.0
    %2936 = vmatprep.subr.mxu0 0.0
    %2937 = vmatpush2.msra.mxu0 0.0
    %2938 = vmatprep.subr.mxu0 0.0
    %2939 = vmatpush2.msra.mxu0 0.0
    %2940 = vmatprep.subr.mxu0 0.0
    %2941 = vmatpush2.msra.mxu0 0.0
    %2942 = vmatprep.subr.mxu0 0.0
    %2943 = vmatpush2.msra.mxu0 0.0
    %2944 = vmatprep.subr.mxu0 0.0
    %2945 = vmatpush2.msra.mxu0 0.0
    %2946 = vmatprep.subr.mxu0 0.0
    %2947 = vmatpush2.msra.mxu0 0.0
    %2948 = vmatprep.subr.mxu0 0.0
    %2949 = vmatpush2.msra.mxu0 0.0
    %2950 = vmatprep.subr.mxu0 0.0
    %2951 = vmatpush2.msra.mxu0 0.0
    %2952 = vmatprep.subr.mxu0 0.0
    %2953 = vmatpush2.msra.mxu0 0.0
    %2954 = vmatprep.subr.mxu0 0.0
    %2955 = vmatpush2.msra.mxu0 0.0
    %2956 = vmatprep.subr.mxu0 0.0
    %2957 = vmatpush2.msra.mxu0 0.0
    %2958 = vmatprep.subr.mxu0 0.0
    %2959 = vmatpush2.msra.mxu0 0.0
    %2960 = vmatprep.subr.mxu0 0.0
    %2961 = vmatpush2.msra.mxu0 0.0
    %2962 = vmatprep.subr.mxu0 0.0
    %2963 = vmatpush2.msra.mxu0 0.0
    %2964 = vmatprep.subr.mxu0 0.0
    %2965 = vmatpush2.msra.mxu0 0.0
    %2966 = vmatprep.mubr.f32.mxu0 0.0
    %2967 = vmatmul.mubr.f32.gmra.mxu0 %v2900
    %v2968 = vpop.f32.mrf.mxu0
    %v2969 = vadd.f32 0.0, %v2968
    %v2970 = vpop.f32.mrf.mxu0
    %2971 = vdwg.mxu0
    %v2973 = vsel %vm70, %v1124, 0
    %2975 = vmatprep.subr.mxu0 0.0
    %2976 = vmatpush1.msra.mxu0 0.0
    %2977 = vmatprep.subr.mxu0 0.0
    %2978 = vmatpush1.msra.mxu0 0.0
    %2979 = vmatprep.subr.mxu0 0.0
    %2980 = vmatpush1.msra.mxu0 0.0
    %2981 = vmatprep.subr.mxu0 0.0
    %2982 = vmatpush1.msra.mxu0 0.0
    %2983 = vmatprep.subr.mxu0 0.0
    %2984 = vmatpush1.msra.mxu0 0.0
    %2985 = vmatprep.subr.mxu0 0.0
    %2986 = vmatpush1.msra.mxu0 0.0
    %2987 = vmatprep.subr.mxu0 0.0
    %2988 = vmatpush1.msra.mxu0 0.0
    %2989 = vmatprep.subr.mxu0 0.0
    %2990 = vmatpush1.msra.mxu0 0.0
    %2991 = vmatprep.subr.mxu0 0.0
    %2992 = vmatpush1.msra.mxu0 0.0
    %2993 = vmatprep.subr.mxu0 0.0
    %2994 = vmatpush1.msra.mxu0 0.0
    %2995 = vmatprep.subr.mxu0 0.0
    %2996 = vmatpush1.msra.mxu0 0.0
    %2997 = vmatprep.subr.mxu0 0.0
    %2998 = vmatpush1.msra.mxu0 0.0
    %2999 = vmatprep.subr.mxu0 0.0
    %3000 = vmatpush1.msra.mxu0 %v1260
    %3001 = vmatprep.subr.mxu0 0.0
    %3002 = vmatpush1.msra.mxu0 %v1259
    %3003 = vmatprep.subr.mxu0 0.0
    %3004 = vmatpush1.msra.mxu0 %v1258
    %3005 = vmatprep.subr.mxu0 0.0
    %3006 = vmatpush1.msra.mxu0 %v1257
    %3007 = vmatprep.subr.mxu0 0.0
    %3008 = vmatpush2.msra.mxu0 0.0
    %3009 = vmatprep.subr.mxu0 0.0
    %3010 = vmatpush2.msra.mxu0 0.0
    %3011 = vmatprep.subr.mxu0 0.0
    %3012 = vmatpush2.msra.mxu0 0.0
    %3013 = vmatprep.subr.mxu0 0.0
    %3014 = vmatpush2.msra.mxu0 0.0
    %3015 = vmatprep.subr.mxu0 0.0
    %3016 = vmatpush2.msra.mxu0 0.0
    %3017 = vmatprep.subr.mxu0 0.0
    %3018 = vmatpush2.msra.mxu0 0.0
    %3019 = vmatprep.subr.mxu0 0.0
    %3020 = vmatpush2.msra.mxu0 0.0
    %3021 = vmatprep.subr.mxu0 0.0
    %3022 = vmatpush2.msra.mxu0 0.0
    %3023 = vmatprep.subr.mxu0 0.0
    %3024 = vmatpush2.msra.mxu0 0.0
    %3025 = vmatprep.subr.mxu0 0.0
    %3026 = vmatpush2.msra.mxu0 0.0
    %3027 = vmatprep.subr.mxu0 0.0
    %3028 = vmatpush2.msra.mxu0 0.0
    %3029 = vmatprep.subr.mxu0 0.0
    %3030 = vmatpush2.msra.mxu0 0.0
    %3031 = vmatprep.subr.mxu0 0.0
    %3032 = vmatpush2.msra.mxu0 0.0
    %3033 = vmatprep.subr.mxu0 0.0
    %3034 = vmatpush2.msra.mxu0 0.0
    %3035 = vmatprep.subr.mxu0 0.0
    %3036 = vmatpush2.msra.mxu0 0.0
    %3037 = vmatprep.subr.mxu0 0.0
    %3038 = vmatpush2.msra.mxu0 0.0
    %3039 = vmatprep.mubr.f32.mxu0 0.0
    %3040 = vmatmul.mubr.f32.gmra.mxu0 %v2973
    %v3041 = vpop.f32.mrf.mxu0
    %v3042 = vadd.f32 0.0, %v3041
    %v3043 = vpop.f32.mrf.mxu0
    %3044 = vdwg.mxu0
    %v3046 = vsel %vm70, %v1125, 0
    %3048 = vmatprep.subr.mxu0 0.0
    %3049 = vmatpush1.msra.mxu0 0.0
    %3050 = vmatprep.subr.mxu0 0.0
    %3051 = vmatpush1.msra.mxu0 0.0
    %3052 = vmatprep.subr.mxu0 0.0
    %3053 = vmatpush1.msra.mxu0 0.0
    %3054 = vmatprep.subr.mxu0 0.0
    %3055 = vmatpush1.msra.mxu0 0.0
    %3056 = vmatprep.subr.mxu0 0.0
    %3057 = vmatpush1.msra.mxu0 0.0
    %3058 = vmatprep.subr.mxu0 0.0
    %3059 = vmatpush1.msra.mxu0 0.0
    %3060 = vmatprep.subr.mxu0 0.0
    %3061 = vmatpush1.msra.mxu0 0.0
    %3062 = vmatprep.subr.mxu0 0.0
    %3063 = vmatpush1.msra.mxu0 0.0
    %3064 = vmatprep.subr.mxu0 0.0
    %3065 = vmatpush1.msra.mxu0 0.0
    %3066 = vmatprep.subr.mxu0 0.0
    %3067 = vmatpush1.msra.mxu0 0.0
    %3068 = vmatprep.subr.mxu0 0.0
    %3069 = vmatpush1.msra.mxu0 0.0
    %3070 = vmatprep.subr.mxu0 0.0
    %3071 = vmatpush1.msra.mxu0 0.0
    %3072 = vmatprep.subr.mxu0 0.0
    %3073 = vmatpush1.msra.mxu0 %v1264
    %3074 = vmatprep.subr.mxu0 0.0
    %3075 = vmatpush1.msra.mxu0 %v1263
    %3076 = vmatprep.subr.mxu0 0.0
    %3077 = vmatpush1.msra.mxu0 %v1262
    %3078 = vmatprep.subr.mxu0 0.0
    %3079 = vmatpush1.msra.mxu0 %v1261
    %3080 = vmatprep.subr.mxu0 0.0
    %3081 = vmatpush2.msra.mxu0 0.0
    %3082 = vmatprep.subr.mxu0 0.0
    %3083 = vmatpush2.msra.mxu0 0.0
    %3084 = vmatprep.subr.mxu0 0.0
    %3085 = vmatpush2.msra.mxu0 0.0
    %3086 = vmatprep.subr.mxu0 0.0
    %3087 = vmatpush2.msra.mxu0 0.0
    %3088 = vmatprep.subr.mxu0 0.0
    %3089 = vmatpush2.msra.mxu0 0.0
    %3090 = vmatprep.subr.mxu0 0.0
    %3091 = vmatpush2.msra.mxu0 0.0
    %3092 = vmatprep.subr.mxu0 0.0
    %3093 = vmatpush2.msra.mxu0 0.0
    %3094 = vmatprep.subr.mxu0 0.0
    %3095 = vmatpush2.msra.mxu0 0.0
    %3096 = vmatprep.subr.mxu0 0.0
    %3097 = vmatpush2.msra.mxu0 0.0
    %3098 = vmatprep.subr.mxu0 0.0
    %3099 = vmatpush2.msra.mxu0 0.0
    %3100 = vmatprep.subr.mxu0 0.0
    %3101 = vmatpush2.msra.mxu0 0.0
    %3102 = vmatprep.subr.mxu0 0.0
    %3103 = vmatpush2.msra.mxu0 0.0
    %3104 = vmatprep.subr.mxu0 0.0
    %3105 = vmatpush2.msra.mxu0 0.0
    %3106 = vmatprep.subr.mxu0 0.0
    %3107 = vmatpush2.msra.mxu0 0.0
    %3108 = vmatprep.subr.mxu0 0.0
    %3109 = vmatpush2.msra.mxu0 0.0
    %3110 = vmatprep.subr.mxu0 0.0
    %3111 = vmatpush2.msra.mxu0 0.0
    %3112 = vmatprep.mubr.f32.mxu0 0.0
    %3113 = vmatmul.mubr.f32.gmra.mxu0 %v3046
    %v3114 = vpop.f32.mrf.mxu0
    %v3115 = vadd.f32 0.0, %v3114
    %v3116 = vpop.f32.mrf.mxu0
    %3117 = vdwg.mxu0
    %v3119 = vsel %vm70, %v1126, 0
    %3121 = vmatprep.subr.mxu0 0.0
    %3122 = vmatpush1.msra.mxu0 0.0
    %3123 = vmatprep.subr.mxu0 0.0
    %3124 = vmatpush1.msra.mxu0 0.0
    %3125 = vmatprep.subr.mxu0 0.0
    %3126 = vmatpush1.msra.mxu0 0.0
    %3127 = vmatprep.subr.mxu0 0.0
    %3128 = vmatpush1.msra.mxu0 0.0
    %3129 = vmatprep.subr.mxu0 0.0
    %3130 = vmatpush1.msra.mxu0 0.0
    %3131 = vmatprep.subr.mxu0 0.0
    %3132 = vmatpush1.msra.mxu0 0.0
    %3133 = vmatprep.subr.mxu0 0.0
    %3134 = vmatpush1.msra.mxu0 0.0
    %3135 = vmatprep.subr.mxu0 0.0
    %3136 = vmatpush1.msra.mxu0 0.0
    %3137 = vmatprep.subr.mxu0 0.0
    %3138 = vmatpush1.msra.mxu0 0.0
    %3139 = vmatprep.subr.mxu0 0.0
    %3140 = vmatpush1.msra.mxu0 0.0
    %3141 = vmatprep.subr.mxu0 0.0
    %3142 = vmatpush1.msra.mxu0 0.0
    %3143 = vmatprep.subr.mxu0 0.0
    %3144 = vmatpush1.msra.mxu0 0.0
    %3145 = vmatprep.subr.mxu0 0.0
    %3146 = vmatpush1.msra.mxu0 %v1268
    %3147 = vmatprep.subr.mxu0 0.0
    %3148 = vmatpush1.msra.mxu0 %v1267
    %3149 = vmatprep.subr.mxu0 0.0
    %3150 = vmatpush1.msra.mxu0 %v1266
    %3151 = vmatprep.subr.mxu0 0.0
    %3152 = vmatpush1.msra.mxu0 %v1265
    %3153 = vmatprep.subr.mxu0 0.0
    %3154 = vmatpush2.msra.mxu0 0.0
    %3155 = vmatprep.subr.mxu0 0.0
    %3156 = vmatpush2.msra.mxu0 0.0
    %3157 = vmatprep.subr.mxu0 0.0
    %3158 = vmatpush2.msra.mxu0 0.0
    %3159 = vmatprep.subr.mxu0 0.0
    %3160 = vmatpush2.msra.mxu0 0.0
    %3161 = vmatprep.subr.mxu0 0.0
    %3162 = vmatpush2.msra.mxu0 0.0
    %3163 = vmatprep.subr.mxu0 0.0
    %3164 = vmatpush2.msra.mxu0 0.0
    %3165 = vmatprep.subr.mxu0 0.0
    %3166 = vmatpush2.msra.mxu0 0.0
    %3167 = vmatprep.subr.mxu0 0.0
    %3168 = vmatpush2.msra.mxu0 0.0
    %3169 = vmatprep.subr.mxu0 0.0
    %3170 = vmatpush2.msra.mxu0 0.0
    %3171 = vmatprep.subr.mxu0 0.0
    %3172 = vmatpush2.msra.mxu0 0.0
    %3173 = vmatprep.subr.mxu0 0.0
    %3174 = vmatpush2.msra.mxu0 0.0
    %3175 = vmatprep.subr.mxu0 0.0
    %3176 = vmatpush2.msra.mxu0 0.0
    %3177 = vmatprep.subr.mxu0 0.0
    %3178 = vmatpush2.msra.mxu0 0.0
    %3179 = vmatprep.subr.mxu0 0.0
    %3180 = vmatpush2.msra.mxu0 0.0
    %3181 = vmatprep.subr.mxu0 0.0
    %3182 = vmatpush2.msra.mxu0 0.0
    %3183 = vmatprep.subr.mxu0 0.0
    %3184 = vmatpush2.msra.mxu0 0.0
    %3185 = vmatprep.mubr.f32.mxu0 0.0
    %3186 = vmatmul.mubr.f32.gmra.mxu0 %v3119
    %v3187 = vpop.f32.mrf.mxu0
    %v3188 = vadd.f32 0.0, %v3187
    %v3189 = vpop.f32.mrf.mxu0
    %3190 = vdwg.mxu0
    %v3192 = vsel %vm70, %v1127, 0
    %3194 = vmatprep.subr.mxu0 0.0
    %3195 = vmatpush1.msra.mxu0 0.0
    %3196 = vmatprep.subr.mxu0 0.0
    %3197 = vmatpush1.msra.mxu0 0.0
    %3198 = vmatprep.subr.mxu0 0.0
    %3199 = vmatpush1.msra.mxu0 0.0
    %3200 = vmatprep.subr.mxu0 0.0
    %3201 = vmatpush1.msra.mxu0 0.0
    %3202 = vmatprep.subr.mxu0 0.0
    %3203 = vmatpush1.msra.mxu0 0.0
    %3204 = vmatprep.subr.mxu0 0.0
    %3205 = vmatpush1.msra.mxu0 0.0
    %3206 = vmatprep.subr.mxu0 0.0
    %3207 = vmatpush1.msra.mxu0 0.0
    %3208 = vmatprep.subr.mxu0 0.0
    %3209 = vmatpush1.msra.mxu0 0.0
    %3210 = vmatprep.subr.mxu0 0.0
    %3211 = vmatpush1.msra.mxu0 0.0
    %3212 = vmatprep.subr.mxu0 0.0
    %3213 = vmatpush1.msra.mxu0 0.0
    %3214 = vmatprep.subr.mxu0 0.0
    %3215 = vmatpush1.msra.mxu0 0.0
    %3216 = vmatprep.subr.mxu0 0.0
    %3217 = vmatpush1.msra.mxu0 0.0
    %3218 = vmatprep.subr.mxu0 0.0
    %3219 = vmatpush1.msra.mxu0 %v1272
    %3220 = vmatprep.subr.mxu0 0.0
    %3221 = vmatpush1.msra.mxu0 %v1271
    %3222 = vmatprep.subr.mxu0 0.0
    %3223 = vmatpush1.msra.mxu0 %v1270
    %3224 = vmatprep.subr.mxu0 0.0
    %3225 = vmatpush1.msra.mxu0 %v1269
    %3226 = vmatprep.subr.mxu0 0.0
    %3227 = vmatpush2.msra.mxu0 0.0
    %3228 = vmatprep.subr.mxu0 0.0
    %3229 = vmatpush2.msra.mxu0 0.0
    %3230 = vmatprep.subr.mxu0 0.0
    %3231 = vmatpush2.msra.mxu0 0.0
    %3232 = vmatprep.subr.mxu0 0.0
    %3233 = vmatpush2.msra.mxu0 0.0
    %3234 = vmatprep.subr.mxu0 0.0
    %3235 = vmatpush2.msra.mxu0 0.0
    %3236 = vmatprep.subr.mxu0 0.0
    %3237 = vmatpush2.msra.mxu0 0.0
    %3238 = vmatprep.subr.mxu0 0.0
    %3239 = vmatpush2.msra.mxu0 0.0
    %3240 = vmatprep.subr.mxu0 0.0
    %3241 = vmatpush2.msra.mxu0 0.0
    %3242 = vmatprep.subr.mxu0 0.0
    %3243 = vmatpush2.msra.mxu0 0.0
    %3244 = vmatprep.subr.mxu0 0.0
    %3245 = vmatpush2.msra.mxu0 0.0
    %3246 = vmatprep.subr.mxu0 0.0
    %3247 = vmatpush2.msra.mxu0 0.0
    %3248 = vmatprep.subr.mxu0 0.0
    %3249 = vmatpush2.msra.mxu0 0.0
    %3250 = vmatprep.subr.mxu0 0.0
    %3251 = vmatpush2.msra.mxu0 0.0
    %3252 = vmatprep.subr.mxu0 0.0
    %3253 = vmatpush2.msra.mxu0 0.0
    %3254 = vmatprep.subr.mxu0 0.0
    %3255 = vmatpush2.msra.mxu0 0.0
    %3256 = vmatprep.subr.mxu0 0.0
    %3257 = vmatpush2.msra.mxu0 0.0
    %3258 = vmatprep.mubr.f32.mxu0 0.0
    %3259 = vmatmul.mubr.f32.gmra.mxu0 %v3192
    %v3260 = vpop.f32.mrf.mxu0
    %v3261 = vadd.f32 0.0, %v3260
    %v3262 = vpop.f32.mrf.mxu0
    %3263 = vdwg.mxu0
    %v3265 = vsel %vm70, %v1128, 0
    %3267 = vmatprep.subr.mxu0 0.0
    %3268 = vmatpush1.msra.mxu0 0.0
    %3269 = vmatprep.subr.mxu0 0.0
    %3270 = vmatpush1.msra.mxu0 0.0
    %3271 = vmatprep.subr.mxu0 0.0
    %3272 = vmatpush1.msra.mxu0 0.0
    %3273 = vmatprep.subr.mxu0 0.0
    %3274 = vmatpush1.msra.mxu0 0.0
    %3275 = vmatprep.subr.mxu0 0.0
    %3276 = vmatpush1.msra.mxu0 0.0
    %3277 = vmatprep.subr.mxu0 0.0
    %3278 = vmatpush1.msra.mxu0 0.0
    %3279 = vmatprep.subr.mxu0 0.0
    %3280 = vmatpush1.msra.mxu0 0.0
    %3281 = vmatprep.subr.mxu0 0.0
    %3282 = vmatpush1.msra.mxu0 0.0
    %3283 = vmatprep.subr.mxu0 0.0
    %3284 = vmatpush1.msra.mxu0 0.0
    %3285 = vmatprep.subr.mxu0 0.0
    %3286 = vmatpush1.msra.mxu0 0.0
    %3287 = vmatprep.subr.mxu0 0.0
    %3288 = vmatpush1.msra.mxu0 0.0
    %3289 = vmatprep.subr.mxu0 0.0
    %3290 = vmatpush1.msra.mxu0 0.0
    %3291 = vmatprep.subr.mxu0 0.0
    %3292 = vmatpush1.msra.mxu0 %v1276
    %3293 = vmatprep.subr.mxu0 0.0
    %3294 = vmatpush1.msra.mxu0 %v1275
    %3295 = vmatprep.subr.mxu0 0.0
    %3296 = vmatpush1.msra.mxu0 %v1274
    %3297 = vmatprep.subr.mxu0 0.0
    %3298 = vmatpush1.msra.mxu0 %v1273
    %3299 = vmatprep.subr.mxu0 0.0
    %3300 = vmatpush2.msra.mxu0 0.0
    %3301 = vmatprep.subr.mxu0 0.0
    %3302 = vmatpush2.msra.mxu0 0.0
    %3303 = vmatprep.subr.mxu0 0.0
    %3304 = vmatpush2.msra.mxu0 0.0
    %3305 = vmatprep.subr.mxu0 0.0
    %3306 = vmatpush2.msra.mxu0 0.0
    %3307 = vmatprep.subr.mxu0 0.0
    %3308 = vmatpush2.msra.mxu0 0.0
    %3309 = vmatprep.subr.mxu0 0.0
    %3310 = vmatpush2.msra.mxu0 0.0
    %3311 = vmatprep.subr.mxu0 0.0
    %3312 = vmatpush2.msra.mxu0 0.0
    %3313 = vmatprep.subr.mxu0 0.0
    %3314 = vmatpush2.msra.mxu0 0.0
    %3315 = vmatprep.subr.mxu0 0.0
    %3316 = vmatpush2.msra.mxu0 0.0
    %3317 = vmatprep.subr.mxu0 0.0
    %3318 = vmatpush2.msra.mxu0 0.0
    %3319 = vmatprep.subr.mxu0 0.0
    %3320 = vmatpush2.msra.mxu0 0.0
    %3321 = vmatprep.subr.mxu0 0.0
    %3322 = vmatpush2.msra.mxu0 0.0
    %3323 = vmatprep.subr.mxu0 0.0
    %3324 = vmatpush2.msra.mxu0 0.0
    %3325 = vmatprep.subr.mxu0 0.0
    %3326 = vmatpush2.msra.mxu0 0.0
    %3327 = vmatprep.subr.mxu0 0.0
    %3328 = vmatpush2.msra.mxu0 0.0
    %3329 = vmatprep.subr.mxu0 0.0
    %3330 = vmatpush2.msra.mxu0 0.0
    %3331 = vmatprep.mubr.f32.mxu0 0.0
    %3332 = vmatmul.mubr.f32.gmra.mxu0 %v3265
    %v3333 = vpop.f32.mrf.mxu0
    %v3334 = vadd.f32 0.0, %v3333
    %v3335 = vpop.f32.mrf.mxu0
    %3336 = vdwg.mxu0
    %v3338 = vsel %vm70, %v1129, 0
    %3340 = vmatprep.subr.mxu0 0.0
    %3341 = vmatpush1.msra.mxu0 0.0
    %3342 = vmatprep.subr.mxu0 0.0
    %3343 = vmatpush1.msra.mxu0 0.0
    %3344 = vmatprep.subr.mxu0 0.0
    %3345 = vmatpush1.msra.mxu0 0.0
    %3346 = vmatprep.subr.mxu0 0.0
    %3347 = vmatpush1.msra.mxu0 0.0
    %3348 = vmatprep.subr.mxu0 0.0
    %3349 = vmatpush1.msra.mxu0 0.0
    %3350 = vmatprep.subr.mxu0 0.0
    %3351 = vmatpush1.msra.mxu0 0.0
    %3352 = vmatprep.subr.mxu0 0.0
    %3353 = vmatpush1.msra.mxu0 0.0
    %3354 = vmatprep.subr.mxu0 0.0
    %3355 = vmatpush1.msra.mxu0 0.0
    %3356 = vmatprep.subr.mxu0 0.0
    %3357 = vmatpush1.msra.mxu0 0.0
    %3358 = vmatprep.subr.mxu0 0.0
    %3359 = vmatpush1.msra.mxu0 0.0
    %3360 = vmatprep.subr.mxu0 0.0
    %3361 = vmatpush1.msra.mxu0 0.0
    %3362 = vmatprep.subr.mxu0 0.0
    %3363 = vmatpush1.msra.mxu0 0.0
    %3364 = vmatprep.subr.mxu0 0.0
    %3365 = vmatpush1.msra.mxu0 %v1280
    %3366 = vmatprep.subr.mxu0 0.0
    %3367 = vmatpush1.msra.mxu0 %v1279
    %3368 = vmatprep.subr.mxu0 0.0
    %3369 = vmatpush1.msra.mxu0 %v1278
    %3370 = vmatprep.subr.mxu0 0.0
    %3371 = vmatpush1.msra.mxu0 %v1277
    %3372 = vmatprep.subr.mxu0 0.0
    %3373 = vmatpush2.msra.mxu0 0.0
    %3374 = vmatprep.subr.mxu0 0.0
    %3375 = vmatpush2.msra.mxu0 0.0
    %3376 = vmatprep.subr.mxu0 0.0
    %3377 = vmatpush2.msra.mxu0 0.0
    %3378 = vmatprep.subr.mxu0 0.0
    %3379 = vmatpush2.msra.mxu0 0.0
    %3380 = vmatprep.subr.mxu0 0.0
    %3381 = vmatpush2.msra.mxu0 0.0
    %3382 = vmatprep.subr.mxu0 0.0
    %3383 = vmatpush2.msra.mxu0 0.0
    %3384 = vmatprep.subr.mxu0 0.0
    %3385 = vmatpush2.msra.mxu0 0.0
    %3386 = vmatprep.subr.mxu0 0.0
    %3387 = vmatpush2.msra.mxu0 0.0
    %3388 = vmatprep.subr.mxu0 0.0
    %3389 = vmatpush2.msra.mxu0 0.0
    %3390 = vmatprep.subr.mxu0 0.0
    %3391 = vmatpush2.msra.mxu0 0.0
    %3392 = vmatprep.subr.mxu0 0.0
    %3393 = vmatpush2.msra.mxu0 0.0
    %3394 = vmatprep.subr.mxu0 0.0
    %3395 = vmatpush2.msra.mxu0 0.0
    %3396 = vmatprep.subr.mxu0 0.0
    %3397 = vmatpush2.msra.mxu0 0.0
    %3398 = vmatprep.subr.mxu0 0.0
    %3399 = vmatpush2.msra.mxu0 0.0
    %3400 = vmatprep.subr.mxu0 0.0
    %3401 = vmatpush2.msra.mxu0 0.0
    %3402 = vmatprep.subr.mxu0 0.0
    %3403 = vmatpush2.msra.mxu0 0.0
    %3404 = vmatprep.mubr.f32.mxu0 0.0
    %3405 = vmatmul.mubr.f32.gmra.mxu0 %v3338
    %v3406 = vpop.f32.mrf.mxu0
    %v3407 = vadd.f32 0.0, %v3406
    %v3408 = vpop.f32.mrf.mxu0
    %3409 = vdwg.mxu0
    %v3411 = vsel %vm70, %v1130, 0
    %3413 = vmatprep.subr.mxu0 0.0
    %3414 = vmatpush1.msra.mxu0 0.0
    %3415 = vmatprep.subr.mxu0 0.0
    %3416 = vmatpush1.msra.mxu0 0.0
    %3417 = vmatprep.subr.mxu0 0.0
    %3418 = vmatpush1.msra.mxu0 0.0
    %3419 = vmatprep.subr.mxu0 0.0
    %3420 = vmatpush1.msra.mxu0 0.0
    %3421 = vmatprep.subr.mxu0 0.0
    %3422 = vmatpush1.msra.mxu0 0.0
    %3423 = vmatprep.subr.mxu0 0.0
    %3424 = vmatpush1.msra.mxu0 0.0
    %3425 = vmatprep.subr.mxu0 0.0
    %3426 = vmatpush1.msra.mxu0 0.0
    %3427 = vmatprep.subr.mxu0 0.0
    %3428 = vmatpush1.msra.mxu0 0.0
    %3429 = vmatprep.subr.mxu0 0.0
    %3430 = vmatpush1.msra.mxu0 0.0
    %3431 = vmatprep.subr.mxu0 0.0
    %3432 = vmatpush1.msra.mxu0 0.0
    %3433 = vmatprep.subr.mxu0 0.0
    %3434 = vmatpush1.msra.mxu0 0.0
    %3435 = vmatprep.subr.mxu0 0.0
    %3436 = vmatpush1.msra.mxu0 0.0
    %3437 = vmatprep.subr.mxu0 0.0
    %3438 = vmatpush1.msra.mxu0 %v1284
    %3439 = vmatprep.subr.mxu0 0.0
    %3440 = vmatpush1.msra.mxu0 %v1283
    %3441 = vmatprep.subr.mxu0 0.0
    %3442 = vmatpush1.msra.mxu0 %v1282
    %3443 = vmatprep.subr.mxu0 0.0
    %3444 = vmatpush1.msra.mxu0 %v1281
    %3445 = vmatprep.subr.mxu0 0.0
    %3446 = vmatpush2.msra.mxu0 0.0
    %3447 = vmatprep.subr.mxu0 0.0
    %3448 = vmatpush2.msra.mxu0 0.0
    %3449 = vmatprep.subr.mxu0 0.0
    %3450 = vmatpush2.msra.mxu0 0.0
    %3451 = vmatprep.subr.mxu0 0.0
    %3452 = vmatpush2.msra.mxu0 0.0
    %3453 = vmatprep.subr.mxu0 0.0
    %3454 = vmatpush2.msra.mxu0 0.0
    %3455 = vmatprep.subr.mxu0 0.0
    %3456 = vmatpush2.msra.mxu0 0.0
    %3457 = vmatprep.subr.mxu0 0.0
    %3458 = vmatpush2.msra.mxu0 0.0
    %3459 = vmatprep.subr.mxu0 0.0
    %3460 = vmatpush2.msra.mxu0 0.0
    %3461 = vmatprep.subr.mxu0 0.0
    %3462 = vmatpush2.msra.mxu0 0.0
    %3463 = vmatprep.subr.mxu0 0.0
    %3464 = vmatpush2.msra.mxu0 0.0
    %3465 = vmatprep.subr.mxu0 0.0
    %3466 = vmatpush2.msra.mxu0 0.0
    %3467 = vmatprep.subr.mxu0 0.0
    %3468 = vmatpush2.msra.mxu0 0.0
    %3469 = vmatprep.subr.mxu0 0.0
    %3470 = vmatpush2.msra.mxu0 0.0
    %3471 = vmatprep.subr.mxu0 0.0
    %3472 = vmatpush2.msra.mxu0 0.0
    %3473 = vmatprep.subr.mxu0 0.0
    %3474 = vmatpush2.msra.mxu0 0.0
    %3475 = vmatprep.subr.mxu0 0.0
    %3476 = vmatpush2.msra.mxu0 0.0
    %3477 = vmatprep.mubr.f32.mxu0 0.0
    %3478 = vmatmul.mubr.f32.gmra.mxu0 %v3411
    %v3479 = vpop.f32.mrf.mxu0
    %v3480 = vadd.f32 0.0, %v3479
    %v3481 = vpop.f32.mrf.mxu0
    %3482 = vdwg.mxu0
    %v3484 = vsel %vm70, %v1131, 0
    %3486 = vmatprep.subr.mxu0 0.0
    %3487 = vmatpush1.msra.mxu0 0.0
    %3488 = vmatprep.subr.mxu0 0.0
    %3489 = vmatpush1.msra.mxu0 0.0
    %3490 = vmatprep.subr.mxu0 0.0
    %3491 = vmatpush1.msra.mxu0 0.0
    %3492 = vmatprep.subr.mxu0 0.0
    %3493 = vmatpush1.msra.mxu0 0.0
    %3494 = vmatprep.subr.mxu0 0.0
    %3495 = vmatpush1.msra.mxu0 0.0
    %3496 = vmatprep.subr.mxu0 0.0
    %3497 = vmatpush1.msra.mxu0 0.0
    %3498 = vmatprep.subr.mxu0 0.0
    %3499 = vmatpush1.msra.mxu0 0.0
    %3500 = vmatprep.subr.mxu0 0.0
    %3501 = vmatpush1.msra.mxu0 0.0
    %3502 = vmatprep.subr.mxu0 0.0
    %3503 = vmatpush1.msra.mxu0 0.0
    %3504 = vmatprep.subr.mxu0 0.0
    %3505 = vmatpush1.msra.mxu0 0.0
    %3506 = vmatprep.subr.mxu0 0.0
    %3507 = vmatpush1.msra.mxu0 0.0
    %3508 = vmatprep.subr.mxu0 0.0
    %3509 = vmatpush1.msra.mxu0 0.0
    %3510 = vmatprep.subr.mxu0 0.0
    %3511 = vmatpush1.msra.mxu0 %v1288
    %3512 = vmatprep.subr.mxu0 0.0
    %3513 = vmatpush1.msra.mxu0 %v1287
    %3514 = vmatprep.subr.mxu0 0.0
    %3515 = vmatpush1.msra.mxu0 %v1286
    %3516 = vmatprep.subr.mxu0 0.0
    %3517 = vmatpush1.msra.mxu0 %v1285
    %3518 = vmatprep.subr.mxu0 0.0
    %3519 = vmatpush2.msra.mxu0 0.0
    %3520 = vmatprep.subr.mxu0 0.0
    %3521 = vmatpush2.msra.mxu0 0.0
    %3522 = vmatprep.subr.mxu0 0.0
    %3523 = vmatpush2.msra.mxu0 0.0
    %3524 = vmatprep.subr.mxu0 0.0
    %3525 = vmatpush2.msra.mxu0 0.0
    %3526 = vmatprep.subr.mxu0 0.0
    %3527 = vmatpush2.msra.mxu0 0.0
    %3528 = vmatprep.subr.mxu0 0.0
    %3529 = vmatpush2.msra.mxu0 0.0
    %3530 = vmatprep.subr.mxu0 0.0
    %3531 = vmatpush2.msra.mxu0 0.0
    %3532 = vmatprep.subr.mxu0 0.0
    %3533 = vmatpush2.msra.mxu0 0.0
    %3534 = vmatprep.subr.mxu0 0.0
    %3535 = vmatpush2.msra.mxu0 0.0
    %3536 = vmatprep.subr.mxu0 0.0
    %3537 = vmatpush2.msra.mxu0 0.0
    %3538 = vmatprep.subr.mxu0 0.0
    %3539 = vmatpush2.msra.mxu0 0.0
    %3540 = vmatprep.subr.mxu0 0.0
    %3541 = vmatpush2.msra.mxu0 0.0
    %3542 = vmatprep.subr.mxu0 0.0
    %3543 = vmatpush2.msra.mxu0 0.0
    %3544 = vmatprep.subr.mxu0 0.0
    %3545 = vmatpush2.msra.mxu0 0.0
    %3546 = vmatprep.subr.mxu0 0.0
    %3547 = vmatpush2.msra.mxu0 0.0
    %3548 = vmatprep.subr.mxu0 0.0
    %3549 = vmatpush2.msra.mxu0 0.0
    %3550 = vmatprep.mubr.f32.mxu0 0.0
    %3551 = vmatmul.mubr.f32.gmra.mxu0 %v3484
    %v3552 = vpop.f32.mrf.mxu0
    %v3553 = vadd.f32 0.0, %v3552
    %v3554 = vpop.f32.mrf.mxu0
    %3555 = vdwg.mxu0
    %v3557 = vsel %vm70, %v1132, 0
    %3559 = vmatprep.subr.mxu0 0.0
    %3560 = vmatpush1.msra.mxu0 0.0
    %3561 = vmatprep.subr.mxu0 0.0
    %3562 = vmatpush1.msra.mxu0 0.0
    %3563 = vmatprep.subr.mxu0 0.0
    %3564 = vmatpush1.msra.mxu0 0.0
    %3565 = vmatprep.subr.mxu0 0.0
    %3566 = vmatpush1.msra.mxu0 0.0
    %3567 = vmatprep.subr.mxu0 0.0
    %3568 = vmatpush1.msra.mxu0 0.0
    %3569 = vmatprep.subr.mxu0 0.0
    %3570 = vmatpush1.msra.mxu0 0.0
    %3571 = vmatprep.subr.mxu0 0.0
    %3572 = vmatpush1.msra.mxu0 0.0
    %3573 = vmatprep.subr.mxu0 0.0
    %3574 = vmatpush1.msra.mxu0 0.0
    %3575 = vmatprep.subr.mxu0 0.0
    %3576 = vmatpush1.msra.mxu0 0.0
    %3577 = vmatprep.subr.mxu0 0.0
    %3578 = vmatpush1.msra.mxu0 0.0
    %3579 = vmatprep.subr.mxu0 0.0
    %3580 = vmatpush1.msra.mxu0 0.0
    %3581 = vmatprep.subr.mxu0 0.0
    %3582 = vmatpush1.msra.mxu0 0.0
    %3583 = vmatprep.subr.mxu0 0.0
    %3584 = vmatpush1.msra.mxu0 %v1292
    %3585 = vmatprep.subr.mxu0 0.0
    %3586 = vmatpush1.msra.mxu0 %v1291
    %3587 = vmatprep.subr.mxu0 0.0
    %3588 = vmatpush1.msra.mxu0 %v1290
    %3589 = vmatprep.subr.mxu0 0.0
    %3590 = vmatpush1.msra.mxu0 %v1289
    %3591 = vmatprep.subr.mxu0 0.0
    %3592 = vmatpush2.msra.mxu0 0.0
    %3593 = vmatprep.subr.mxu0 0.0
    %3594 = vmatpush2.msra.mxu0 0.0
    %3595 = vmatprep.subr.mxu0 0.0
    %3596 = vmatpush2.msra.mxu0 0.0
    %3597 = vmatprep.subr.mxu0 0.0
    %3598 = vmatpush2.msra.mxu0 0.0
    %3599 = vmatprep.subr.mxu0 0.0
    %3600 = vmatpush2.msra.mxu0 0.0
    %3601 = vmatprep.subr.mxu0 0.0
    %3602 = vmatpush2.msra.mxu0 0.0
    %3603 = vmatprep.subr.mxu0 0.0
    %3604 = vmatpush2.msra.mxu0 0.0
    %3605 = vmatprep.subr.mxu0 0.0
    %3606 = vmatpush2.msra.mxu0 0.0
    %3607 = vmatprep.subr.mxu0 0.0
    %3608 = vmatpush2.msra.mxu0 0.0
    %3609 = vmatprep.subr.mxu0 0.0
    %3610 = vmatpush2.msra.mxu0 0.0
    %3611 = vmatprep.subr.mxu0 0.0
    %3612 = vmatpush2.msra.mxu0 0.0
    %3613 = vmatprep.subr.mxu0 0.0
    %3614 = vmatpush2.msra.mxu0 0.0
    %3615 = vmatprep.subr.mxu0 0.0
    %3616 = vmatpush2.msra.mxu0 0.0
    %3617 = vmatprep.subr.mxu0 0.0
    %3618 = vmatpush2.msra.mxu0 0.0
    %3619 = vmatprep.subr.mxu0 0.0
    %3620 = vmatpush2.msra.mxu0 0.0
    %3621 = vmatprep.subr.mxu0 0.0
    %3622 = vmatpush2.msra.mxu0 0.0
    %3623 = vmatprep.mubr.f32.mxu0 0.0
    %3624 = vmatmul.mubr.f32.gmra.mxu0 %v3557
    %v3625 = vpop.f32.mrf.mxu0
    %v3626 = vadd.f32 0.0, %v3625
    %v3627 = vpop.f32.mrf.mxu0
    %3628 = vdwg.mxu0
    %3661 = vrot.lane.b32.xlu0 %v1363, 32
    %v3662 = vpop.permute.xlu0 %3661
    %3663 = vrot.lane.b32.xlu0 %v1436, 32
    %v3664 = vpop.permute.xlu0 %3663
    %3665 = vrot.lane.b32.xlu0 %v1509, 32
    %v3666 = vpop.permute.xlu0 %3665
    %3667 = vrot.lane.b32.xlu0 %v1582, 32
    %v3668 = vpop.permute.xlu0 %3667
    %3669 = vrot.lane.b32.xlu0 %v1655, 32
    %v3670 = vpop.permute.xlu0 %3669
    %3671 = vrot.lane.b32.xlu0 %v1728, 32
    %v3672 = vpop.permute.xlu0 %3671
    %3673 = vrot.lane.b32.xlu0 %v1801, 32
    %v3674 = vpop.permute.xlu0 %3673
    %3675 = vrot.lane.b32.xlu0 %v1874, 32
    %v3676 = vpop.permute.xlu0 %3675
    %3677 = vrot.lane.b32.xlu0 %v1947, 32
    %v3678 = vpop.permute.xlu0 %3677
    %3679 = vrot.lane.b32.xlu0 %v2020, 32
    %v3680 = vpop.permute.xlu0 %3679
    %3681 = vrot.lane.b32.xlu0 %v2093, 32
    %v3682 = vpop.permute.xlu0 %3681
    %3683 = vrot.lane.b32.xlu0 %v2166, 32
    %v3684 = vpop.permute.xlu0 %3683
    %3685 = vrot.lane.b32.xlu0 %v2239, 32
    %v3686 = vpop.permute.xlu0 %3685
    %3687 = vrot.lane.b32.xlu0 %v2312, 32
    %v3688 = vpop.permute.xlu0 %3687
    %3689 = vrot.lane.b32.xlu0 %v2385, 32
    %v3690 = vpop.permute.xlu0 %3689
    %3691 = vrot.lane.b32.xlu0 %v2458, 32
    %v3692 = vpop.permute.xlu0 %3691
    %3693 = vrot.lane.b32.xlu0 %v2531, 32
    %v3694 = vpop.permute.xlu0 %3693
    %3695 = vrot.lane.b32.xlu0 %v2604, 32
    %v3696 = vpop.permute.xlu0 %3695
    %3697 = vrot.lane.b32.xlu0 %v2677, 32
    %v3698 = vpop.permute.xlu0 %3697
    %3699 = vrot.lane.b32.xlu0 %v2750, 32
    %v3700 = vpop.permute.xlu0 %3699
    %3701 = vrot.lane.b32.xlu0 %v2823, 32
    %v3702 = vpop.permute.xlu0 %3701
    %3703 = vrot.lane.b32.xlu0 %v2896, 32
    %v3704 = vpop.permute.xlu0 %3703
    %3705 = vrot.lane.b32.xlu0 %v2969, 32
    %v3706 = vpop.permute.xlu0 %3705
    %3707 = vrot.lane.b32.xlu0 %v3042, 32
    %v3708 = vpop.permute.xlu0 %3707
    %3709 = vrot.lane.b32.xlu0 %v3115, 32
    %v3710 = vpop.permute.xlu0 %3709
    %3711 = vrot.lane.b32.xlu0 %v3188, 32
    %v3712 = vpop.permute.xlu0 %3711
    %3713 = vrot.lane.b32.xlu0 %v3261, 32
    %v3714 = vpop.permute.xlu0 %3713
    %3715 = vrot.lane.b32.xlu0 %v3334, 32
    %v3716 = vpop.permute.xlu0 %3715
    %3717 = vrot.lane.b32.xlu0 %v3407, 32
    %v3718 = vpop.permute.xlu0 %3717
    %3719 = vrot.lane.b32.xlu0 %v3480, 32
    %v3720 = vpop.permute.xlu0 %3719
    %3721 = vrot.lane.b32.xlu0 %v3553, 32
    %v3722 = vpop.permute.xlu0 %3721
    %3723 = vrot.lane.b32.xlu0 %v3626, 32
    %v3724 = vpop.permute.xlu0 %3723
    %v3757 = vadd.f32 %v234, %v3662
    %v3758 = vadd.f32 %v239, %v3664
    %v3759 = vadd.f32 %v244, %v3666
    %v3760 = vadd.f32 %v249, %v3668
    %v3761 = vadd.f32 %v254, %v3670
    %v3762 = vadd.f32 %v259, %v3672
    %v3763 = vadd.f32 %v264, %v3674
    %v3764 = vadd.f32 %v269, %v3676
    %v3765 = vadd.f32 %v274, %v3678
    %v3766 = vadd.f32 %v279, %v3680
    %v3767 = vadd.f32 %v284, %v3682
    %v3768 = vadd.f32 %v289, %v3684
    %v3769 = vadd.f32 %v294, %v3686
    %v3770 = vadd.f32 %v299, %v3688
    %v3771 = vadd.f32 %v304, %v3690
    %v3772 = vadd.f32 %v309, %v3692
    %v3773 = vadd.f32 %v314, %v3694
    %v3774 = vadd.f32 %v319, %v3696
    %v3775 = vadd.f32 %v324, %v3698
    %v3776 = vadd.f32 %v329, %v3700
    %v3777 = vadd.f32 %v334, %v3702
    %v3778 = vadd.f32 %v339, %v3704
    %v3779 = vadd.f32 %v344, %v3706
    %v3780 = vadd.f32 %v349, %v3708
    %v3781 = vadd.f32 %v354, %v3710
    %v3782 = vadd.f32 %v359, %v3712
    %v3783 = vadd.f32 %v364, %v3714
    %v3784 = vadd.f32 %v369, %v3716
    %v3785 = vadd.f32 %v374, %v3718
    %v3786 = vadd.f32 %v379, %v3720
    %v3787 = vadd.f32 %v384, %v3722
    %v3788 = vadd.f32 %v389, %v3724
    %3821 = vrot.lane.b32.xlu0 %v3757, 96
    %v3822 = vpop.permute.xlu0 %3821
    %3823 = vrot.lane.b32.xlu0 %v3758, 96
    %v3824 = vpop.permute.xlu0 %3823
    %3825 = vrot.lane.b32.xlu0 %v3759, 96
    %v3826 = vpop.permute.xlu0 %3825
    %3827 = vrot.lane.b32.xlu0 %v3760, 96
    %v3828 = vpop.permute.xlu0 %3827
    %3829 = vrot.lane.b32.xlu0 %v3761, 96
    %v3830 = vpop.permute.xlu0 %3829
    %3831 = vrot.lane.b32.xlu0 %v3762, 96
    %v3832 = vpop.permute.xlu0 %3831
    %3833 = vrot.lane.b32.xlu0 %v3763, 96
    %v3834 = vpop.permute.xlu0 %3833
    %3835 = vrot.lane.b32.xlu0 %v3764, 96
    %v3836 = vpop.permute.xlu0 %3835
    %3837 = vrot.lane.b32.xlu0 %v3765, 96
    %v3838 = vpop.permute.xlu0 %3837
    %3839 = vrot.lane.b32.xlu0 %v3766, 96
    %v3840 = vpop.permute.xlu0 %3839
    %3841 = vrot.lane.b32.xlu0 %v3767, 96
    %v3842 = vpop.permute.xlu0 %3841
    %3843 = vrot.lane.b32.xlu0 %v3768, 96
    %v3844 = vpop.permute.xlu0 %3843
    %3845 = vrot.lane.b32.xlu0 %v3769, 96
    %v3846 = vpop.permute.xlu0 %3845
    %3847 = vrot.lane.b32.xlu0 %v3770, 96
    %v3848 = vpop.permute.xlu0 %3847
    %3849 = vrot.lane.b32.xlu0 %v3771, 96
    %v3850 = vpop.permute.xlu0 %3849
    %3851 = vrot.lane.b32.xlu0 %v3772, 96
    %v3852 = vpop.permute.xlu0 %3851
    %3853 = vrot.lane.b32.xlu0 %v3773, 96
    %v3854 = vpop.permute.xlu0 %3853
    %3855 = vrot.lane.b32.xlu0 %v3774, 96
    %v3856 = vpop.permute.xlu0 %3855
    %3857 = vrot.lane.b32.xlu0 %v3775, 96
    %v3858 = vpop.permute.xlu0 %3857
    %3859 = vrot.lane.b32.xlu0 %v3776, 96
    %v3860 = vpop.permute.xlu0 %3859
    %3861 = vrot.lane.b32.xlu0 %v3777, 96
    %v3862 = vpop.permute.xlu0 %3861
    %3863 = vrot.lane.b32.xlu0 %v3778, 96
    %v3864 = vpop.permute.xlu0 %3863
    %3865 = vrot.lane.b32.xlu0 %v3779, 96
    %v3866 = vpop.permute.xlu0 %3865
    %3867 = vrot.lane.b32.xlu0 %v3780, 96
    %v3868 = vpop.permute.xlu0 %3867
    %3869 = vrot.lane.b32.xlu0 %v3781, 96
    %v3870 = vpop.permute.xlu0 %3869
    %3871 = vrot.lane.b32.xlu0 %v3782, 96
    %v3872 = vpop.permute.xlu0 %3871
    %3873 = vrot.lane.b32.xlu0 %v3783, 96
    %v3874 = vpop.permute.xlu0 %3873
    %3875 = vrot.lane.b32.xlu0 %v3784, 96
    %v3876 = vpop.permute.xlu0 %3875
    %3877 = vrot.lane.b32.xlu0 %v3785, 96
    %v3878 = vpop.permute.xlu0 %3877
    %3879 = vrot.lane.b32.xlu0 %v3786, 96
    %v3880 = vpop.permute.xlu0 %3879
    %3881 = vrot.lane.b32.xlu0 %v3787, 96
    %v3882 = vpop.permute.xlu0 %3881
    %3883 = vrot.lane.b32.xlu0 %v3788, 96
    %v3884 = vpop.permute.xlu0 %3883
    %3917 = vst.msk [vmem:[#allocation2] sm:$0xff] %vm70, %v3822
    %3918 = vst.msk [vmem:[#allocation2 + $0x8] sm:$0xff] %vm70, %v3824
    %3919 = vst.msk [vmem:[#allocation2 + $0x10] sm:$0xff] %vm70, %v3826
    %3920 = vst.msk [vmem:[#allocation2 + $0x18] sm:$0xff] %vm70, %v3828
    %3921 = vst.msk [vmem:[#allocation2 + $0x20] sm:$0xff] %vm70, %v3830
    %3922 = vst.msk [vmem:[#allocation2 + $0x28] sm:$0xff] %vm70, %v3832
    %3923 = vst.msk [vmem:[#allocation2 + $0x30] sm:$0xff] %vm70, %v3834
    %3924 = vst.msk [vmem:[#allocation2 + $0x38] sm:$0xff] %vm70, %v3836
    %3925 = vst.msk [vmem:[#allocation2 + $0x40] sm:$0xff] %vm70, %v3838
    %3926 = vst.msk [vmem:[#allocation2 + $0x48] sm:$0xff] %vm70, %v3840
    %3927 = vst.msk [vmem:[#allocation2 + $0x50] sm:$0xff] %vm70, %v3842
    %3928 = vst.msk [vmem:[#allocation2 + $0x58] sm:$0xff] %vm70, %v3844
    %3929 = vst.msk [vmem:[#allocation2 + $0x60] sm:$0xff] %vm70, %v3846
    %3930 = vst.msk [vmem:[#allocation2 + $0x68] sm:$0xff] %vm70, %v3848
    %3931 = vst.msk [vmem:[#allocation2 + $0x70] sm:$0xff] %vm70, %v3850
    %3932 = vst.msk [vmem:[#allocation2 + $0x78] sm:$0xff] %vm70, %v3852
    %3933 = vst.msk [vmem:[#allocation2 + $0x80] sm:$0xff] %vm70, %v3854
    %3934 = vst.msk [vmem:[#allocation2 + $0x88] sm:$0xff] %vm70, %v3856
    %3935 = vst.msk [vmem:[#allocation2 + $0x90] sm:$0xff] %vm70, %v3858
    %3936 = vst.msk [vmem:[#allocation2 + $0x98] sm:$0xff] %vm70, %v3860
    %3937 = vst.msk [vmem:[#allocation2 + $0xa0] sm:$0xff] %vm70, %v3862
    %3938 = vst.msk [vmem:[#allocation2 + $0xa8] sm:$0xff] %vm70, %v3864
    %3939 = vst.msk [vmem:[#allocation2 + $0xb0] sm:$0xff] %vm70, %v3866
    %3940 = vst.msk [vmem:[#allocation2 + $0xb8] sm:$0xff] %vm70, %v3868
    %3941 = vst.msk [vmem:[#allocation2 + $0xc0] sm:$0xff] %vm70, %v3870
    %3942 = vst.msk [vmem:[#allocation2 + $0xc8] sm:$0xff] %vm70, %v3872
    %3943 = vst.msk [vmem:[#allocation2 + $0xd0] sm:$0xff] %vm70, %v3874
    %3944 = vst.msk [vmem:[#allocation2 + $0xd8] sm:$0xff] %vm70, %v3876
    %3945 = vst.msk [vmem:[#allocation2 + $0xe0] sm:$0xff] %vm70, %v3878
    %3946 = vst.msk [vmem:[#allocation2 + $0xe8] sm:$0xff] %vm70, %v3880
    %3947 = vst.msk [vmem:[#allocation2 + $0xf0] sm:$0xff] %vm70, %v3882
    %3948 = vst.msk [vmem:[#allocation2 + $0xf8] sm:$0xff] %vm70, %v3884
    // Predicated region
    $region26: #{fwd.1} parent=1 // pred_check
      _
    $region27: #{fwd.1} parent=1 // pred_check_branch
      %3950 = sbr.rel (0) target = $region29
    $region28: #{fwd.1} parent=1 // pred_region
      %s3952 = ssub.s32 4096, 4096
      %3953 = vsyncadd [#allocation3], %s3952
      %s3954 = sshll.u32 [#allocation2], 4
      %s3955 = int_to_ptr.vmem [resolvable:$true] %s3954
      %3960 = dma.vmem_to_hbm [thread:$0]  %s3955, 4096, %s6, [#allocation3], 128, 128, 8
    $region29: #{fwd.1} parent=1 // pred_fallthru
      _
    // Predicated region
    $region30: #{fwd.1} parent=1 // pred_check
      _
    $region31: #{fwd.1} parent=1 // pred_check_branch
      %3962 = sbr.rel (0) target = $region33
    $region32: #{fwd.1} parent=1 // pred_region
      %s3964 = ssub.s32 4096, 4096
      %3965 = vsyncadd [#allocation5], %s3964
      %s3966 = sshll.u32 [#allocation4], 4
      %s3967 = int_to_ptr.vmem [resolvable:$true] %s3966
      %3972 = dma.vmem_to_hbm [thread:$0]  %s3967, 4096, %s7, [#allocation5], 128, 128, 8
    $region33: #{fwd.1} parent=1 // pred_fallthru
      _
    // Predicated region
    $region34: #{fwd.1} parent=1 // pred_check
      _
    $region35: #{fwd.1} parent=1 // pred_check_branch
      %3974 = sbr.rel (0) target = $region37
    $region36: #{fwd.1} parent=1 // pred_region
      %3975 = dma.done [#allocation3], 4096
    $region37: #{fwd.1} parent=1 // pred_fallthru
      _
    // Predicated region
    $region38: #{fwd.1} parent=1 // pred_check
      _
    $region39: #{fwd.1} parent=1 // pred_check_branch
      %3977 = sbr.rel (0) target = $region41
    $region40: #{fwd.1} parent=1 // pred_region
      %3978 = dma.done [#allocation5], 4096
    $region41: #{fwd.1} parent=1 // pred_fallthru
      _
    %3979 = vsyncpa [#allocation3], 1
    %3980 = vsyncpa [#allocation5], 1

</llo_original>
